<compile_context>
chip_gen: v6e
topology: v6e:2x2x1
jax: 0.10.0
libtpu: 0.0.40
codegen_flags: <defaults>
</compile_context>

<pallas_src>
import functools
import math

import numpy as np

import jax
import jax.numpy as jnp
from jax.experimental import pallas as pl
from jax.experimental.pallas import tpu as pltpu


def _round_up(v, m):
    return (v + m - 1) // m * m


def _preprocess(params, S, dims_in_use):
    """Build the lane-dense folded weights (numpy, once per call)."""
    f32 = np.float32
    dense_w = np.asarray(params["dense_w"], f32)     # (E, Fd)
    sparse_w = np.asarray(params["sparse_w"], f32)   # (E, Fs)
    inp_w = np.asarray(params["inp_w"], f32)         # (P, S)
    linear_w = np.asarray(params["linear_w"], f32)   # (D, K)
    E = dense_w.shape[0]
    Fs = sparse_w.shape[1]
    P = inp_w.shape[0]
    D = linear_w.shape[0]
    PE, SE, SF = P * E, S * E, S * Fs
    eyeE = np.eye(E, dtype=f32)

    # dense branch: LN mean folded into a centered weight, tiled P times along lanes.
    wd_c = dense_w.T - dense_w.T.mean(axis=1, keepdims=True)            # (Fd, E)
    wd_tiled = np.tile(wd_c, (1, P))                                     # (Fd, P*E)
    gd_t = np.tile(np.asarray(params["dense_g"], f32), P)[None, :]
    bd_t = np.tile(np.asarray(params["dense_b"], f32), P)[None, :]

    # sparse branch: block-diagonal centered projection on flattened (S*Fs) rows.
    ws_c = sparse_w.T - sparse_w.T.mean(axis=1, keepdims=True)           # (Fs, E)
    ws_blk = np.zeros((SF, SE), f32)
    m_e = np.zeros((SE, SE), f32)                                        # per-field E-averaging
    for s in range(S):
        ws_blk[s * Fs:(s + 1) * Fs, s * E:(s + 1) * E] = ws_c
        m_e[s * E:(s + 1) * E, s * E:(s + 1) * E] = 1.0 / E
    gs_t = np.tile(np.asarray(params["sparse_g"], f32), S)[None, :]
    bs_t = np.tile(np.asarray(params["sparse_b"], f32), S)[None, :]

    # field -> P projection: centered over P, acting directly on the flat (S,E) layout.
    wp_c = inp_w - inp_w.mean(axis=0, keepdims=True)                     # (P, S)
    wp_big = np.zeros((SE, PE), f32)
    m_p = np.zeros((PE, PE), f32)                                        # P-axis averaging per e
    for p in range(P):
        for s in range(S):
            wp_big[s * E:(s + 1) * E, p * E:(p + 1) * E] = wp_c[p, s] * eyeE
        for q in range(P):
            m_p[p * E:(p + 1) * E, q * E:(q + 1) * E] = eyeE / P
    gp_t = np.repeat(np.asarray(params["inp_g"], f32), E)[None, :]
    bp_t = np.repeat(np.asarray(params["inp_b"], f32), E)[None, :]

    # strict lower triangle of Z (row-major, same order as torch.tril_indices), split
    # into <y_p, x> rows and <y_p, y_q> rows of the final Linear.
    n = P + 1
    li, lj = np.tril_indices(n, k=-1)
    wx = np.zeros((P, D), f32)
    wyy = np.zeros((P, P, D), f32)
    for k, (i, j) in enumerate(zip(li.tolist(), lj.tolist())):
        if j == 0:
            wx[i - 1] = linear_w[:, k]
        else:
            wyy[i - 1, j - 1] = linear_w[:, k]

    # selector so one matmul produces rep[b, q*PE + p*E + e] = y3[b, q*E + e], and the
    # final-linear weights flattened to the same lane layout (tril gather folded away).
    s_rep = np.zeros((PE, P * PE), f32)
    wx_flat = np.zeros((PE, D), f32)
    wyy_flat = np.zeros((P * PE, D), f32)
    for p in range(P):
        wx_flat[p * E:(p + 1) * E, :] = wx[p][None, :]
        for q in range(P):
            s_rep[q * E:(q + 1) * E, q * PE + p * E:q * PE + (p + 1) * E] = eyeE
            wyy_flat[q * PE + p * E:q * PE + (p + 1) * E, :] = wyy[p, q][None, :]

    # elastic-dim mask folded into the final LayerNorm affine (post-LN fold).
    mask = (np.arange(D) < dims_in_use).astype(f32)
    gl = (np.asarray(params["linear_g"], f32) * mask)[None, :]
    bl = (np.asarray(params["linear_b"], f32) * mask)[None, :]

    arrays = [wd_tiled, gd_t, bd_t, ws_blk, m_e, gs_t, bs_t,
              wp_big, m_p, gp_t, bp_t, s_rep, wx_flat, wyy_flat, gl, bl]
    return [jnp.asarray(a) for a in arrays], P, D


def _dot_product_kernel(dense_ref, sparse_ref,
                        wdt_ref, gdt_ref, bdt_ref,
                        wsb_ref, me_ref, gst_ref, bst_ref,
                        wpb_ref, mp_ref, gpt_ref, bpt_ref,
                        srep_ref, wxf_ref, wyyf_ref, gl_ref, bl_ref,
                        o_ref, *, eps, p_dim):
    f32 = jnp.float32

    # dense branch: centered projection emitted already tiled P times along lanes, LN(E).
    xc = jnp.dot(dense_ref[...], wdt_ref[...], preferred_element_type=f32)     # (tb, P*E)
    var_x = jnp.mean(xc * xc, axis=-1, keepdims=True)   # mean over P copies == mean over E
    x_t = xc * jax.lax.rsqrt(var_x + eps) * gdt_ref[...] + bdt_ref[...]

    # sparse branch: block-diagonal centered projection of flattened rows, LN(E) per field.
    cs = jnp.dot(sparse_ref[...], wsb_ref[...], preferred_element_type=f32)    # (tb, S*E)
    var_s = jnp.dot(cs * cs, me_ref[...], preferred_element_type=f32)
    y = cs * jax.lax.rsqrt(var_s + eps) * gst_ref[...] + bst_ref[...]

    # field -> P projection (centered over P), LN over the P axis per embedding channel.
    cp = jnp.dot(y, wpb_ref[...], preferred_element_type=f32)                  # (tb, P*E)
    var_p = jnp.dot(cp * cp, mp_ref[...], preferred_element_type=f32)
    y3 = cp * jax.lax.rsqrt(var_p + eps) * gpt_ref[...] + bpt_ref[...]

    # pairwise dot-product interactions fused with the final Linear.  The strictly
    # lower-triangular gather and the Linear are pre-folded into wx_flat / wyy_flat.
    prods_x = y3 * x_t                                                         # (tb, P*E)
    rep = jnp.dot(y3, srep_ref[...], preferred_element_type=f32)               # (tb, P*P*E)
    tile = jnp.concatenate([y3] * p_dim, axis=-1)                              # (tb, P*P*E)
    acc = (jnp.dot(prods_x, wxf_ref[...], preferred_element_type=f32) +
           jnp.dot(tile * rep, wyyf_ref[...], preferred_element_type=f32))     # (tb, D)

    # final LayerNorm(D); elastic mask already folded into gl/bl.
    mu = jnp.mean(acc, axis=-1, keepdims=True)
    c = acc - mu
    var = jnp.mean(c * c, axis=-1, keepdims=True)
    o_ref[...] = (c * jax.lax.rsqrt(var + eps) * gl_ref[...] + bl_ref[...]).astype(o_ref.dtype)


def dot_product_forward(dense_t, sparse_t, params, dims_in_use, *, eps=1e-5, block_b=512):
    """dense_t: (B, Fd); sparse_t: (B, S, Fs) (bf16 recommended); params use torch layouts."""
    B, Fd = dense_t.shape
    Bs, S, Fs = sparse_t.shape
    assert Bs == B
    # This kernel implements the "all projections active" path of DotProduct.
    # TODO(synk): pass-through branches (inputs already at embedding_dim, S == P,
    # K == max_dims) are not specialized here.
    weights, P, D = _preprocess(params, S, dims_in_use)
    assert dims_in_use <= D
    SF = S * Fs

    sparse_flat = sparse_t.reshape(B, SF)          # contiguous reshape, free

    # Batch tiling: >=2 grid steps when possible (dual-TC), ragged tail handled by Pallas.
    half = -(-B // 2)
    tb = max(16, min(block_b, _round_up(half, 16)))
    grid = (pl.cdiv(B, tb),)

    data_specs = [
        pl.BlockSpec((tb, Fd), lambda i: (i, 0)),    # dense rows
        pl.BlockSpec((tb, SF), lambda i: (i, 0)),    # flattened sparse rows
    ]
    weight_specs = [pl.BlockSpec(w.shape, lambda i: (0, 0)) for w in weights]

    kernel = functools.partial(_dot_product_kernel, eps=eps, p_dim=P)
    out = pl.pallas_call(
        kernel,
        out_shape=jax.ShapeDtypeStruct((B, D), jnp.float32),
        grid_spec=pltpu.PrefetchScalarGridSpec(
            num_scalar_prefetch=0,
            grid=grid,
            in_specs=data_specs + weight_specs,
            out_specs=pl.BlockSpec((tb, D), lambda i: (i, 0)),
        ),
        compiler_params=pltpu.CompilerParams(
            dimension_semantics=("parallel",),
            vmem_limit_bytes=32 * 1024 * 1024,
        ),
    )(dense_t, sparse_flat, *weights)
    return out


def reference_dot_product(dense_t, sparse_t, params, dims_in_use, eps=1e-5):
    """Pure-JAX transcription of the PyTorch DotProduct forward (f32, HIGHEST)."""
    hp = jax.lax.Precision.HIGHEST

    def ln(v, g, b):
        m = jnp.mean(v, -1, keepdims=True)
        var = jnp.mean((v - m) ** 2, -1, keepdims=True)
        return (v - m) / jnp.sqrt(var + eps) * g + b

    x = ln(jnp.einsum('bf,ef->be', dense_t, params["dense_w"], precision=hp),
           params["dense_g"], params["dense_b"])                             # (B, E)
    y = ln(jnp.einsum('bsf,ef->bse', sparse_t, params["sparse_w"], precision=hp),
           params["sparse_g"], params["sparse_b"])                           # (B, S, E)
    y = jnp.swapaxes(y, 1, 2)                                                # (B, E, S)
    y = ln(jnp.einsum('bes,ps->bep', y, params["inp_w"], precision=hp),
           params["inp_g"], params["inp_b"])                                 # (B, E, P)
    y = jnp.swapaxes(y, 1, 2)                                                # (B, P, E)
    T = jnp.concatenate([x[:, None, :], y], axis=1)                          # (B, n, E)
    Z = jnp.einsum('bne,bme->bnm', T, T, precision=hp)
    n = T.shape[1]
    li, lj = np.tril_indices(n, k=-1)
    Zflat = Z[:, li, lj]                                                     # (B, K)
    out = ln(jnp.einsum('bk,dk->bd', Zflat, params["linear_w"], precision=hp),
             params["linear_g"], params["linear_b"])                         # (B, D)
    D = params["linear_w"].shape[0]
    mask = (jnp.arange(D) < dims_in_use).astype(out.dtype)
    return out * mask


if __name__ == "__main__":
    # Module config: embedding_dim=16, max_dims_or_dims=32, use_layernorm=True, fixed=False.
    B, Fd = 32, 13         # dense features (Fd != embedding_dim -> dense_proj active)
    S, Fs = 12, 24         # sparse fields / per-field dim (Fs != E, S != P -> both active)
    E = 16                 # embedding_dim
    Dmax = 32              # max_dims_or_dims
    dims_in_use = 21

    P = int(round(math.sqrt(2 * Dmax)))        # sparse_inp_proj_dim = 8
    n = P + 1
    K = n * (n - 1) // 2                       # 36 tril entries (K != Dmax -> linear_proj active)

    keys = jax.random.split(jax.random.PRNGKey(0), 14)
    dense_t = jax.random.normal(keys[0], (B, Fd), jnp.float32)
    sparse_t = jax.random.normal(keys[1], (B, S, Fs), jnp.float32)

    def lin_init(k, out_f, in_f):
        bound = 1.0 / math.sqrt(in_f)
        return jax.random.uniform(k, (out_f, in_f), jnp.float32, -bound, bound)

    params = {
        "dense_w": lin_init(keys[2], E, Fd),
        "sparse_w": lin_init(keys[3], E, Fs),
        "inp_w": lin_init(keys[4], P, S),
        "linear_w": lin_init(keys[5], Dmax, K),
        "dense_g": 1.0 + 0.1 * jax.random.normal(keys[6], (E,), jnp.float32),
        "dense_b": 0.1 * jax.random.normal(keys[7], (E,), jnp.float32),
        "sparse_g": 1.0 + 0.1 * jax.random.normal(keys[8], (E,), jnp.float32),
        "sparse_b": 0.1 * jax.random.normal(keys[9], (E,), jnp.float32),
        "inp_g": 1.0 + 0.1 * jax.random.normal(keys[10], (P,), jnp.float32),
        "inp_b": 0.1 * jax.random.normal(keys[11], (P,), jnp.float32),
        "linear_g": 1.0 + 0.1 * jax.random.normal(keys[12], (Dmax,), jnp.float32),
        "linear_b": 0.1 * jax.random.normal(keys[13], (Dmax,), jnp.float32),
    }

    # Stream the large per-row inputs in bf16 (recommended HBM format for the kernel).
    dense_bf = dense_t.astype(jnp.bfloat16)
    sparse_bf = sparse_t.astype(jnp.bfloat16)

    out = dot_product_forward(dense_bf, sparse_bf, params, dims_in_use)
    out = jax.block_until_ready(out)

    ref = reference_dot_product(dense_t, sparse_t, params, dims_in_use)
    assert out.shape == (B, Dmax), out.shape
    max_err = float(jnp.max(jnp.abs(out - ref)))
    assert jnp.allclose(out, ref, atol=5e-2, rtol=5e-2), max_err

    print("KERNEL_OK")
</pallas_src>

<mosaic_0001>
module attributes {stable_mosaic.version = 11 : i64} {
  func.func @_dot_product_kernel(%arg0: i32, %arg1: memref<16x13xbf16, #tpu.memory_space<vmem>>, %arg2: memref<16x288xbf16, #tpu.memory_space<vmem>>, %arg3: memref<13x128xf32, #tpu.memory_space<vmem>>, %arg4: memref<1x128xf32, #tpu.memory_space<vmem>>, %arg5: memref<1x128xf32, #tpu.memory_space<vmem>>, %arg6: memref<288x192xf32, #tpu.memory_space<vmem>>, %arg7: memref<192x192xf32, #tpu.memory_space<vmem>>, %arg8: memref<1x192xf32, #tpu.memory_space<vmem>>, %arg9: memref<1x192xf32, #tpu.memory_space<vmem>>, %arg10: memref<192x128xf32, #tpu.memory_space<vmem>>, %arg11: memref<128x128xf32, #tpu.memory_space<vmem>>, %arg12: memref<1x128xf32, #tpu.memory_space<vmem>>, %arg13: memref<1x128xf32, #tpu.memory_space<vmem>>, %arg14: memref<128x1024xf32, #tpu.memory_space<vmem>>, %arg15: memref<128x32xf32, #tpu.memory_space<vmem>>, %arg16: memref<1024x32xf32, #tpu.memory_space<vmem>>, %arg17: memref<1x32xf32, #tpu.memory_space<vmem>>, %arg18: memref<1x32xf32, #tpu.memory_space<vmem>>, %arg19: memref<16x32xf32, #tpu.memory_space<vmem>>) attributes {dimension_semantics = [#tpu.dimension_semantics<parallel>], iteration_bounds = array<i64: 2>, scalar_prefetch = 0 : i64, scratch_operands = 0 : i64, tpu.core_type = #tpu.core_type<tc>, window_params = [{transform_indices = @transform_0, window_bounds = array<i64: 16, 13>}, {transform_indices = @transform_1, window_bounds = array<i64: 16, 288>}, {pipeline_mode = #tpu.pipeline_mode<synchronous>, transform_indices = @transform_2, window_bounds = array<i64: 13, 128>}, {pipeline_mode = #tpu.pipeline_mode<synchronous>, transform_indices = @transform_3, window_bounds = array<i64: 1, 128>}, {pipeline_mode = #tpu.pipeline_mode<synchronous>, transform_indices = @transform_4, window_bounds = array<i64: 1, 128>}, {pipeline_mode = #tpu.pipeline_mode<synchronous>, transform_indices = @transform_5, window_bounds = array<i64: 288, 192>}, {pipeline_mode = #tpu.pipeline_mode<synchronous>, transform_indices = @transform_6, window_bounds = array<i64: 192, 192>}, {pipeline_mode = #tpu.pipeline_mode<synchronous>, transform_indices = @transform_7, window_bounds = array<i64: 1, 192>}, {pipeline_mode = #tpu.pipeline_mode<synchronous>, transform_indices = @transform_8, window_bounds = array<i64: 1, 192>}, {pipeline_mode = #tpu.pipeline_mode<synchronous>, transform_indices = @transform_9, window_bounds = array<i64: 192, 128>}, {pipeline_mode = #tpu.pipeline_mode<synchronous>, transform_indices = @transform_10, window_bounds = array<i64: 128, 128>}, {pipeline_mode = #tpu.pipeline_mode<synchronous>, transform_indices = @transform_11, window_bounds = array<i64: 1, 128>}, {pipeline_mode = #tpu.pipeline_mode<synchronous>, transform_indices = @transform_12, window_bounds = array<i64: 1, 128>}, {pipeline_mode = #tpu.pipeline_mode<synchronous>, transform_indices = @transform_13, window_bounds = array<i64: 128, 1024>}, {pipeline_mode = #tpu.pipeline_mode<synchronous>, transform_indices = @transform_14, window_bounds = array<i64: 128, 32>}, {pipeline_mode = #tpu.pipeline_mode<synchronous>, transform_indices = @transform_15, window_bounds = array<i64: 1024, 32>}, {pipeline_mode = #tpu.pipeline_mode<synchronous>, transform_indices = @transform_16, window_bounds = array<i64: 1, 32>}, {pipeline_mode = #tpu.pipeline_mode<synchronous>, transform_indices = @transform_17, window_bounds = array<i64: 1, 32>}, {transform_indices = @transform_18, window_bounds = array<i64: 16, 32>}]} {
    %c0 = arith.constant 0 : index
    %c0_0 = arith.constant 0 : index
    %0 = vector.load %arg1[%c0, %c0_0] : memref<16x13xbf16, #tpu.memory_space<vmem>>, vector<16x13xbf16>
    %c0_1 = arith.constant 0 : index
    %c0_2 = arith.constant 0 : index
    %1 = vector.load %arg3[%c0_1, %c0_2] : memref<13x128xf32, #tpu.memory_space<vmem>>, vector<13x128xf32>
    %cst = arith.constant dense<0.000000e+00> : vector<16x128xf32>
    %2 = tpu.matmul %0, %1, %cst {dimension_numbers = #tpu.dot_dimension_numbers<[1], [0], [0], [1], [0, 0, 1, 1], [], []>} : vector<16x13xbf16>, vector<13x128xf32>, vector<16x128xf32> -> vector<16x128xf32>
    %3 = arith.mulf %2, %2 : vector<16x128xf32>
    %cst_3 = arith.constant dense<0.000000e+00> : vector<16xf32>
    %4 = vector.multi_reduction <add>, %3, %cst_3 [1] : vector<16x128xf32> to vector<16xf32>
    %5 = vector.shape_cast %4 : vector<16xf32> to vector<16x1xf32>
    %cst_4 = arith.constant 1.280000e+02 : f32
    %6 = vector.broadcast %cst_4 : f32 to vector<16x1xf32>
    %7 = arith.divf %5, %6 : vector<16x1xf32>
    %cst_5 = arith.constant 9.99999974E-6 : f32
    %8 = vector.broadcast %cst_5 : f32 to vector<16x1xf32>
    %9 = arith.addf %7, %8 : vector<16x1xf32>
    %10 = math.rsqrt %9 : vector<16x1xf32>
    %11 = vector.broadcast %10 : vector<16x1xf32> to vector<16x128xf32>
    %12 = arith.mulf %2, %11 : vector<16x128xf32>
    %c0_6 = arith.constant 0 : index
    %c0_7 = arith.constant 0 : index
    %13 = vector.load %arg4[%c0_6, %c0_7] : memref<1x128xf32, #tpu.memory_space<vmem>>, vector<1x128xf32>
    %14 = vector.broadcast %13 : vector<1x128xf32> to vector<16x128xf32>
    %15 = arith.mulf %12, %14 : vector<16x128xf32>
    %c0_8 = arith.constant 0 : index
    %c0_9 = arith.constant 0 : index
    %16 = vector.load %arg5[%c0_8, %c0_9] : memref<1x128xf32, #tpu.memory_space<vmem>>, vector<1x128xf32>
    %17 = vector.broadcast %16 : vector<1x128xf32> to vector<16x128xf32>
    %18 = arith.addf %15, %17 : vector<16x128xf32>
    %c0_10 = arith.constant 0 : index
    %c0_11 = arith.constant 0 : index
    %19 = vector.load %arg2[%c0_10, %c0_11] : memref<16x288xbf16, #tpu.memory_space<vmem>>, vector<16x288xbf16>
    %c0_12 = arith.constant 0 : index
    %c0_13 = arith.constant 0 : index
    %20 = vector.load %arg6[%c0_12, %c0_13] : memref<288x192xf32, #tpu.memory_space<vmem>>, vector<288x192xf32>
    %cst_14 = arith.constant dense<0.000000e+00> : vector<16x192xf32>
    %21 = tpu.matmul %19, %20, %cst_14 {dimension_numbers = #tpu.dot_dimension_numbers<[1], [0], [0], [1], [0, 0, 1, 1], [], []>} : vector<16x288xbf16>, vector<288x192xf32>, vector<16x192xf32> -> vector<16x192xf32>
    %22 = arith.mulf %21, %21 : vector<16x192xf32>
    %c0_15 = arith.constant 0 : index
    %c0_16 = arith.constant 0 : index
    %23 = vector.load %arg7[%c0_15, %c0_16] : memref<192x192xf32, #tpu.memory_space<vmem>>, vector<192x192xf32>
    %cst_17 = arith.constant dense<0.000000e+00> : vector<16x192xf32>
    %24 = tpu.matmul %22, %23, %cst_17 {dimension_numbers = #tpu.dot_dimension_numbers<[1], [0], [0], [1], [0, 0, 1, 1], [], []>} : vector<16x192xf32>, vector<192x192xf32>, vector<16x192xf32> -> vector<16x192xf32>
    %cst_18 = arith.constant 9.99999974E-6 : f32
    %25 = vector.broadcast %cst_18 : f32 to vector<16x192xf32>
    %26 = arith.addf %24, %25 : vector<16x192xf32>
    %27 = math.rsqrt %26 : vector<16x192xf32>
    %28 = arith.mulf %21, %27 : vector<16x192xf32>
    %c0_19 = arith.constant 0 : index
    %c0_20 = arith.constant 0 : index
    %29 = vector.load %arg8[%c0_19, %c0_20] : memref<1x192xf32, #tpu.memory_space<vmem>>, vector<1x192xf32>
    %30 = vector.broadcast %29 : vector<1x192xf32> to vector<16x192xf32>
    %31 = arith.mulf %28, %30 : vector<16x192xf32>
    %c0_21 = arith.constant 0 : index
    %c0_22 = arith.constant 0 : index
    %32 = vector.load %arg9[%c0_21, %c0_22] : memref<1x192xf32, #tpu.memory_space<vmem>>, vector<1x192xf32>
    %33 = vector.broadcast %32 : vector<1x192xf32> to vector<16x192xf32>
    %34 = arith.addf %31, %33 : vector<16x192xf32>
    %c0_23 = arith.constant 0 : index
    %c0_24 = arith.constant 0 : index
    %35 = vector.load %arg10[%c0_23, %c0_24] : memref<192x128xf32, #tpu.memory_space<vmem>>, vector<192x128xf32>
    %cst_25 = arith.constant dense<0.000000e+00> : vector<16x128xf32>
    %36 = tpu.matmul %34, %35, %cst_25 {dimension_numbers = #tpu.dot_dimension_numbers<[1], [0], [0], [1], [0, 0, 1, 1], [], []>} : vector<16x192xf32>, vector<192x128xf32>, vector<16x128xf32> -> vector<16x128xf32>
    %37 = arith.mulf %36, %36 : vector<16x128xf32>
    %c0_26 = arith.constant 0 : index
    %c0_27 = arith.constant 0 : index
    %38 = vector.load %arg11[%c0_26, %c0_27] : memref<128x128xf32, #tpu.memory_space<vmem>>, vector<128x128xf32>
    %cst_28 = arith.constant dense<0.000000e+00> : vector<16x128xf32>
    %39 = tpu.matmul %37, %38, %cst_28 {dimension_numbers = #tpu.dot_dimension_numbers<[1], [0], [0], [1], [0, 0, 1, 1], [], []>} : vector<16x128xf32>, vector<128x128xf32>, vector<16x128xf32> -> vector<16x128xf32>
    %cst_29 = arith.constant 9.99999974E-6 : f32
    %40 = vector.broadcast %cst_29 : f32 to vector<16x128xf32>
    %41 = arith.addf %39, %40 : vector<16x128xf32>
    %42 = math.rsqrt %41 : vector<16x128xf32>
    %43 = arith.mulf %36, %42 : vector<16x128xf32>
    %c0_30 = arith.constant 0 : index
    %c0_31 = arith.constant 0 : index
    %44 = vector.load %arg12[%c0_30, %c0_31] : memref<1x128xf32, #tpu.memory_space<vmem>>, vector<1x128xf32>
    %45 = vector.broadcast %44 : vector<1x128xf32> to vector<16x128xf32>
    %46 = arith.mulf %43, %45 : vector<16x128xf32>
    %c0_32 = arith.constant 0 : index
    %c0_33 = arith.constant 0 : index
    %47 = vector.load %arg13[%c0_32, %c0_33] : memref<1x128xf32, #tpu.memory_space<vmem>>, vector<1x128xf32>
    %48 = vector.broadcast %47 : vector<1x128xf32> to vector<16x128xf32>
    %49 = arith.addf %46, %48 : vector<16x128xf32>
    %50 = arith.mulf %49, %18 : vector<16x128xf32>
    %c0_34 = arith.constant 0 : index
    %c0_35 = arith.constant 0 : index
    %51 = vector.load %arg14[%c0_34, %c0_35] : memref<128x1024xf32, #tpu.memory_space<vmem>>, vector<128x1024xf32>
    %cst_36 = arith.constant dense<0.000000e+00> : vector<16x1024xf32>
    %52 = tpu.matmul %49, %51, %cst_36 {dimension_numbers = #tpu.dot_dimension_numbers<[1], [0], [0], [1], [0, 0, 1, 1], [], []>} : vector<16x128xf32>, vector<128x1024xf32>, vector<16x1024xf32> -> vector<16x1024xf32>
    %53 = tpu.concatenate %49, %49, %49, %49, %49, %49, %49, %49 in 1 : vector<16x128xf32>, vector<16x128xf32>, vector<16x128xf32>, vector<16x128xf32>, vector<16x128xf32>, vector<16x128xf32>, vector<16x128xf32>, vector<16x128xf32> -> vector<16x1024xf32>
    %c0_37 = arith.constant 0 : index
    %c0_38 = arith.constant 0 : index
    %54 = vector.load %arg15[%c0_37, %c0_38] : memref<128x32xf32, #tpu.memory_space<vmem>>, vector<128x32xf32>
    %cst_39 = arith.constant dense<0.000000e+00> : vector<16x32xf32>
    %55 = tpu.matmul %50, %54, %cst_39 {dimension_numbers = #tpu.dot_dimension_numbers<[1], [0], [0], [1], [0, 0, 1, 1], [], []>} : vector<16x128xf32>, vector<128x32xf32>, vector<16x32xf32> -> vector<16x32xf32>
    %56 = arith.mulf %53, %52 : vector<16x1024xf32>
    %c0_40 = arith.constant 0 : index
    %c0_41 = arith.constant 0 : index
    %57 = vector.load %arg16[%c0_40, %c0_41] : memref<1024x32xf32, #tpu.memory_space<vmem>>, vector<1024x32xf32>
    %cst_42 = arith.constant dense<0.000000e+00> : vector<16x32xf32>
    %58 = tpu.matmul %56, %57, %cst_42 {dimension_numbers = #tpu.dot_dimension_numbers<[1], [0], [0], [1], [0, 0, 1, 1], [], []>} : vector<16x1024xf32>, vector<1024x32xf32>, vector<16x32xf32> -> vector<16x32xf32>
    %59 = arith.addf %55, %58 : vector<16x32xf32>
    %cst_43 = arith.constant dense<0.000000e+00> : vector<16xf32>
    %60 = vector.multi_reduction <add>, %59, %cst_43 [1] : vector<16x32xf32> to vector<16xf32>
    %61 = vector.shape_cast %60 : vector<16xf32> to vector<16x1xf32>
    %cst_44 = arith.constant 3.200000e+01 : f32
    %62 = vector.broadcast %cst_44 : f32 to vector<16x1xf32>
    %63 = arith.divf %61, %62 : vector<16x1xf32>
    %64 = vector.broadcast %63 : vector<16x1xf32> to vector<16x32xf32>
    %65 = arith.subf %59, %64 : vector<16x32xf32>
    %66 = arith.mulf %65, %65 : vector<16x32xf32>
    %cst_45 = arith.constant dense<0.000000e+00> : vector<16xf32>
    %67 = vector.multi_reduction <add>, %66, %cst_45 [1] : vector<16x32xf32> to vector<16xf32>
    %68 = vector.shape_cast %67 : vector<16xf32> to vector<16x1xf32>
    %cst_46 = arith.constant 3.200000e+01 : f32
    %69 = vector.broadcast %cst_46 : f32 to vector<16x1xf32>
    %70 = arith.divf %68, %69 : vector<16x1xf32>
    %cst_47 = arith.constant 9.99999974E-6 : f32
    %71 = vector.broadcast %cst_47 : f32 to vector<16x1xf32>
    %72 = arith.addf %70, %71 : vector<16x1xf32>
    %73 = math.rsqrt %72 : vector<16x1xf32>
    %74 = vector.broadcast %73 : vector<16x1xf32> to vector<16x32xf32>
    %75 = arith.mulf %65, %74 : vector<16x32xf32>
    %c0_48 = arith.constant 0 : index
    %c0_49 = arith.constant 0 : index
    %76 = vector.load %arg17[%c0_48, %c0_49] : memref<1x32xf32, #tpu.memory_space<vmem>>, vector<1x32xf32>
    %77 = vector.broadcast %76 : vector<1x32xf32> to vector<16x32xf32>
    %78 = arith.mulf %75, %77 : vector<16x32xf32>
    %c0_50 = arith.constant 0 : index
    %c0_51 = arith.constant 0 : index
    %79 = vector.load %arg18[%c0_50, %c0_51] : memref<1x32xf32, #tpu.memory_space<vmem>>, vector<1x32xf32>
    %80 = vector.broadcast %79 : vector<1x32xf32> to vector<16x32xf32>
    %81 = arith.addf %78, %80 : vector<16x32xf32>
    %c0_52 = arith.constant 0 : index
    %c0_53 = arith.constant 0 : index
    %82 = vector.load %arg19[%c0_52, %c0_53] : memref<16x32xf32, #tpu.memory_space<vmem>>, vector<16x32xf32>
    tpu.vector_store %arg19[%c0_52, %c0_53], %81 {strides = array<i32>} : memref<16x32xf32, #tpu.memory_space<vmem>>, vector<16x32xf32>,
    return
  }
  func.func @transform_0(%arg0: i32) -> (i32, i32) {
    %c0_i32 = arith.constant 0 : i32
    %c0_i32_0 = arith.constant 0 : i32
    return %arg0, %c0_i32 : i32, i32
  }
  func.func @transform_1(%arg0: i32) -> (i32, i32) {
    %c0_i32 = arith.constant 0 : i32
    %c0_i32_0 = arith.constant 0 : i32
    return %arg0, %c0_i32 : i32, i32
  }
  func.func @transform_2(%arg0: i32) -> (i32, i32) {
    %c0_i32 = arith.constant 0 : i32
    %c0_i32_0 = arith.constant 0 : i32
    %c0_i32_1 = arith.constant 0 : i32
    return %c0_i32, %c0_i32_0 : i32, i32
  }
  func.func @transform_3(%arg0: i32) -> (i32, i32) {
    %c0_i32 = arith.constant 0 : i32
    %c0_i32_0 = arith.constant 0 : i32
    %c0_i32_1 = arith.constant 0 : i32
    return %c0_i32, %c0_i32_0 : i32, i32
  }
  func.func @transform_4(%arg0: i32) -> (i32, i32) {
    %c0_i32 = arith.constant 0 : i32
    %c0_i32_0 = arith.constant 0 : i32
    %c0_i32_1 = arith.constant 0 : i32
    return %c0_i32, %c0_i32_0 : i32, i32
  }
  func.func @transform_5(%arg0: i32) -> (i32, i32) {
    %c0_i32 = arith.constant 0 : i32
    %c0_i32_0 = arith.constant 0 : i32
    %c0_i32_1 = arith.constant 0 : i32
    return %c0_i32, %c0_i32_0 : i32, i32
  }
  func.func @transform_6(%arg0: i32) -> (i32, i32) {
    %c0_i32 = arith.constant 0 : i32
    %c0_i32_0 = arith.constant 0 : i32
    %c0_i32_1 = arith.constant 0 : i32
    return %c0_i32, %c0_i32_0 : i32, i32
  }
  func.func @transform_7(%arg0: i32) -> (i32, i32) {
    %c0_i32 = arith.constant 0 : i32
    %c0_i32_0 = arith.constant 0 : i32
    %c0_i32_1 = arith.constant 0 : i32
    return %c0_i32, %c0_i32_0 : i32, i32
  }
  func.func @transform_8(%arg0: i32) -> (i32, i32) {
    %c0_i32 = arith.constant 0 : i32
    %c0_i32_0 = arith.constant 0 : i32
    %c0_i32_1 = arith.constant 0 : i32
    return %c0_i32, %c0_i32_0 : i32, i32
  }
  func.func @transform_9(%arg0: i32) -> (i32, i32) {
    %c0_i32 = arith.constant 0 : i32
    %c0_i32_0 = arith.constant 0 : i32
    %c0_i32_1 = arith.constant 0 : i32
    return %c0_i32, %c0_i32_0 : i32, i32
  }
  func.func @transform_10(%arg0: i32) -> (i32, i32) {
    %c0_i32 = arith.constant 0 : i32
    %c0_i32_0 = arith.constant 0 : i32
    %c0_i32_1 = arith.constant 0 : i32
    return %c0_i32, %c0_i32_0 : i32, i32
  }
  func.func @transform_11(%arg0: i32) -> (i32, i32) {
    %c0_i32 = arith.constant 0 : i32
    %c0_i32_0 = arith.constant 0 : i32
    %c0_i32_1 = arith.constant 0 : i32
    return %c0_i32, %c0_i32_0 : i32, i32
  }
  func.func @transform_12(%arg0: i32) -> (i32, i32) {
    %c0_i32 = arith.constant 0 : i32
    %c0_i32_0 = arith.constant 0 : i32
    %c0_i32_1 = arith.constant 0 : i32
    return %c0_i32, %c0_i32_0 : i32, i32
  }
  func.func @transform_13(%arg0: i32) -> (i32, i32) {
    %c0_i32 = arith.constant 0 : i32
    %c0_i32_0 = arith.constant 0 : i32
    %c0_i32_1 = arith.constant 0 : i32
    return %c0_i32, %c0_i32_0 : i32, i32
  }
  func.func @transform_14(%arg0: i32) -> (i32, i32) {
    %c0_i32 = arith.constant 0 : i32
    %c0_i32_0 = arith.constant 0 : i32
    %c0_i32_1 = arith.constant 0 : i32
    return %c0_i32, %c0_i32_0 : i32, i32
  }
  func.func @transform_15(%arg0: i32) -> (i32, i32) {
    %c0_i32 = arith.constant 0 : i32
    %c0_i32_0 = arith.constant 0 : i32
    %c0_i32_1 = arith.constant 0 : i32
    return %c0_i32, %c0_i32_0 : i32, i32
  }
  func.func @transform_16(%arg0: i32) -> (i32, i32) {
    %c0_i32 = arith.constant 0 : i32
    %c0_i32_0 = arith.constant 0 : i32
    %c0_i32_1 = arith.constant 0 : i32
    return %c0_i32, %c0_i32_0 : i32, i32
  }
  func.func @transform_17(%arg0: i32) -> (i32, i32) {
    %c0_i32 = arith.constant 0 : i32
    %c0_i32_0 = arith.constant 0 : i32
    %c0_i32_1 = arith.constant 0 : i32
    return %c0_i32, %c0_i32_0 : i32, i32
  }
  func.func @transform_18(%arg0: i32) -> (i32, i32) {
    %c0_i32 = arith.constant 0 : i32
    %c0_i32_0 = arith.constant 0 : i32
    return %arg0, %c0_i32 : i32, i32
  }
}

</mosaic_0001>

<llo_original>
// kernel: tpu_custom_call.1
$region0: #{tpu_custom_call.1}
  #allocation0 [shape = 'u32[]', space=smem, size = 0x4, offset = 0x4, fixed_abs, tag = 'smem constant byte address 0x4 - core index']
  #allocation1 [shape = 'u32[144,128]{1,0:T(1,128)}', space=vmem, size = 0x12000, scoped, tag = 'internal scratch']
  %s0 = inlined_call_operand.vmem [shape: bf16[32,13], index: 0, kind: input, shape index: {}]
  %s1 = inlined_call_operand.vmem [shape: bf16[32,288], index: 1, kind: input, shape index: {}]
  %s2 = inlined_call_operand.hbm [shape: f32[13,128], index: 2, kind: input, shape index: {}]
  %s3 = inlined_call_operand.vmem [shape: f32[1,128], index: 3, kind: input, shape index: {}]
  %s4 = inlined_call_operand.hbm [shape: f32[1,128], index: 4, kind: input, shape index: {}]
  %s5 = inlined_call_operand.hbm [shape: f32[288,192], index: 5, kind: input, shape index: {}]
  %s6 = inlined_call_operand.vmem [shape: f32[192,192], index: 6, kind: input, shape index: {}]
  %s7 = inlined_call_operand.hbm [shape: f32[1,192], index: 7, kind: input, shape index: {}]
  %s8 = inlined_call_operand.hbm [shape: f32[1,192], index: 8, kind: input, shape index: {}]
  %s9 = inlined_call_operand.hbm [shape: f32[192,128], index: 9, kind: input, shape index: {}]
  %s10 = inlined_call_operand.hbm [shape: f32[128,128], index: 10, kind: input, shape index: {}]
  %s11 = inlined_call_operand.hbm [shape: f32[1,128], index: 11, kind: input, shape index: {}]
  %s12 = inlined_call_operand.hbm [shape: f32[1,128], index: 12, kind: input, shape index: {}]
  %s13 = inlined_call_operand.vmem [shape: f32[128,1024], index: 13, kind: input, shape index: {}]
  %s14 = inlined_call_operand.vmem [shape: f32[128,32], index: 14, kind: input, shape index: {}]
  %s15 = inlined_call_operand.vmem [shape: f32[1024,32], index: 15, kind: input, shape index: {}]
  %s16 = inlined_call_operand.hbm [shape: f32[1,32], index: 16, kind: input, shape index: {}]
  %s17 = inlined_call_operand.hbm [shape: f32[1,32], index: 17, kind: input, shape index: {}]
  %s18 = inlined_call_operand.hbm [shape: f32[32,32], index: 18, kind: output, shape index: {}]
  %s19 = sld [smem:[#allocation0]]
  $region149: #{tpu_custom_call.1} parent=0
    _
  %s21 = ssub.s32 1, %s19
  %s22 = scalar_select 0, %s21, %s19
  $region1: #{tpu_custom_call.1} parent=0
    #allocation2 [shape = 'u8[8192]{0}', space=vmem, size = 0x2000, scoped, tag = 'input window, operand 2, single buffered']
    #allocation3 [shape = 's32[2]{0}', space=sflag, size = 0x8, scoped, tag = 'scoped memory for tpu_custom_call.1']
    #allocation4 [shape = 's32[2]{0}', space=sflag, size = 0x8, scoped, tag = 'scoped memory for tpu_custom_call.1']
    #allocation5 [shape = 'u8[512]{0}', space=vmem, size = 0x400, scoped, tag = 'input window, operand 4, single buffered']
    #allocation6 [shape = 's32[1]{0}', space=sflag, size = 0x4, scoped, tag = 'scoped memory for tpu_custom_call.1']
    #allocation7 [shape = 'u8[294912]{0}', space=vmem, size = 0x48000, scoped, tag = 'input window, operand 5, single buffered']
    #allocation8 [shape = 'u8[1024]{0}', space=vmem, size = 0x400, scoped, tag = 'input window, operand 7, single buffered']
    #allocation9 [shape = 's32[1]{0}', space=sflag, size = 0x4, scoped, tag = 'scoped memory for tpu_custom_call.1']
    #allocation10 [shape = 'u8[1024]{0}', space=vmem, size = 0x400, scoped, tag = 'input window, operand 8, single buffered']
    #allocation11 [shape = 'u8[98304]{0}', space=vmem, size = 0x18000, scoped, tag = 'input window, operand 9, single buffered']
    #allocation12 [shape = 's32[1]{0}', space=sflag, size = 0x4, scoped, tag = 'scoped memory for tpu_custom_call.1']
    #allocation13 [shape = 'u8[65536]{0}', space=vmem, size = 0x10000, scoped, tag = 'input window, operand 10, single buffered']
    #allocation14 [shape = 'u8[512]{0}', space=vmem, size = 0x400, scoped, tag = 'input window, operand 11, single buffered']
    #allocation15 [shape = 's32[1]{0}', space=sflag, size = 0x4, scoped, tag = 'scoped memory for tpu_custom_call.1']
    #allocation16 [shape = 'u8[512]{0}', space=vmem, size = 0x400, scoped, tag = 'input window, operand 12, single buffered']
    #allocation17 [shape = 'u8[512]{0}', space=vmem, size = 0x400, scoped, tag = 'input window, operand 16, single buffered']
    #allocation18 [shape = 's32[1]{0}', space=sflag, size = 0x4, scoped, tag = 'scoped memory for tpu_custom_call.1']
    #allocation19 [shape = 'u8[512]{0}', space=vmem, size = 0x400, scoped, tag = 'input window, operand 17, single buffered']
    #allocation20 [shape = 'u8[16384]{0}', space=vmem, size = 0x4000, scoped, tag = 'output window, operand 0']
    %23 = vsyncpa [#allocation3], 0
    %24 = vsyncpa [#allocation6], 0
    %25 = vsyncpa [#allocation9], 0
    %26 = vsyncpa [#allocation12], 0
    %27 = vsyncpa [#allocation15], 0
    %28 = vsyncpa [#allocation18], 0
    %29 = vsyncpa [#allocation4], 0
    %s30 = scalar_lea.sflag [#allocation4], 1
    %31 = vsyncpa %s30, 0
    loop: start=0, step=1, limit=4
    $region2: #{tpu_custom_call.1} parent=1 // loop_pre_header
      _
    $region3: #{tpu_custom_call.1} parent=1 // loop_header
      %s33 = sphi 0, %s37
      %p34 = scmp.ge.s32.totalorder %s33, 4
      %s43 = sphi 0, %s45
      %s46 = sphi 0, %s43
      %s47 = sphi 0, %s46
      %s63 = sphi 0, %s47
      %s69 = sphi 0, %s71
      %s72 = sphi 0, %s69
      %s73 = sphi 0, %s72
      %s89 = sphi 0, %s73
      %s93 = sphi 0, %s93
      %s95 = sphi 0, %s93
      %s96 = sphi 0, %s95
      %s110 = sphi 0, %s96
      %s114 = sphi 0, %s114
      %s116 = sphi 0, %s114
      %s117 = sphi 0, %s116
      %s131 = sphi 0, %s117
      %s135 = sphi 0, %s135
      %s137 = sphi 0, %s135
      %s138 = sphi 0, %s137
      %s152 = sphi 0, %s138
      %s156 = sphi 0, %s156
      %s158 = sphi 0, %s156
      %s159 = sphi 0, %s158
      %s173 = sphi 0, %s159
      %s177 = sphi 0, %s177
      %s179 = sphi 0, %s177
      %s180 = sphi 0, %s179
      %s194 = sphi 0, %s180
      %s198 = sphi 0, %s198
      %s200 = sphi 0, %s198
      %s201 = sphi 0, %s200
      %s215 = sphi 0, %s201
      %s219 = sphi 0, %s219
      %s221 = sphi 0, %s219
      %s222 = sphi 0, %s221
      %s236 = sphi 0, %s222
      %s240 = sphi 0, %s240
      %s242 = sphi 0, %s240
      %s243 = sphi 0, %s242
      %s257 = sphi 0, %s243
      %s261 = sphi 0, %s261
      %s263 = sphi 0, %s261
      %s264 = sphi 0, %s263
      %s278 = sphi 0, %s264
      %s282 = sphi 0, %s282
      %s284 = sphi 0, %s282
      %s285 = sphi 0, %s284
      %s299 = sphi 0, %s285
      %s303 = sphi 0, %s303
      %s305 = sphi 0, %s303
      %s306 = sphi 0, %s305
      %s320 = sphi 0, %s306
      %s324 = sphi 0, %s324
      %s326 = sphi 0, %s324
      %s327 = sphi 0, %s326
      %s341 = sphi 0, %s327
      %s345 = sphi 0, %s345
      %s347 = sphi 0, %s345
      %s348 = sphi 0, %s347
      %s362 = sphi 0, %s348
      %s366 = sphi 0, %s366
      %s368 = sphi 0, %s366
      %s369 = sphi 0, %s368
      %s383 = sphi 0, %s369
      %s387 = sphi 0, %s387
      %s389 = sphi 0, %s387
      %s390 = sphi 0, %s389
      %s404 = sphi 0, %s390
      %s408 = sphi 0, %s408
      %s410 = sphi 0, %s408
      %s411 = sphi 0, %s410
      %s425 = sphi 0, %s411
      %s431 = sphi 0, %s433
      %s434 = sphi 0, %s431
      %s435 = sphi 0, %s434
      %s451 = sphi 0, %s435
    $region4: #{tpu_custom_call.1} parent=1 // loop_header_branch
      %36 = sbr.rel (%p34) target = $region8
    $region5: #{tpu_custom_call.1} parent=1 // loop_body
      %s38 = ssub.s32 %s33, 1
      %s39 = ssub.s32 %s33, 2
      %s40 = sadd.s32 %s33, 1
      %s41 = ssub.s32 %s33, %s40
      %p42 = scmp.eq.s32.totalorder %s41, 0
      %s44 = sadd.s32 %s43, 1
      %s45 = scalar_select %p42, %s43, %s44
      %p48 = pneg %p42
      %p49 = scmp.eq.s32.totalorder %s33, 1
      %p50 = por %p48, %p49
      %p51 = scmp.ne.s32.totalorder %s43, %s46
      %p52 = scmp.eq.s32.totalorder %s33, 0
      %p53 = por %p51, %p52
      %p54 = scmp.ne.s32.totalorder %s43, %s46
      %p55 = scmp.eq.s32.totalorder %s38, 1
      %p56 = por %p54, %p55
      %p57 = scmp.ne.s32.totalorder %s46, %s47
      %p58 = scmp.eq.s32.totalorder %s38, 0
      %p59 = por %p57, %p58
      %p60 = scmp.ne.s32.totalorder %s46, %s47
      %p61 = scmp.eq.s32.totalorder %s39, 1
      %p62 = por %p60, %p61
      %p64 = scmp.ne.s32.totalorder %s47, %s63
      %p65 = scmp.eq.s32.totalorder %s39, 0
      %p66 = por %p64, %p65
      %s67 = ssub.s32 %s33, %s40
      %p68 = scmp.eq.s32.totalorder %s67, 0
      %s70 = sadd.s32 %s69, 1
      %s71 = scalar_select %p68, %s69, %s70
      %p74 = pneg %p68
      %p75 = scmp.eq.s32.totalorder %s33, 1
      %p76 = por %p74, %p75
      %p77 = scmp.ne.s32.totalorder %s69, %s72
      %p78 = scmp.eq.s32.totalorder %s33, 0
      %p79 = por %p77, %p78
      %p80 = scmp.ne.s32.totalorder %s69, %s72
      %p81 = scmp.eq.s32.totalorder %s38, 1
      %p82 = por %p80, %p81
      %p83 = scmp.ne.s32.totalorder %s72, %s73
      %p84 = scmp.eq.s32.totalorder %s38, 0
      %p85 = por %p83, %p84
      %p86 = scmp.ne.s32.totalorder %s72, %s73
      %p87 = scmp.eq.s32.totalorder %s39, 1
      %p88 = por %p86, %p87
      %p90 = scmp.ne.s32.totalorder %s73, %s89
      %p91 = scmp.eq.s32.totalorder %s39, 0
      %p92 = por %p90, %p91
      %s94 = sadd.s32 %s93, 1
      %p97 = scmp.eq.s32.totalorder %s33, 1
      %p98 = scmp.ne.s32.totalorder %s93, %s95
      %p99 = scmp.eq.s32.totalorder %s33, 0
      %p100 = por %p98, %p99
      %p101 = scmp.ne.s32.totalorder %s93, %s95
      %p102 = scmp.eq.s32.totalorder %s38, 1
      %p103 = por %p101, %p102
      %p104 = scmp.ne.s32.totalorder %s95, %s96
      %p105 = scmp.eq.s32.totalorder %s38, 0
      %p106 = por %p104, %p105
      %p107 = scmp.ne.s32.totalorder %s95, %s96
      %p108 = scmp.eq.s32.totalorder %s39, 1
      %p109 = por %p107, %p108
      %p111 = scmp.ne.s32.totalorder %s96, %s110
      %p112 = scmp.eq.s32.totalorder %s39, 0
      %p113 = por %p111, %p112
      %s115 = sadd.s32 %s114, 1
      %p118 = scmp.eq.s32.totalorder %s33, 1
      %p119 = scmp.ne.s32.totalorder %s114, %s116
      %p120 = scmp.eq.s32.totalorder %s33, 0
      %p121 = por %p119, %p120
      %p122 = scmp.ne.s32.totalorder %s114, %s116
      %p123 = scmp.eq.s32.totalorder %s38, 1
      %p124 = por %p122, %p123
      %p125 = scmp.ne.s32.totalorder %s116, %s117
      %p126 = scmp.eq.s32.totalorder %s38, 0
      %p127 = por %p125, %p126
      %p128 = scmp.ne.s32.totalorder %s116, %s117
      %p129 = scmp.eq.s32.totalorder %s39, 1
      %p130 = por %p128, %p129
      %p132 = scmp.ne.s32.totalorder %s117, %s131
      %p133 = scmp.eq.s32.totalorder %s39, 0
      %p134 = por %p132, %p133
      %s136 = sadd.s32 %s135, 1
      %p139 = scmp.eq.s32.totalorder %s33, 1
      %p140 = scmp.ne.s32.totalorder %s135, %s137
      %p141 = scmp.eq.s32.totalorder %s33, 0
      %p142 = por %p140, %p141
      %p143 = scmp.ne.s32.totalorder %s135, %s137
      %p144 = scmp.eq.s32.totalorder %s38, 1
      %p145 = por %p143, %p144
      %p146 = scmp.ne.s32.totalorder %s137, %s138
      %p147 = scmp.eq.s32.totalorder %s38, 0
      %p148 = por %p146, %p147
      %p149 = scmp.ne.s32.totalorder %s137, %s138
      %p150 = scmp.eq.s32.totalorder %s39, 1
      %p151 = por %p149, %p150
      %p153 = scmp.ne.s32.totalorder %s138, %s152
      %p154 = scmp.eq.s32.totalorder %s39, 0
      %p155 = por %p153, %p154
      %s157 = sadd.s32 %s156, 1
      %p160 = scmp.eq.s32.totalorder %s33, 1
      %p161 = scmp.ne.s32.totalorder %s156, %s158
      %p162 = scmp.eq.s32.totalorder %s33, 0
      %p163 = por %p161, %p162
      %p164 = scmp.ne.s32.totalorder %s156, %s158
      %p165 = scmp.eq.s32.totalorder %s38, 1
      %p166 = por %p164, %p165
      %p167 = scmp.ne.s32.totalorder %s158, %s159
      %p168 = scmp.eq.s32.totalorder %s38, 0
      %p169 = por %p167, %p168
      %p170 = scmp.ne.s32.totalorder %s158, %s159
      %p171 = scmp.eq.s32.totalorder %s39, 1
      %p172 = por %p170, %p171
      %p174 = scmp.ne.s32.totalorder %s159, %s173
      %p175 = scmp.eq.s32.totalorder %s39, 0
      %p176 = por %p174, %p175
      %s178 = sadd.s32 %s177, 1
      %p181 = scmp.eq.s32.totalorder %s33, 1
      %p182 = scmp.ne.s32.totalorder %s177, %s179
      %p183 = scmp.eq.s32.totalorder %s33, 0
      %p184 = por %p182, %p183
      %p185 = scmp.ne.s32.totalorder %s177, %s179
      %p186 = scmp.eq.s32.totalorder %s38, 1
      %p187 = por %p185, %p186
      %p188 = scmp.ne.s32.totalorder %s179, %s180
      %p189 = scmp.eq.s32.totalorder %s38, 0
      %p190 = por %p188, %p189
      %p191 = scmp.ne.s32.totalorder %s179, %s180
      %p192 = scmp.eq.s32.totalorder %s39, 1
      %p193 = por %p191, %p192
      %p195 = scmp.ne.s32.totalorder %s180, %s194
      %p196 = scmp.eq.s32.totalorder %s39, 0
      %p197 = por %p195, %p196
      %s199 = sadd.s32 %s198, 1
      %p202 = scmp.eq.s32.totalorder %s33, 1
      %p203 = scmp.ne.s32.totalorder %s198, %s200
      %p204 = scmp.eq.s32.totalorder %s33, 0
      %p205 = por %p203, %p204
      %p206 = scmp.ne.s32.totalorder %s198, %s200
      %p207 = scmp.eq.s32.totalorder %s38, 1
      %p208 = por %p206, %p207
      %p209 = scmp.ne.s32.totalorder %s200, %s201
      %p210 = scmp.eq.s32.totalorder %s38, 0
      %p211 = por %p209, %p210
      %p212 = scmp.ne.s32.totalorder %s200, %s201
      %p213 = scmp.eq.s32.totalorder %s39, 1
      %p214 = por %p212, %p213
      %p216 = scmp.ne.s32.totalorder %s201, %s215
      %p217 = scmp.eq.s32.totalorder %s39, 0
      %p218 = por %p216, %p217
      %s220 = sadd.s32 %s219, 1
      %p223 = scmp.eq.s32.totalorder %s33, 1
      %p224 = scmp.ne.s32.totalorder %s219, %s221
      %p225 = scmp.eq.s32.totalorder %s33, 0
      %p226 = por %p224, %p225
      %p227 = scmp.ne.s32.totalorder %s219, %s221
      %p228 = scmp.eq.s32.totalorder %s38, 1
      %p229 = por %p227, %p228
      %p230 = scmp.ne.s32.totalorder %s221, %s222
      %p231 = scmp.eq.s32.totalorder %s38, 0
      %p232 = por %p230, %p231
      %p233 = scmp.ne.s32.totalorder %s221, %s222
      %p234 = scmp.eq.s32.totalorder %s39, 1
      %p235 = por %p233, %p234
      %p237 = scmp.ne.s32.totalorder %s222, %s236
      %p238 = scmp.eq.s32.totalorder %s39, 0
      %p239 = por %p237, %p238
      %s241 = sadd.s32 %s240, 1
      %p244 = scmp.eq.s32.totalorder %s33, 1
      %p245 = scmp.ne.s32.totalorder %s240, %s242
      %p246 = scmp.eq.s32.totalorder %s33, 0
      %p247 = por %p245, %p246
      %p248 = scmp.ne.s32.totalorder %s240, %s242
      %p249 = scmp.eq.s32.totalorder %s38, 1
      %p250 = por %p248, %p249
      %p251 = scmp.ne.s32.totalorder %s242, %s243
      %p252 = scmp.eq.s32.totalorder %s38, 0
      %p253 = por %p251, %p252
      %p254 = scmp.ne.s32.totalorder %s242, %s243
      %p255 = scmp.eq.s32.totalorder %s39, 1
      %p256 = por %p254, %p255
      %p258 = scmp.ne.s32.totalorder %s243, %s257
      %p259 = scmp.eq.s32.totalorder %s39, 0
      %p260 = por %p258, %p259
      %s262 = sadd.s32 %s261, 1
      %p265 = scmp.eq.s32.totalorder %s33, 1
      %p266 = scmp.ne.s32.totalorder %s261, %s263
      %p267 = scmp.eq.s32.totalorder %s33, 0
      %p268 = por %p266, %p267
      %p269 = scmp.ne.s32.totalorder %s261, %s263
      %p270 = scmp.eq.s32.totalorder %s38, 1
      %p271 = por %p269, %p270
      %p272 = scmp.ne.s32.totalorder %s263, %s264
      %p273 = scmp.eq.s32.totalorder %s38, 0
      %p274 = por %p272, %p273
      %p275 = scmp.ne.s32.totalorder %s263, %s264
      %p276 = scmp.eq.s32.totalorder %s39, 1
      %p277 = por %p275, %p276
      %p279 = scmp.ne.s32.totalorder %s264, %s278
      %p280 = scmp.eq.s32.totalorder %s39, 0
      %p281 = por %p279, %p280
      %s283 = sadd.s32 %s282, 1
      %p286 = scmp.eq.s32.totalorder %s33, 1
      %p287 = scmp.ne.s32.totalorder %s282, %s284
      %p288 = scmp.eq.s32.totalorder %s33, 0
      %p289 = por %p287, %p288
      %p290 = scmp.ne.s32.totalorder %s282, %s284
      %p291 = scmp.eq.s32.totalorder %s38, 1
      %p292 = por %p290, %p291
      %p293 = scmp.ne.s32.totalorder %s284, %s285
      %p294 = scmp.eq.s32.totalorder %s38, 0
      %p295 = por %p293, %p294
      %p296 = scmp.ne.s32.totalorder %s284, %s285
      %p297 = scmp.eq.s32.totalorder %s39, 1
      %p298 = por %p296, %p297
      %p300 = scmp.ne.s32.totalorder %s285, %s299
      %p301 = scmp.eq.s32.totalorder %s39, 0
      %p302 = por %p300, %p301
      %s304 = sadd.s32 %s303, 1
      %p307 = scmp.eq.s32.totalorder %s33, 1
      %p308 = scmp.ne.s32.totalorder %s303, %s305
      %p309 = scmp.eq.s32.totalorder %s33, 0
      %p310 = por %p308, %p309
      %p311 = scmp.ne.s32.totalorder %s303, %s305
      %p312 = scmp.eq.s32.totalorder %s38, 1
      %p313 = por %p311, %p312
      %p314 = scmp.ne.s32.totalorder %s305, %s306
      %p315 = scmp.eq.s32.totalorder %s38, 0
      %p316 = por %p314, %p315
      %p317 = scmp.ne.s32.totalorder %s305, %s306
      %p318 = scmp.eq.s32.totalorder %s39, 1
      %p319 = por %p317, %p318
      %p321 = scmp.ne.s32.totalorder %s306, %s320
      %p322 = scmp.eq.s32.totalorder %s39, 0
      %p323 = por %p321, %p322
      %s325 = sadd.s32 %s324, 1
      %p328 = scmp.eq.s32.totalorder %s33, 1
      %p329 = scmp.ne.s32.totalorder %s324, %s326
      %p330 = scmp.eq.s32.totalorder %s33, 0
      %p331 = por %p329, %p330
      %p332 = scmp.ne.s32.totalorder %s324, %s326
      %p333 = scmp.eq.s32.totalorder %s38, 1
      %p334 = por %p332, %p333
      %p335 = scmp.ne.s32.totalorder %s326, %s327
      %p336 = scmp.eq.s32.totalorder %s38, 0
      %p337 = por %p335, %p336
      %p338 = scmp.ne.s32.totalorder %s326, %s327
      %p339 = scmp.eq.s32.totalorder %s39, 1
      %p340 = por %p338, %p339
      %p342 = scmp.ne.s32.totalorder %s327, %s341
      %p343 = scmp.eq.s32.totalorder %s39, 0
      %p344 = por %p342, %p343
      %s346 = sadd.s32 %s345, 1
      %p349 = scmp.eq.s32.totalorder %s33, 1
      %p350 = scmp.ne.s32.totalorder %s345, %s347
      %p351 = scmp.eq.s32.totalorder %s33, 0
      %p352 = por %p350, %p351
      %p353 = scmp.ne.s32.totalorder %s345, %s347
      %p354 = scmp.eq.s32.totalorder %s38, 1
      %p355 = por %p353, %p354
      %p356 = scmp.ne.s32.totalorder %s347, %s348
      %p357 = scmp.eq.s32.totalorder %s38, 0
      %p358 = por %p356, %p357
      %p359 = scmp.ne.s32.totalorder %s347, %s348
      %p360 = scmp.eq.s32.totalorder %s39, 1
      %p361 = por %p359, %p360
      %p363 = scmp.ne.s32.totalorder %s348, %s362
      %p364 = scmp.eq.s32.totalorder %s39, 0
      %p365 = por %p363, %p364
      %s367 = sadd.s32 %s366, 1
      %p370 = scmp.eq.s32.totalorder %s33, 1
      %p371 = scmp.ne.s32.totalorder %s366, %s368
      %p372 = scmp.eq.s32.totalorder %s33, 0
      %p373 = por %p371, %p372
      %p374 = scmp.ne.s32.totalorder %s366, %s368
      %p375 = scmp.eq.s32.totalorder %s38, 1
      %p376 = por %p374, %p375
      %p377 = scmp.ne.s32.totalorder %s368, %s369
      %p378 = scmp.eq.s32.totalorder %s38, 0
      %p379 = por %p377, %p378
      %p380 = scmp.ne.s32.totalorder %s368, %s369
      %p381 = scmp.eq.s32.totalorder %s39, 1
      %p382 = por %p380, %p381
      %p384 = scmp.ne.s32.totalorder %s369, %s383
      %p385 = scmp.eq.s32.totalorder %s39, 0
      %p386 = por %p384, %p385
      %s388 = sadd.s32 %s387, 1
      %p391 = scmp.eq.s32.totalorder %s33, 1
      %p392 = scmp.ne.s32.totalorder %s387, %s389
      %p393 = scmp.eq.s32.totalorder %s33, 0
      %p394 = por %p392, %p393
      %p395 = scmp.ne.s32.totalorder %s387, %s389
      %p396 = scmp.eq.s32.totalorder %s38, 1
      %p397 = por %p395, %p396
      %p398 = scmp.ne.s32.totalorder %s389, %s390
      %p399 = scmp.eq.s32.totalorder %s38, 0
      %p400 = por %p398, %p399
      %p401 = scmp.ne.s32.totalorder %s389, %s390
      %p402 = scmp.eq.s32.totalorder %s39, 1
      %p403 = por %p401, %p402
      %p405 = scmp.ne.s32.totalorder %s390, %s404
      %p406 = scmp.eq.s32.totalorder %s39, 0
      %p407 = por %p405, %p406
      %s409 = sadd.s32 %s408, 1
      %p412 = scmp.eq.s32.totalorder %s33, 1
      %p413 = scmp.ne.s32.totalorder %s408, %s410
      %p414 = scmp.eq.s32.totalorder %s33, 0
      %p415 = por %p413, %p414
      %p416 = scmp.ne.s32.totalorder %s408, %s410
      %p417 = scmp.eq.s32.totalorder %s38, 1
      %p418 = por %p416, %p417
      %p419 = scmp.ne.s32.totalorder %s410, %s411
      %p420 = scmp.eq.s32.totalorder %s38, 0
      %p421 = por %p419, %p420
      %p422 = scmp.ne.s32.totalorder %s410, %s411
      %p423 = scmp.eq.s32.totalorder %s39, 1
      %p424 = por %p422, %p423
      %p426 = scmp.ne.s32.totalorder %s411, %s425
      %p427 = scmp.eq.s32.totalorder %s39, 0
      %p428 = por %p426, %p427
      %s429 = ssub.s32 %s33, %s40
      %p430 = scmp.eq.s32.totalorder %s429, 0
      %s432 = sadd.s32 %s431, 1
      %s433 = scalar_select %p430, %s431, %s432
      %p436 = pneg %p430
      %p437 = scmp.eq.s32.totalorder %s33, 1
      %p438 = por %p436, %p437
      %p439 = scmp.ne.s32.totalorder %s431, %s434
      %p440 = scmp.eq.s32.totalorder %s33, 0
      %p441 = por %p439, %p440
      %p442 = scmp.ne.s32.totalorder %s431, %s434
      %p443 = scmp.eq.s32.totalorder %s38, 1
      %p444 = por %p442, %p443
      %p445 = scmp.ne.s32.totalorder %s434, %s435
      %p446 = scmp.eq.s32.totalorder %s38, 0
      %p447 = por %p445, %p446
      %p448 = scmp.ne.s32.totalorder %s434, %s435
      %p449 = scmp.eq.s32.totalorder %s39, 1
      %p450 = por %p448, %p449
      %p452 = scmp.ne.s32.totalorder %s435, %s451
      %p453 = scmp.eq.s32.totalorder %s39, 0
      %p454 = por %p452, %p453
      %p455 = scmp.le.s32.totalorder 1, %s33
      %p456 = scmp.lt.s32.totalorder %s33, 3
      %p457 = pnand %p455, %p456
      %p458 = pneg %p457
      // Predicated region
      $region9: #{tpu_custom_call.1} parent=5 // pred_check
        _
      $region10: #{tpu_custom_call.1} parent=5 // pred_check_branch
        %460 = sbr.rel (%p457) target = $region12
      $region11: #{tpu_custom_call.1} parent=5 // pred_region
        %s461 = ssub.s32 %s33, 1
        // Predicated region
        $region13: #{tpu_custom_call.1} parent=11 // pred_check
          %p462 = pneg %p106
        $region14: #{tpu_custom_call.1} parent=11 // pred_check_branch
          %464 = sbr.rel (%p462) target = $region16
        $region15: #{tpu_custom_call.1} parent=11 // pred_region
          %s466 = ssub.s32 256, 256
          %467 = vsyncadd [#allocation3], %s466
          %s468 = sshll.u32 [#allocation2], 4
          %s469 = int_to_ptr.vmem [resolvable:$true] %s468
          %474 = dma.hbm_to_vmem [thread:$0]  %s2, 256, %s469, [#allocation3], 128, 128, 8
        $region16: #{tpu_custom_call.1} parent=11 // pred_fallthru
          _
        // Predicated region
        $region17: #{tpu_custom_call.1} parent=11 // pred_check
          %p475 = pneg %p127
        $region18: #{tpu_custom_call.1} parent=11 // pred_check_branch
          %477 = sbr.rel (%p475) target = $region20
        $region19: #{tpu_custom_call.1} parent=11 // pred_region
          _
        $region20: #{tpu_custom_call.1} parent=11 // pred_fallthru
          _
        // Predicated region
        $region21: #{tpu_custom_call.1} parent=11 // pred_check
          %p478 = pneg %p148
        $region22: #{tpu_custom_call.1} parent=11 // pred_check_branch
          %480 = sbr.rel (%p478) target = $region24
        $region23: #{tpu_custom_call.1} parent=11 // pred_region
          %s482 = ssub.s32 16, 16
          %483 = vsyncadd [#allocation6], %s482
          %s485 = sshll.u32 [#allocation5], 4
          %s486 = int_to_ptr.vmem [resolvable:$true] %s485
          %488 = dma.hbm_to_vmem [thread:$0]  %s4, 16, %s486, [#allocation6]
        $region24: #{tpu_custom_call.1} parent=11 // pred_fallthru
          _
        // Predicated region
        $region25: #{tpu_custom_call.1} parent=11 // pred_check
          %p489 = pneg %p169
        $region26: #{tpu_custom_call.1} parent=11 // pred_check_branch
          %491 = sbr.rel (%p489) target = $region28
        $region27: #{tpu_custom_call.1} parent=11 // pred_region
          %s493 = ssub.s32 9216, 9216
          %494 = vsyncadd [#allocation6], %s493
          %s495 = sshll.u32 [#allocation7], 4
          %s496 = int_to_ptr.vmem [resolvable:$true] %s495
          %501 = dma.hbm_to_vmem [thread:$0]  %s5, 9216, %s496, [#allocation6], 256, 256, 16
        $region28: #{tpu_custom_call.1} parent=11 // pred_fallthru
          _
        // Predicated region
        $region29: #{tpu_custom_call.1} parent=11 // pred_check
          %p502 = pneg %p190
        $region30: #{tpu_custom_call.1} parent=11 // pred_check_branch
          %504 = sbr.rel (%p502) target = $region32
        $region31: #{tpu_custom_call.1} parent=11 // pred_region
          _
        $region32: #{tpu_custom_call.1} parent=11 // pred_fallthru
          _
        // Predicated region
        $region33: #{tpu_custom_call.1} parent=11 // pred_check
          %p505 = pneg %p211
        $region34: #{tpu_custom_call.1} parent=11 // pred_check_branch
          %507 = sbr.rel (%p505) target = $region36
        $region35: #{tpu_custom_call.1} parent=11 // pred_region
          %s509 = ssub.s32 32, 32
          %510 = vsyncadd [#allocation9], %s509
          %s512 = sshll.u32 [#allocation8], 4
          %s513 = int_to_ptr.vmem [resolvable:$true] %s512
          %515 = dma.hbm_to_vmem [thread:$0]  %s7, 32, %s513, [#allocation9]
        $region36: #{tpu_custom_call.1} parent=11 // pred_fallthru
          _
        // Predicated region
        $region37: #{tpu_custom_call.1} parent=11 // pred_check
          %p516 = pneg %p232
        $region38: #{tpu_custom_call.1} parent=11 // pred_check_branch
          %518 = sbr.rel (%p516) target = $region40
        $region39: #{tpu_custom_call.1} parent=11 // pred_region
          %s520 = ssub.s32 32, 32
          %521 = vsyncadd [#allocation9], %s520
          %s523 = sshll.u32 [#allocation10], 4
          %s524 = int_to_ptr.vmem [resolvable:$true] %s523
          %526 = dma.hbm_to_vmem [thread:$0]  %s8, 32, %s524, [#allocation9]
        $region40: #{tpu_custom_call.1} parent=11 // pred_fallthru
          _
        // Predicated region
        $region41: #{tpu_custom_call.1} parent=11 // pred_check
          %p527 = pneg %p253
        $region42: #{tpu_custom_call.1} parent=11 // pred_check_branch
          %529 = sbr.rel (%p527) target = $region44
        $region43: #{tpu_custom_call.1} parent=11 // pred_region
          %s531 = ssub.s32 3072, 3072
          %532 = vsyncadd [#allocation12], %s531
          %s533 = sshll.u32 [#allocation11], 4
          %s534 = int_to_ptr.vmem [resolvable:$true] %s533
          %539 = dma.hbm_to_vmem [thread:$0]  %s9, 3072, %s534, [#allocation12], 128, 128, 8
        $region44: #{tpu_custom_call.1} parent=11 // pred_fallthru
          _
        // Predicated region
        $region45: #{tpu_custom_call.1} parent=11 // pred_check
          %p540 = pneg %p274
        $region46: #{tpu_custom_call.1} parent=11 // pred_check_branch
          %542 = sbr.rel (%p540) target = $region48
        $region47: #{tpu_custom_call.1} parent=11 // pred_region
          %s544 = ssub.s32 2048, 2048
          %545 = vsyncadd [#allocation12], %s544
          %s546 = sshll.u32 [#allocation13], 4
          %s547 = int_to_ptr.vmem [resolvable:$true] %s546
          %552 = dma.hbm_to_vmem [thread:$0]  %s10, 2048, %s547, [#allocation12], 128, 128, 8
        $region48: #{tpu_custom_call.1} parent=11 // pred_fallthru
          _
        // Predicated region
        $region49: #{tpu_custom_call.1} parent=11 // pred_check
          %p553 = pneg %p295
        $region50: #{tpu_custom_call.1} parent=11 // pred_check_branch
          %555 = sbr.rel (%p553) target = $region52
        $region51: #{tpu_custom_call.1} parent=11 // pred_region
          %s557 = ssub.s32 16, 16
          %558 = vsyncadd [#allocation15], %s557
          %s560 = sshll.u32 [#allocation14], 4
          %s561 = int_to_ptr.vmem [resolvable:$true] %s560
          %563 = dma.hbm_to_vmem [thread:$0]  %s11, 16, %s561, [#allocation15]
        $region52: #{tpu_custom_call.1} parent=11 // pred_fallthru
          _
        // Predicated region
        $region53: #{tpu_custom_call.1} parent=11 // pred_check
          %p564 = pneg %p316
        $region54: #{tpu_custom_call.1} parent=11 // pred_check_branch
          %566 = sbr.rel (%p564) target = $region56
        $region55: #{tpu_custom_call.1} parent=11 // pred_region
          %s568 = ssub.s32 16, 16
          %569 = vsyncadd [#allocation15], %s568
          %s571 = sshll.u32 [#allocation16], 4
          %s572 = int_to_ptr.vmem [resolvable:$true] %s571
          %574 = dma.hbm_to_vmem [thread:$0]  %s12, 16, %s572, [#allocation15]
        $region56: #{tpu_custom_call.1} parent=11 // pred_fallthru
          _
        // Predicated region
        $region57: #{tpu_custom_call.1} parent=11 // pred_check
          %p575 = pneg %p337
        $region58: #{tpu_custom_call.1} parent=11 // pred_check_branch
          %577 = sbr.rel (%p575) target = $region60
        $region59: #{tpu_custom_call.1} parent=11 // pred_region
          _
        $region60: #{tpu_custom_call.1} parent=11 // pred_fallthru
          _
        // Predicated region
        $region61: #{tpu_custom_call.1} parent=11 // pred_check
          %p578 = pneg %p358
        $region62: #{tpu_custom_call.1} parent=11 // pred_check_branch
          %580 = sbr.rel (%p578) target = $region64
        $region63: #{tpu_custom_call.1} parent=11 // pred_region
          _
        $region64: #{tpu_custom_call.1} parent=11 // pred_fallthru
          _
        // Predicated region
        $region65: #{tpu_custom_call.1} parent=11 // pred_check
          %p581 = pneg %p379
        $region66: #{tpu_custom_call.1} parent=11 // pred_check_branch
          %583 = sbr.rel (%p581) target = $region68
        $region67: #{tpu_custom_call.1} parent=11 // pred_region
          _
        $region68: #{tpu_custom_call.1} parent=11 // pred_fallthru
          _
        // Predicated region
        $region69: #{tpu_custom_call.1} parent=11 // pred_check
          %p584 = pneg %p400
        $region70: #{tpu_custom_call.1} parent=11 // pred_check_branch
          %586 = sbr.rel (%p584) target = $region72
        $region71: #{tpu_custom_call.1} parent=11 // pred_region
          %s588 = ssub.s32 16, 16
          %589 = vsyncadd [#allocation18], %s588
          %s591 = sshll.u32 [#allocation17], 4
          %s592 = int_to_ptr.vmem [resolvable:$true] %s591
          %594 = dma.hbm_to_vmem [thread:$0]  %s16, 16, %s592, [#allocation18]
        $region72: #{tpu_custom_call.1} parent=11 // pred_fallthru
          _
        // Predicated region
        $region73: #{tpu_custom_call.1} parent=11 // pred_check
          %p595 = pneg %p421
        $region74: #{tpu_custom_call.1} parent=11 // pred_check_branch
          %597 = sbr.rel (%p595) target = $region76
        $region75: #{tpu_custom_call.1} parent=11 // pred_region
          %s599 = ssub.s32 16, 16
          %600 = vsyncadd [#allocation18], %s599
          %s602 = sshll.u32 [#allocation19], 4
          %s603 = int_to_ptr.vmem [resolvable:$true] %s602
          %605 = dma.hbm_to_vmem [thread:$0]  %s17, 16, %s603, [#allocation18]
        $region76: #{tpu_custom_call.1} parent=11 // pred_fallthru
          _
      $region12: #{tpu_custom_call.1} parent=5 // pred_fallthru
        _
      %p606 = scmp.lt.s32.totalorder %s33, 2
      // Predicated region
      $region77: #{tpu_custom_call.1} parent=5 // pred_check
        %p607 = pneg %p606
      $region78: #{tpu_custom_call.1} parent=5 // pred_check_branch
        %609 = sbr.rel (%p607) target = $region80
      $region79: #{tpu_custom_call.1} parent=5 // pred_region
        // Predicated region
        $region81: #{tpu_custom_call.1} parent=79 // pred_check
          %p610 = pneg %p53
        $region82: #{tpu_custom_call.1} parent=79 // pred_check_branch
          %612 = sbr.rel (%p610) target = $region84
        $region83: #{tpu_custom_call.1} parent=79 // pred_region
          %s613 = smul.u32 2, %s33
          %p614 = scmp.lt.s32.totalorder %s613, 3
          %s615 = scalar_select %p614, %s613, 3
          %s616 = smul.addr %s615, 4
          %s617 = scalar_lea.vmem %s0, %s616
          %s618 = smul.u32 2, %s33
        $region84: #{tpu_custom_call.1} parent=79 // pred_fallthru
          _
        // Predicated region
        $region85: #{tpu_custom_call.1} parent=79 // pred_check
          %p619 = pneg %p79
        $region86: #{tpu_custom_call.1} parent=79 // pred_check_branch
          %621 = sbr.rel (%p619) target = $region88
        $region87: #{tpu_custom_call.1} parent=79 // pred_region
          %s622 = smul.u32 2, %s33
          %p623 = scmp.lt.s32.totalorder %s622, 3
          %s624 = scalar_select %p623, %s622, 3
          %s625 = smul.addr %s624, 3
          %s626 = smul.addr %s625, 4
          %s627 = scalar_lea.vmem %s1, %s626
          %s628 = smul.u32 2, %s33
        $region88: #{tpu_custom_call.1} parent=79 // pred_fallthru
          _
      $region80: #{tpu_custom_call.1} parent=5 // pred_fallthru
        _
      %p629 = scmp.le.s32.totalorder 1, %s33
      %p630 = scmp.lt.s32.totalorder %s33, 3
      %p631 = pnand %p629, %p630
      %p632 = pneg %p631
      // Predicated region
      $region89: #{tpu_custom_call.1} parent=5 // pred_check
        _
      $region90: #{tpu_custom_call.1} parent=5 // pred_check_branch
        %634 = sbr.rel (%p631) target = $region92
      $region91: #{tpu_custom_call.1} parent=5 // pred_region
        %s635 = ssub.s32 %s33, 1
        // Predicated region
        $region93: #{tpu_custom_call.1} parent=91 // pred_check
          %p636 = pneg %p106
        $region94: #{tpu_custom_call.1} parent=91 // pred_check_branch
          %638 = sbr.rel (%p636) target = $region96
        $region95: #{tpu_custom_call.1} parent=91 // pred_region
          %639 = dma.done [#allocation3], 256
        $region96: #{tpu_custom_call.1} parent=91 // pred_fallthru
          _
        // Predicated region
        $region97: #{tpu_custom_call.1} parent=91 // pred_check
          %p640 = pneg %p148
        $region98: #{tpu_custom_call.1} parent=91 // pred_check_branch
          %642 = sbr.rel (%p640) target = $region100
        $region99: #{tpu_custom_call.1} parent=91 // pred_region
          %643 = dma.done [#allocation6], 16
        $region100: #{tpu_custom_call.1} parent=91 // pred_fallthru
          _
        // Predicated region
        $region101: #{tpu_custom_call.1} parent=91 // pred_check
          %p644 = pneg %p169
        $region102: #{tpu_custom_call.1} parent=91 // pred_check_branch
          %646 = sbr.rel (%p644) target = $region104
        $region103: #{tpu_custom_call.1} parent=91 // pred_region
          %647 = dma.done [#allocation6], 9216
        $region104: #{tpu_custom_call.1} parent=91 // pred_fallthru
          _
        // Predicated region
        $region105: #{tpu_custom_call.1} parent=91 // pred_check
          %p648 = pneg %p211
        $region106: #{tpu_custom_call.1} parent=91 // pred_check_branch
          %650 = sbr.rel (%p648) target = $region108
        $region107: #{tpu_custom_call.1} parent=91 // pred_region
          %651 = dma.done [#allocation9], 32
        $region108: #{tpu_custom_call.1} parent=91 // pred_fallthru
          _
        // Predicated region
        $region109: #{tpu_custom_call.1} parent=91 // pred_check
          %p652 = pneg %p232
        $region110: #{tpu_custom_call.1} parent=91 // pred_check_branch
          %654 = sbr.rel (%p652) target = $region112
        $region111: #{tpu_custom_call.1} parent=91 // pred_region
          %655 = dma.done [#allocation9], 32
        $region112: #{tpu_custom_call.1} parent=91 // pred_fallthru
          _
        // Predicated region
        $region113: #{tpu_custom_call.1} parent=91 // pred_check
          %p656 = pneg %p253
        $region114: #{tpu_custom_call.1} parent=91 // pred_check_branch
          %658 = sbr.rel (%p656) target = $region116
        $region115: #{tpu_custom_call.1} parent=91 // pred_region
          %659 = dma.done [#allocation12], 3072
        $region116: #{tpu_custom_call.1} parent=91 // pred_fallthru
          _
        // Predicated region
        $region117: #{tpu_custom_call.1} parent=91 // pred_check
          %p660 = pneg %p274
        $region118: #{tpu_custom_call.1} parent=91 // pred_check_branch
          %662 = sbr.rel (%p660) target = $region120
        $region119: #{tpu_custom_call.1} parent=91 // pred_region
          %663 = dma.done [#allocation12], 2048
        $region120: #{tpu_custom_call.1} parent=91 // pred_fallthru
          _
        // Predicated region
        $region121: #{tpu_custom_call.1} parent=91 // pred_check
          %p664 = pneg %p295
        $region122: #{tpu_custom_call.1} parent=91 // pred_check_branch
          %666 = sbr.rel (%p664) target = $region124
        $region123: #{tpu_custom_call.1} parent=91 // pred_region
          %667 = dma.done [#allocation15], 16
        $region124: #{tpu_custom_call.1} parent=91 // pred_fallthru
          _
        // Predicated region
        $region125: #{tpu_custom_call.1} parent=91 // pred_check
          %p668 = pneg %p316
        $region126: #{tpu_custom_call.1} parent=91 // pred_check_branch
          %670 = sbr.rel (%p668) target = $region128
        $region127: #{tpu_custom_call.1} parent=91 // pred_region
          %671 = dma.done [#allocation15], 16
        $region128: #{tpu_custom_call.1} parent=91 // pred_fallthru
          _
        // Predicated region
        $region129: #{tpu_custom_call.1} parent=91 // pred_check
          %p672 = pneg %p400
        $region130: #{tpu_custom_call.1} parent=91 // pred_check_branch
          %674 = sbr.rel (%p672) target = $region132
        $region131: #{tpu_custom_call.1} parent=91 // pred_region
          %675 = dma.done [#allocation18], 16
        $region132: #{tpu_custom_call.1} parent=91 // pred_fallthru
          _
        // Predicated region
        $region133: #{tpu_custom_call.1} parent=91 // pred_check
          %p676 = pneg %p421
        $region134: #{tpu_custom_call.1} parent=91 // pred_check_branch
          %678 = sbr.rel (%p676) target = $region136
        $region135: #{tpu_custom_call.1} parent=91 // pred_region
          %679 = dma.done [#allocation18], 16
        $region136: #{tpu_custom_call.1} parent=91 // pred_fallthru
          _
        %s680 = smul.u32 2, %s38
        %p681 = scmp.lt.s32.totalorder %s680, 3
        %s682 = scalar_select %p681, %s680, 3
        %s683 = smul.addr %s682, 4
        %s684 = scalar_lea.vmem %s0, %s683
        %p685 = pneg %p59
        %p686 = pneg %p56
        %s687 = smul.u32 2, %s38
        %p688 = scmp.lt.s32.totalorder %s687, 3
        %s689 = scalar_select %p688, %s687, 3
        %s690 = smul.addr %s689, 3
        %s691 = smul.addr %s690, 4
        %s692 = scalar_lea.vmem %s1, %s691
        %p693 = pneg %p85
        %p694 = pneg %p82
        %p695 = pneg %p106
        %p696 = pneg %p103
        %p697 = pneg %p127
        %p698 = pneg %p124
        %p699 = pneg %p148
        %p700 = pneg %p145
        %p701 = pneg %p169
        %p702 = pneg %p166
        %p703 = pneg %p190
        %p704 = pneg %p187
        %p705 = pneg %p211
        %p706 = pneg %p208
        %p707 = pneg %p232
        %p708 = pneg %p229
        %p709 = pneg %p253
        %p710 = pneg %p250
        %p711 = pneg %p274
        %p712 = pneg %p271
        %p713 = pneg %p295
        %p714 = pneg %p292
        %p715 = pneg %p316
        %p716 = pneg %p313
        %p717 = pneg %p337
        %p718 = pneg %p334
        %p719 = pneg %p358
        %p720 = pneg %p355
        %p721 = pneg %p379
        %p722 = pneg %p376
        %p723 = pneg %p400
        %p724 = pneg %p397
        %p725 = pneg %p421
        %p726 = pneg %p418
        %p727 = pneg %p447
        %p728 = pneg %p444
        %s729 = sand.u32 %s434, 1
        %s730 = scalar_lea.sflag [#allocation4], %s729
        %s731 = sand.u32 %s434, 1
        %s732 = smul.addr %s731, 16
        %s733 = scalar_lea.vmem [#allocation20], %s732
        %s734 = smul.u32 2, %s38
        %p735 = scmp.lt.s32.totalorder %s734, 3
        %s736 = scalar_select %p735, %s734, 3
        %s737 = smul.addr %s736, 4
        %s738 = scalar_lea.vmem %s0, %s737
        %s739 = smul.u32 2, %s38
        %s740 = smul.u32 2, %s38
        %p741 = scmp.lt.s32.totalorder %s740, 3
        %s742 = scalar_select %p741, %s740, 3
        %s743 = smul.addr %s742, 3
        %s744 = smul.addr %s743, 4
        %s745 = scalar_lea.vmem %s1, %s744
        %s746 = smul.u32 2, %s38
        %s747 = smul.u32 2, %s38
        %v749 = vld [vmem:[%s738] sm:$0xf]
        %v750 = vld [vmem:[%s738 + $0x4] sm:$0xf]
        %v751 = vld [vmem:[#allocation2] sm:$0xff]
        %v752 = vld [vmem:[#allocation2 + $0x8] sm:$0x1f]
        %v755 = vunpack.c.l.b16 %v749
        %v756 = vunpack.c.l.b16 %v750
        %v757 = vpack.c.b16 %v756, %v755
        %vm758 = vcmask 105472
        %v760 = vsel %vm758, %v757, 0
        %vm762 = vcmask 1044480
        %v764 = vsel %vm762, %v752, 0
        %766 = vmatprep.subr.mxu0 0.0
        %767 = vmatpush1.msra.mxu0 0.0
        %768 = vmatprep.subr.mxu0 0.0
        %769 = vmatpush1.msra.mxu0 0.0
        %770 = vmatprep.subr.mxu0 0.0
        %771 = vmatpush1.msra.mxu0 0.0
        %772 = vmatprep.subr.mxu0 0.0
        %773 = vmatpush1.msra.mxu0 0.0
        %774 = vmatprep.subr.mxu0 0.0
        %775 = vmatpush1.msra.mxu0 0.0
        %776 = vmatprep.subr.mxu0 0.0
        %777 = vmatpush1.msra.mxu0 0.0
        %778 = vmatprep.subr.mxu0 0.0
        %779 = vmatpush1.msra.mxu0 0.0
        %780 = vmatprep.subr.mxu0 0.0
        %781 = vmatpush1.msra.mxu0 0.0
        %782 = vmatprep.subr.mxu0 0.0
        %783 = vmatpush1.msra.mxu0 0.0
        %784 = vmatprep.subr.mxu0 0.0
        %785 = vmatpush1.msra.mxu0 0.0
        %786 = vmatprep.subr.mxu0 0.0
        %787 = vmatpush1.msra.mxu0 0.0
        %788 = vmatprep.subr.mxu0 0.0
        %789 = vmatpush1.msra.mxu0 0.0
        %790 = vmatprep.subr.mxu0 0.0
        %791 = vmatpush1.msra.mxu0 0.0
        %792 = vmatprep.subr.mxu0 0.0
        %793 = vmatpush1.msra.mxu0 0.0
        %794 = vmatprep.subr.mxu0 0.0
        %795 = vmatpush1.msra.mxu0 %v764
        %796 = vmatprep.subr.mxu0 0.0
        %797 = vmatpush1.msra.mxu0 %v751
        %798 = vmatprep.subr.mxu0 0.0
        %799 = vmatpush2.msra.mxu0 0.0
        %800 = vmatprep.subr.mxu0 0.0
        %801 = vmatpush2.msra.mxu0 0.0
        %802 = vmatprep.subr.mxu0 0.0
        %803 = vmatpush2.msra.mxu0 0.0
        %804 = vmatprep.subr.mxu0 0.0
        %805 = vmatpush2.msra.mxu0 0.0
        %806 = vmatprep.subr.mxu0 0.0
        %807 = vmatpush2.msra.mxu0 0.0
        %808 = vmatprep.subr.mxu0 0.0
        %809 = vmatpush2.msra.mxu0 0.0
        %810 = vmatprep.subr.mxu0 0.0
        %811 = vmatpush2.msra.mxu0 0.0
        %812 = vmatprep.subr.mxu0 0.0
        %813 = vmatpush2.msra.mxu0 0.0
        %814 = vmatprep.subr.mxu0 0.0
        %815 = vmatpush2.msra.mxu0 0.0
        %816 = vmatprep.subr.mxu0 0.0
        %817 = vmatpush2.msra.mxu0 0.0
        %818 = vmatprep.subr.mxu0 0.0
        %819 = vmatpush2.msra.mxu0 0.0
        %820 = vmatprep.subr.mxu0 0.0
        %821 = vmatpush2.msra.mxu0 0.0
        %822 = vmatprep.subr.mxu0 0.0
        %823 = vmatpush2.msra.mxu0 0.0
        %824 = vmatprep.subr.mxu0 0.0
        %825 = vmatpush2.msra.mxu0 0.0
        %826 = vmatprep.subr.mxu0 0.0
        %827 = vmatpush2.msra.mxu0 0.0
        %828 = vmatprep.subr.mxu0 0.0
        %829 = vmatpush2.msra.mxu0 0.0
        %830 = vmatprep.mubr.bf16.mxu0 0
        %831 = vmatmul.mubr.bf16.gmra.mxu0 %v760
        %v832 = vpop.f32.mrf.mxu0
        %v833 = vadd.f32 0.0, %v832
        %v834 = vpop.f32.mrf.mxu0
        %v835 = vpop.f32.mrf.mxu0
        %v836 = vadd.f32 0.0, %v835
        %v837 = vpop.f32.mrf.mxu0
        %838 = vdwg.mxu0
        %v839 = vmul.f32 %v833, %v833
        %v840 = vmul.f32 %v836, %v836
        %841 = vadd.xlane.f32.xlu0 %v839
        %v842 = vpop.xlane.xlu0 %841
        %843 = vadd.xlane.f32.xlu0 %v840
        %v844 = vpop.xlane.xlu0 %843
        %v845 = vrcp.pop 128.0
        %v846 = vmul.f32 %v842, %v845
        %v847 = vmul.f32 %v844, %v845
        %v848 = vadd.f32 %v846, 1e-05
        %v849 = vadd.f32 %v847, 1e-05
        %v850 = vrsqrt.pop %v848
        %v851 = vrsqrt.pop %v849
        %v852 = vmul.f32 %v833, %v850
        %v853 = vmul.f32 %v836, %v851
        %v854 = vld [vmem:[%s3] sm:$0x1]
        %v856 = vlaneseq
        %v857 = vshrl.u32 %v856, 7
        %v858 = vsub.s32 0, %v857
        %v859 = vrot.slane %v854, %v858
        %v861 = vmul.f32 %v852, %v859
        %v862 = vmul.f32 %v853, %v859
        %v863 = vld [vmem:[#allocation5] sm:$0x1]
        %v865 = vlaneseq
        %v866 = vshrl.u32 %v865, 7
        %v867 = vsub.s32 0, %v866
        %v868 = vrot.slane %v863, %v867
        %v870 = vadd.f32 %v861, %v868
        %v871 = vadd.f32 %v862, %v868
        %v872 = vld [vmem:[%s745] sm:$0xff]
        %v873 = vld [vmem:[%s745 + $0x8] sm:$0xf]
        %v874 = vld [vmem:[%s745 + $0xc] sm:$0xff]
        %v875 = vld [vmem:[%s745 + $0x14] sm:$0xf]
        %v876 = vld [vmem:[#allocation7] sm:$0xff]
        %v877 = vld [vmem:[#allocation7 + $0x8] sm:$0xff]
        %v878 = vld [vmem:[#allocation7 + $0x10] sm:$0xff]
        %v879 = vld [vmem:[#allocation7 + $0x18] sm:$0xff]
        %v880 = vld [vmem:[#allocation7 + $0x20] sm:$0xff]
        %v881 = vld [vmem:[#allocation7 + $0x28] sm:$0xff]
        %v882 = vld [vmem:[#allocation7 + $0x30] sm:$0xff]
        %v883 = vld [vmem:[#allocation7 + $0x38] sm:$0xff]
        %v884 = vld [vmem:[#allocation7 + $0x40] sm:$0xff]
        %v885 = vld [vmem:[#allocation7 + $0x48] sm:$0xff]
        %v886 = vld [vmem:[#allocation7 + $0x50] sm:$0xff]
        %v887 = vld [vmem:[#allocation7 + $0x58] sm:$0xff]
        %v888 = vld [vmem:[#allocation7 + $0x60] sm:$0xff]
        %v889 = vld [vmem:[#allocation7 + $0x68] sm:$0xff]
        %v890 = vld [vmem:[#allocation7 + $0x70] sm:$0xff]
        %v891 = vld [vmem:[#allocation7 + $0x78] sm:$0xff]
        %v892 = vld [vmem:[#allocation7 + $0x80] sm:$0xff]
        %v893 = vld [vmem:[#allocation7 + $0x88] sm:$0xff]
        %v894 = vld [vmem:[#allocation7 + $0x90] sm:$0xff]
        %v895 = vld [vmem:[#allocation7 + $0x98] sm:$0xff]
        %v896 = vld [vmem:[#allocation7 + $0xa0] sm:$0xff]
        %v897 = vld [vmem:[#allocation7 + $0xa8] sm:$0xff]
        %v898 = vld [vmem:[#allocation7 + $0xb0] sm:$0xff]
        %v899 = vld [vmem:[#allocation7 + $0xb8] sm:$0xff]
        %v900 = vld [vmem:[#allocation7 + $0xc0] sm:$0xff]
        %v901 = vld [vmem:[#allocation7 + $0xc8] sm:$0xff]
        %v902 = vld [vmem:[#allocation7 + $0xd0] sm:$0xff]
        %v903 = vld [vmem:[#allocation7 + $0xd8] sm:$0xff]
        %v904 = vld [vmem:[#allocation7 + $0xe0] sm:$0xff]
        %v905 = vld [vmem:[#allocation7 + $0xe8] sm:$0xff]
        %v906 = vld [vmem:[#allocation7 + $0xf0] sm:$0xff]
        %v907 = vld [vmem:[#allocation7 + $0xf8] sm:$0xff]
        %v908 = vld [vmem:[#allocation7 + $0x100] sm:$0xff]
        %v909 = vld [vmem:[#allocation7 + $0x108] sm:$0xff]
        %v910 = vld [vmem:[#allocation7 + $0x110] sm:$0xff]
        %v911 = vld [vmem:[#allocation7 + $0x118] sm:$0xff]
        %v912 = vld [vmem:[#allocation7 + $0x120] sm:$0xff]
        %v913 = vld [vmem:[#allocation7 + $0x128] sm:$0xff]
        %v914 = vld [vmem:[#allocation7 + $0x130] sm:$0xff]
        %v915 = vld [vmem:[#allocation7 + $0x138] sm:$0xff]
        %v916 = vld [vmem:[#allocation7 + $0x140] sm:$0xff]
        %v917 = vld [vmem:[#allocation7 + $0x148] sm:$0xff]
        %v918 = vld [vmem:[#allocation7 + $0x150] sm:$0xff]
        %v919 = vld [vmem:[#allocation7 + $0x158] sm:$0xff]
        %v920 = vld [vmem:[#allocation7 + $0x160] sm:$0xff]
        %v921 = vld [vmem:[#allocation7 + $0x168] sm:$0xff]
        %v922 = vld [vmem:[#allocation7 + $0x170] sm:$0xff]
        %v923 = vld [vmem:[#allocation7 + $0x178] sm:$0xff]
        %v924 = vld [vmem:[#allocation7 + $0x180] sm:$0xff]
        %v925 = vld [vmem:[#allocation7 + $0x188] sm:$0xff]
        %v926 = vld [vmem:[#allocation7 + $0x190] sm:$0xff]
        %v927 = vld [vmem:[#allocation7 + $0x198] sm:$0xff]
        %v928 = vld [vmem:[#allocation7 + $0x1a0] sm:$0xff]
        %v929 = vld [vmem:[#allocation7 + $0x1a8] sm:$0xff]
        %v930 = vld [vmem:[#allocation7 + $0x1b0] sm:$0xff]
        %v931 = vld [vmem:[#allocation7 + $0x1b8] sm:$0xff]
        %v932 = vld [vmem:[#allocation7 + $0x1c0] sm:$0xff]
        %v933 = vld [vmem:[#allocation7 + $0x1c8] sm:$0xff]
        %v934 = vld [vmem:[#allocation7 + $0x1d0] sm:$0xff]
        %v935 = vld [vmem:[#allocation7 + $0x1d8] sm:$0xff]
        %v936 = vld [vmem:[#allocation7 + $0x1e0] sm:$0xff]
        %v937 = vld [vmem:[#allocation7 + $0x1e8] sm:$0xff]
        %v938 = vld [vmem:[#allocation7 + $0x1f0] sm:$0xff]
        %v939 = vld [vmem:[#allocation7 + $0x1f8] sm:$0xff]
        %v940 = vld [vmem:[#allocation7 + $0x200] sm:$0xff]
        %v941 = vld [vmem:[#allocation7 + $0x208] sm:$0xff]
        %v942 = vld [vmem:[#allocation7 + $0x210] sm:$0xff]
        %v943 = vld [vmem:[#allocation7 + $0x218] sm:$0xff]
        %v944 = vld [vmem:[#allocation7 + $0x220] sm:$0xff]
        %v945 = vld [vmem:[#allocation7 + $0x228] sm:$0xff]
        %v946 = vld [vmem:[#allocation7 + $0x230] sm:$0xff]
        %v947 = vld [vmem:[#allocation7 + $0x238] sm:$0xff]
        %v952 = vunpack.c.l.b16 %v872
        %v953 = vunpack.c.h.b16 %v872
        %v954 = vunpack.c.l.b16 %v873
        %v955 = vunpack.c.l.b16 %v874
        %v956 = vunpack.c.h.b16 %v874
        %v957 = vunpack.c.l.b16 %v875
        %v958 = vpack.c.b16 %v955, %v952
        %v959 = vpack.c.b16 %v956, %v953
        %v960 = vpack.c.b16 %v957, %v954
        %vm963 = vcmask 261120
        %v965 = vsel %vm963, %v960, 0
        %967 = vmatprep.subr.mxu0 %v907
        %968 = vmatpush1.msra.mxu0 %v906
        %969 = vmatprep.subr.mxu0 %v905
        %970 = vmatpush1.msra.mxu0 %v904
        %971 = vmatprep.subr.mxu0 %v903
        %972 = vmatpush1.msra.mxu0 %v902
        %973 = vmatprep.subr.mxu0 %v901
        %974 = vmatpush1.msra.mxu0 %v900
        %975 = vmatprep.subr.mxu0 %v899
        %976 = vmatpush1.msra.mxu0 %v898
        %977 = vmatprep.subr.mxu0 %v897
        %978 = vmatpush1.msra.mxu0 %v896
        %979 = vmatprep.subr.mxu0 %v895
        %980 = vmatpush1.msra.mxu0 %v894
        %981 = vmatprep.subr.mxu0 %v893
        %982 = vmatpush1.msra.mxu0 %v892
        %983 = vmatprep.subr.mxu0 %v891
        %984 = vmatpush1.msra.mxu0 %v890
        %985 = vmatprep.subr.mxu0 %v889
        %986 = vmatpush1.msra.mxu0 %v888
        %987 = vmatprep.subr.mxu0 %v887
        %988 = vmatpush1.msra.mxu0 %v886
        %989 = vmatprep.subr.mxu0 %v885
        %990 = vmatpush1.msra.mxu0 %v884
        %991 = vmatprep.subr.mxu0 %v883
        %992 = vmatpush1.msra.mxu0 %v882
        %993 = vmatprep.subr.mxu0 %v881
        %994 = vmatpush1.msra.mxu0 %v880
        %995 = vmatprep.subr.mxu0 %v879
        %996 = vmatpush1.msra.mxu0 %v878
        %997 = vmatprep.subr.mxu0 %v877
        %998 = vmatpush1.msra.mxu0 %v876
        %999 = vmatprep.subr.mxu0 %v939
        %1000 = vmatpush2.msra.mxu0 %v938
        %1001 = vmatprep.subr.mxu0 %v937
        %1002 = vmatpush2.msra.mxu0 %v936
        %1003 = vmatprep.subr.mxu0 %v935
        %1004 = vmatpush2.msra.mxu0 %v934
        %1005 = vmatprep.subr.mxu0 %v933
        %1006 = vmatpush2.msra.mxu0 %v932
        %1007 = vmatprep.subr.mxu0 %v931
        %1008 = vmatpush2.msra.mxu0 %v930
        %1009 = vmatprep.subr.mxu0 %v929
        %1010 = vmatpush2.msra.mxu0 %v928
        %1011 = vmatprep.subr.mxu0 %v927
        %1012 = vmatpush2.msra.mxu0 %v926
        %1013 = vmatprep.subr.mxu0 %v925
        %1014 = vmatpush2.msra.mxu0 %v924
        %1015 = vmatprep.subr.mxu0 %v923
        %1016 = vmatpush2.msra.mxu0 %v922
        %1017 = vmatprep.subr.mxu0 %v921
        %1018 = vmatpush2.msra.mxu0 %v920
        %1019 = vmatprep.subr.mxu0 %v919
        %1020 = vmatpush2.msra.mxu0 %v918
        %1021 = vmatprep.subr.mxu0 %v917
        %1022 = vmatpush2.msra.mxu0 %v916
        %1023 = vmatprep.subr.mxu0 %v915
        %1024 = vmatpush2.msra.mxu0 %v914
        %1025 = vmatprep.subr.mxu0 %v913
        %1026 = vmatpush2.msra.mxu0 %v912
        %1027 = vmatprep.subr.mxu0 %v911
        %1028 = vmatpush2.msra.mxu0 %v910
        %1029 = vmatprep.subr.mxu0 %v909
        %1030 = vmatpush2.msra.mxu0 %v908
        %1031 = vmatprep.mubr.bf16.mxu0 %v959
        %1032 = vmatmul.mubr.bf16.gmra.mxu0 %v958
        %v1033 = vpop.f32.mrf.mxu0
        %v1034 = vadd.f32 0.0, %v1033
        %v1035 = vpop.f32.mrf.mxu0
        %v1036 = vadd.f32 0.0, %v1035
        %v1037 = vpop.f32.mrf.mxu0
        %v1038 = vadd.f32 0.0, %v1037
        %v1039 = vpop.f32.mrf.mxu0
        %v1040 = vadd.f32 0.0, %v1039
        %1041 = vdwg.mxu0
        %1042 = vmatprep.subr.mxu0 0.0
        %1043 = vmatpush1.msra.mxu0 0.0
        %1044 = vmatprep.subr.mxu0 0.0
        %1045 = vmatpush1.msra.mxu0 0.0
        %1046 = vmatprep.subr.mxu0 0.0
        %1047 = vmatpush1.msra.mxu0 0.0
        %1048 = vmatprep.subr.mxu0 0.0
        %1049 = vmatpush1.msra.mxu0 0.0
        %1050 = vmatprep.subr.mxu0 0.0
        %1051 = vmatpush1.msra.mxu0 0.0
        %1052 = vmatprep.subr.mxu0 0.0
        %1053 = vmatpush1.msra.mxu0 0.0
        %1054 = vmatprep.subr.mxu0 0.0
        %1055 = vmatpush1.msra.mxu0 0.0
        %1056 = vmatprep.subr.mxu0 0.0
        %1057 = vmatpush1.msra.mxu0 0.0
        %1058 = vmatprep.subr.mxu0 0.0
        %1059 = vmatpush1.msra.mxu0 0.0
        %1060 = vmatprep.subr.mxu0 0.0
        %1061 = vmatpush1.msra.mxu0 0.0
        %1062 = vmatprep.subr.mxu0 0.0
        %1063 = vmatpush1.msra.mxu0 0.0
        %1064 = vmatprep.subr.mxu0 0.0
        %1065 = vmatpush1.msra.mxu0 0.0
        %1066 = vmatprep.subr.mxu0 %v947
        %1067 = vmatpush1.msra.mxu0 %v946
        %1068 = vmatprep.subr.mxu0 %v945
        %1069 = vmatpush1.msra.mxu0 %v944
        %1070 = vmatprep.subr.mxu0 %v943
        %1071 = vmatpush1.msra.mxu0 %v942
        %1072 = vmatprep.subr.mxu0 %v941
        %1073 = vmatpush1.msra.mxu0 %v940
        %1074 = vmatprep.subr.mxu0 0.0
        %1075 = vmatpush2.msra.mxu0 0.0
        %1076 = vmatprep.subr.mxu0 0.0
        %1077 = vmatpush2.msra.mxu0 0.0
        %1078 = vmatprep.subr.mxu0 0.0
        %1079 = vmatpush2.msra.mxu0 0.0
        %1080 = vmatprep.subr.mxu0 0.0
        %1081 = vmatpush2.msra.mxu0 0.0
        %1082 = vmatprep.subr.mxu0 0.0
        %1083 = vmatpush2.msra.mxu0 0.0
        %1084 = vmatprep.subr.mxu0 0.0
        %1085 = vmatpush2.msra.mxu0 0.0
        %1086 = vmatprep.subr.mxu0 0.0
        %1087 = vmatpush2.msra.mxu0 0.0
        %1088 = vmatprep.subr.mxu0 0.0
        %1089 = vmatpush2.msra.mxu0 0.0
        %1090 = vmatprep.subr.mxu0 0.0
        %1091 = vmatpush2.msra.mxu0 0.0
        %1092 = vmatprep.subr.mxu0 0.0
        %1093 = vmatpush2.msra.mxu0 0.0
        %1094 = vmatprep.subr.mxu0 0.0
        %1095 = vmatpush2.msra.mxu0 0.0
        %1096 = vmatprep.subr.mxu0 0.0
        %1097 = vmatpush2.msra.mxu0 0.0
        %1098 = vmatprep.subr.mxu0 0.0
        %1099 = vmatpush2.msra.mxu0 0.0
        %1100 = vmatprep.subr.mxu0 0.0
        %1101 = vmatpush2.msra.mxu0 0.0
        %1102 = vmatprep.subr.mxu0 0.0
        %1103 = vmatpush2.msra.mxu0 0.0
        %1104 = vmatprep.subr.mxu0 0.0
        %1105 = vmatpush2.msra.mxu0 0.0
        %1106 = vmatprep.mubr.bf16.mxu0 0
        %1107 = vmatmul.mubr.bf16.gmra.mxu0 %v965
        %v1108 = vpop.f32.mrf.mxu0
        %v1109 = vadd.f32 %v1034, %v1108
        %v1110 = vpop.f32.mrf.mxu0
        %v1111 = vadd.f32 %v1036, %v1110
        %v1112 = vpop.f32.mrf.mxu0
        %v1113 = vadd.f32 %v1038, %v1112
        %v1114 = vpop.f32.mrf.mxu0
        %v1115 = vadd.f32 %v1040, %v1114
        %1116 = vdwg.mxu0
        %v1117 = vmul.f32 %v1109, %v1109
        %v1118 = vmul.f32 %v1111, %v1111
        %v1119 = vmul.f32 %v1113, %v1113
        %v1120 = vmul.f32 %v1115, %v1115
        %v1121 = vld [vmem:[%s6] sm:$0xff]
        %v1122 = vld [vmem:[%s6 + $0x8] sm:$0xff]
        %v1123 = vld [vmem:[%s6 + $0x10] sm:$0xff]
        %v1124 = vld [vmem:[%s6 + $0x18] sm:$0xff]
        %v1125 = vld [vmem:[%s6 + $0x20] sm:$0xff]
        %v1126 = vld [vmem:[%s6 + $0x28] sm:$0xff]
        %v1127 = vld [vmem:[%s6 + $0x30] sm:$0xff]
        %v1128 = vld [vmem:[%s6 + $0x38] sm:$0xff]
        %v1129 = vld [vmem:[%s6 + $0x40] sm:$0xff]
        %v1130 = vld [vmem:[%s6 + $0x48] sm:$0xff]
        %v1131 = vld [vmem:[%s6 + $0x50] sm:$0xff]
        %v1132 = vld [vmem:[%s6 + $0x58] sm:$0xff]
        %v1133 = vld [vmem:[%s6 + $0x60] sm:$0xff]
        %v1134 = vld [vmem:[%s6 + $0x68] sm:$0xff]
        %v1135 = vld [vmem:[%s6 + $0x70] sm:$0xff]
        %v1136 = vld [vmem:[%s6 + $0x78] sm:$0xff]
        %v1137 = vld [vmem:[%s6 + $0x80] sm:$0xff]
        %v1138 = vld [vmem:[%s6 + $0x88] sm:$0xff]
        %v1139 = vld [vmem:[%s6 + $0x90] sm:$0xff]
        %v1140 = vld [vmem:[%s6 + $0x98] sm:$0xff]
        %v1141 = vld [vmem:[%s6 + $0xa0] sm:$0xff]
        %v1142 = vld [vmem:[%s6 + $0xa8] sm:$0xff]
        %v1143 = vld [vmem:[%s6 + $0xb0] sm:$0xff]
        %v1144 = vld [vmem:[%s6 + $0xb8] sm:$0xff]
        %v1145 = vld [vmem:[%s6 + $0xc0] sm:$0xff]
        %v1146 = vld [vmem:[%s6 + $0xc8] sm:$0xff]
        %v1147 = vld [vmem:[%s6 + $0xd0] sm:$0xff]
        %v1148 = vld [vmem:[%s6 + $0xd8] sm:$0xff]
        %v1149 = vld [vmem:[%s6 + $0xe0] sm:$0xff]
        %v1150 = vld [vmem:[%s6 + $0xe8] sm:$0xff]
        %v1151 = vld [vmem:[%s6 + $0xf0] sm:$0xff]
        %v1152 = vld [vmem:[%s6 + $0xf8] sm:$0xff]
        %v1153 = vld [vmem:[%s6 + $0x100] sm:$0xff]
        %v1154 = vld [vmem:[%s6 + $0x108] sm:$0xff]
        %v1155 = vld [vmem:[%s6 + $0x110] sm:$0xff]
        %v1156 = vld [vmem:[%s6 + $0x118] sm:$0xff]
        %v1157 = vld [vmem:[%s6 + $0x120] sm:$0xff]
        %v1158 = vld [vmem:[%s6 + $0x128] sm:$0xff]
        %v1159 = vld [vmem:[%s6 + $0x130] sm:$0xff]
        %v1160 = vld [vmem:[%s6 + $0x138] sm:$0xff]
        %v1161 = vld [vmem:[%s6 + $0x140] sm:$0xff]
        %v1162 = vld [vmem:[%s6 + $0x148] sm:$0xff]
        %v1163 = vld [vmem:[%s6 + $0x150] sm:$0xff]
        %v1164 = vld [vmem:[%s6 + $0x158] sm:$0xff]
        %v1165 = vld [vmem:[%s6 + $0x160] sm:$0xff]
        %v1166 = vld [vmem:[%s6 + $0x168] sm:$0xff]
        %v1167 = vld [vmem:[%s6 + $0x170] sm:$0xff]
        %v1168 = vld [vmem:[%s6 + $0x178] sm:$0xff]
        %vm1169 = vcmask 523264
        %v1171 = vsel %vm1169, %v1118, 0
        %v1174 = vsel %vm1169, %v1120, 0
        %1176 = vmatprep.subr.mxu0 %v1152
        %1177 = vmatpush1.msra.mxu0 %v1151
        %1178 = vmatprep.subr.mxu0 %v1150
        %1179 = vmatpush1.msra.mxu0 %v1149
        %1180 = vmatprep.subr.mxu0 %v1148
        %1181 = vmatpush1.msra.mxu0 %v1147
        %1182 = vmatprep.subr.mxu0 %v1146
        %1183 = vmatpush1.msra.mxu0 %v1145
        %1184 = vmatprep.subr.mxu0 %v1144
        %1185 = vmatpush1.msra.mxu0 %v1143
        %1186 = vmatprep.subr.mxu0 %v1142
        %1187 = vmatpush1.msra.mxu0 %v1141
        %1188 = vmatprep.subr.mxu0 %v1140
        %1189 = vmatpush1.msra.mxu0 %v1139
        %1190 = vmatprep.subr.mxu0 %v1138
        %1191 = vmatpush1.msra.mxu0 %v1137
        %1192 = vmatprep.subr.mxu0 %v1136
        %1193 = vmatpush1.msra.mxu0 %v1135
        %1194 = vmatprep.subr.mxu0 %v1134
        %1195 = vmatpush1.msra.mxu0 %v1133
        %1196 = vmatprep.subr.mxu0 %v1132
        %1197 = vmatpush1.msra.mxu0 %v1131
        %1198 = vmatprep.subr.mxu0 %v1130
        %1199 = vmatpush1.msra.mxu0 %v1129
        %1200 = vmatprep.subr.mxu0 %v1128
        %1201 = vmatpush1.msra.mxu0 %v1127
        %1202 = vmatprep.subr.mxu0 %v1126
        %1203 = vmatpush1.msra.mxu0 %v1125
        %1204 = vmatprep.subr.mxu0 %v1124
        %1205 = vmatpush1.msra.mxu0 %v1123
        %1206 = vmatprep.subr.mxu0 %v1122
        %1207 = vmatpush1.msra.mxu0 %v1121
        %1208 = vmatprep.subr.mxu0 0.0
        %1209 = vmatpush2.msra.mxu0 0.0
        %1210 = vmatprep.subr.mxu0 0.0
        %1211 = vmatpush2.msra.mxu0 0.0
        %1212 = vmatprep.subr.mxu0 0.0
        %1213 = vmatpush2.msra.mxu0 0.0
        %1214 = vmatprep.subr.mxu0 0.0
        %1215 = vmatpush2.msra.mxu0 0.0
        %1216 = vmatprep.subr.mxu0 0.0
        %1217 = vmatpush2.msra.mxu0 0.0
        %1218 = vmatprep.subr.mxu0 0.0
        %1219 = vmatpush2.msra.mxu0 0.0
        %1220 = vmatprep.subr.mxu0 0.0
        %1221 = vmatpush2.msra.mxu0 0.0
        %1222 = vmatprep.subr.mxu0 0.0
        %1223 = vmatpush2.msra.mxu0 0.0
        %1224 = vmatprep.subr.mxu0 %v1168
        %1225 = vmatpush2.msra.mxu0 %v1167
        %1226 = vmatprep.subr.mxu0 %v1166
        %1227 = vmatpush2.msra.mxu0 %v1165
        %1228 = vmatprep.subr.mxu0 %v1164
        %1229 = vmatpush2.msra.mxu0 %v1163
        %1230 = vmatprep.subr.mxu0 %v1162
        %1231 = vmatpush2.msra.mxu0 %v1161
        %1232 = vmatprep.subr.mxu0 %v1160
        %1233 = vmatpush2.msra.mxu0 %v1159
        %1234 = vmatprep.subr.mxu0 %v1158
        %1235 = vmatpush2.msra.mxu0 %v1157
        %1236 = vmatprep.subr.mxu0 %v1156
        %1237 = vmatpush2.msra.mxu0 %v1155
        %1238 = vmatprep.subr.mxu0 %v1154
        %1239 = vmatpush2.msra.mxu0 %v1153
        %1240 = vmatprep.mubr.f32.mxu0 %v1171
        %1241 = vmatmul.mubr.f32.gmra.mxu0 %v1117
        %v1242 = vpop.f32.mrf.mxu0
        %v1243 = vadd.f32 1e-05, %v1242
        %v1244 = vpop.f32.mrf.mxu0
        %v1245 = vadd.f32 1e-05, %v1244
        %1246 = vmatprep.mubr.f32.mxu0 %v1174
        %1247 = vmatmul.mubr.f32.gmra.mxu0 %v1119
        %v1248 = vpop.f32.mrf.mxu0
        %v1249 = vadd.f32 1e-05, %v1248
        %v1250 = vpop.f32.mrf.mxu0
        %v1251 = vadd.f32 1e-05, %v1250
        %1252 = vdwg.mxu0
        %v1253 = vrsqrt.pop %v1243
        %v1254 = vrsqrt.pop %v1245
        %v1255 = vrsqrt.pop %v1249
        %v1256 = vrsqrt.pop %v1251
        %v1257 = vmul.f32 %v1109, %v1253
        %v1258 = vmul.f32 %v1111, %v1254
        %v1259 = vmul.f32 %v1113, %v1255
        %v1260 = vmul.f32 %v1115, %v1256
        %v1261 = vld [vmem:[#allocation8] sm:$0x3]
        %v1263 = vlaneseq
        %v1264 = vshrl.u32 %v1263, 7
        %v1265 = vsub.s32 0, %v1264
        %v1266 = vrot.slane %v1261, %v1265
        %v1267 = vlaneseq
        %v1268 = vshrl.u32 %v1267, 7
        %v1269 = vsub.s32 1, %v1268
        %v1270 = vrot.slane %v1261, %v1269
        %v1273 = vmul.f32 %v1257, %v1266
        %v1274 = vmul.f32 %v1258, %v1270
        %v1275 = vmul.f32 %v1259, %v1266
        %v1276 = vmul.f32 %v1260, %v1270
        %v1277 = vld [vmem:[#allocation10] sm:$0x3]
        %v1279 = vlaneseq
        %v1280 = vshrl.u32 %v1279, 7
        %v1281 = vsub.s32 0, %v1280
        %v1282 = vrot.slane %v1277, %v1281
        %v1283 = vlaneseq
        %v1284 = vshrl.u32 %v1283, 7
        %v1285 = vsub.s32 1, %v1284
        %v1286 = vrot.slane %v1277, %v1285
        %v1289 = vadd.f32 %v1273, %v1282
        %v1290 = vadd.f32 %v1274, %v1286
        %v1291 = vadd.f32 %v1275, %v1282
        %v1292 = vadd.f32 %v1276, %v1286
        %v1293 = vld [vmem:[#allocation11] sm:$0xff]
        %v1294 = vld [vmem:[#allocation11 + $0x8] sm:$0xff]
        %v1295 = vld [vmem:[#allocation11 + $0x10] sm:$0xff]
        %v1296 = vld [vmem:[#allocation11 + $0x18] sm:$0xff]
        %v1297 = vld [vmem:[#allocation11 + $0x20] sm:$0xff]
        %v1298 = vld [vmem:[#allocation11 + $0x28] sm:$0xff]
        %v1299 = vld [vmem:[#allocation11 + $0x30] sm:$0xff]
        %v1300 = vld [vmem:[#allocation11 + $0x38] sm:$0xff]
        %v1301 = vld [vmem:[#allocation11 + $0x40] sm:$0xff]
        %v1302 = vld [vmem:[#allocation11 + $0x48] sm:$0xff]
        %v1303 = vld [vmem:[#allocation11 + $0x50] sm:$0xff]
        %v1304 = vld [vmem:[#allocation11 + $0x58] sm:$0xff]
        %v1305 = vld [vmem:[#allocation11 + $0x60] sm:$0xff]
        %v1306 = vld [vmem:[#allocation11 + $0x68] sm:$0xff]
        %v1307 = vld [vmem:[#allocation11 + $0x70] sm:$0xff]
        %v1308 = vld [vmem:[#allocation11 + $0x78] sm:$0xff]
        %v1309 = vld [vmem:[#allocation11 + $0x80] sm:$0xff]
        %v1310 = vld [vmem:[#allocation11 + $0x88] sm:$0xff]
        %v1311 = vld [vmem:[#allocation11 + $0x90] sm:$0xff]
        %v1312 = vld [vmem:[#allocation11 + $0x98] sm:$0xff]
        %v1313 = vld [vmem:[#allocation11 + $0xa0] sm:$0xff]
        %v1314 = vld [vmem:[#allocation11 + $0xa8] sm:$0xff]
        %v1315 = vld [vmem:[#allocation11 + $0xb0] sm:$0xff]
        %v1316 = vld [vmem:[#allocation11 + $0xb8] sm:$0xff]
        %v1318 = vsel %vm1169, %v1290, 0
        %v1321 = vsel %vm1169, %v1292, 0
        %1323 = vmatprep.subr.mxu0 0.0
        %1324 = vmatpush1.msra.mxu0 %v1308
        %1325 = vmatprep.subr.mxu0 0.0
        %1326 = vmatpush1.msra.mxu0 %v1307
        %1327 = vmatprep.subr.mxu0 0.0
        %1328 = vmatpush1.msra.mxu0 %v1306
        %1329 = vmatprep.subr.mxu0 0.0
        %1330 = vmatpush1.msra.mxu0 %v1305
        %1331 = vmatprep.subr.mxu0 0.0
        %1332 = vmatpush1.msra.mxu0 %v1304
        %1333 = vmatprep.subr.mxu0 0.0
        %1334 = vmatpush1.msra.mxu0 %v1303
        %1335 = vmatprep.subr.mxu0 0.0
        %1336 = vmatpush1.msra.mxu0 %v1302
        %1337 = vmatprep.subr.mxu0 0.0
        %1338 = vmatpush1.msra.mxu0 %v1301
        %1339 = vmatprep.subr.mxu0 0.0
        %1340 = vmatpush1.msra.mxu0 %v1300
        %1341 = vmatprep.subr.mxu0 0.0
        %1342 = vmatpush1.msra.mxu0 %v1299
        %1343 = vmatprep.subr.mxu0 0.0
        %1344 = vmatpush1.msra.mxu0 %v1298
        %1345 = vmatprep.subr.mxu0 0.0
        %1346 = vmatpush1.msra.mxu0 %v1297
        %1347 = vmatprep.subr.mxu0 0.0
        %1348 = vmatpush1.msra.mxu0 %v1296
        %1349 = vmatprep.subr.mxu0 0.0
        %1350 = vmatpush1.msra.mxu0 %v1295
        %1351 = vmatprep.subr.mxu0 0.0
        %1352 = vmatpush1.msra.mxu0 %v1294
        %1353 = vmatprep.subr.mxu0 0.0
        %1354 = vmatpush1.msra.mxu0 %v1293
        %1355 = vmatprep.subr.mxu0 0.0
        %1356 = vmatpush2.msra.mxu0 0.0
        %1357 = vmatprep.subr.mxu0 0.0
        %1358 = vmatpush2.msra.mxu0 0.0
        %1359 = vmatprep.subr.mxu0 0.0
        %1360 = vmatpush2.msra.mxu0 0.0
        %1361 = vmatprep.subr.mxu0 0.0
        %1362 = vmatpush2.msra.mxu0 0.0
        %1363 = vmatprep.subr.mxu0 0.0
        %1364 = vmatpush2.msra.mxu0 0.0
        %1365 = vmatprep.subr.mxu0 0.0
        %1366 = vmatpush2.msra.mxu0 0.0
        %1367 = vmatprep.subr.mxu0 0.0
        %1368 = vmatpush2.msra.mxu0 0.0
        %1369 = vmatprep.subr.mxu0 0.0
        %1370 = vmatpush2.msra.mxu0 0.0
        %1371 = vmatprep.subr.mxu0 0.0
        %1372 = vmatpush2.msra.mxu0 %v1316
        %1373 = vmatprep.subr.mxu0 0.0
        %1374 = vmatpush2.msra.mxu0 %v1315
        %1375 = vmatprep.subr.mxu0 0.0
        %1376 = vmatpush2.msra.mxu0 %v1314
        %1377 = vmatprep.subr.mxu0 0.0
        %1378 = vmatpush2.msra.mxu0 %v1313
        %1379 = vmatprep.subr.mxu0 0.0
        %1380 = vmatpush2.msra.mxu0 %v1312
        %1381 = vmatprep.subr.mxu0 0.0
        %1382 = vmatpush2.msra.mxu0 %v1311
        %1383 = vmatprep.subr.mxu0 0.0
        %1384 = vmatpush2.msra.mxu0 %v1310
        %1385 = vmatprep.subr.mxu0 0.0
        %1386 = vmatpush2.msra.mxu0 %v1309
        %1387 = vmatprep.mubr.f32.mxu0 %v1318
        %1388 = vmatmul.mubr.f32.gmra.mxu0 %v1289
        %v1389 = vpop.f32.mrf.mxu0
        %v1390 = vadd.f32 0.0, %v1389
        %v1391 = vpop.f32.mrf.mxu0
        %1392 = vmatprep.mubr.f32.mxu0 %v1321
        %1393 = vmatmul.mubr.f32.gmra.mxu0 %v1291
        %v1394 = vpop.f32.mrf.mxu0
        %v1395 = vadd.f32 0.0, %v1394
        %v1396 = vpop.f32.mrf.mxu0
        %1397 = vdwg.mxu0
        %v1398 = vmul.f32 %v1390, %v1390
        %v1399 = vmul.f32 %v1395, %v1395
        %v1400 = vld [vmem:[#allocation13] sm:$0xff]
        %v1401 = vld [vmem:[#allocation13 + $0x8] sm:$0xff]
        %v1402 = vld [vmem:[#allocation13 + $0x10] sm:$0xff]
        %v1403 = vld [vmem:[#allocation13 + $0x18] sm:$0xff]
        %v1404 = vld [vmem:[#allocation13 + $0x20] sm:$0xff]
        %v1405 = vld [vmem:[#allocation13 + $0x28] sm:$0xff]
        %v1406 = vld [vmem:[#allocation13 + $0x30] sm:$0xff]
        %v1407 = vld [vmem:[#allocation13 + $0x38] sm:$0xff]
        %v1408 = vld [vmem:[#allocation13 + $0x40] sm:$0xff]
        %v1409 = vld [vmem:[#allocation13 + $0x48] sm:$0xff]
        %v1410 = vld [vmem:[#allocation13 + $0x50] sm:$0xff]
        %v1411 = vld [vmem:[#allocation13 + $0x58] sm:$0xff]
        %v1412 = vld [vmem:[#allocation13 + $0x60] sm:$0xff]
        %v1413 = vld [vmem:[#allocation13 + $0x68] sm:$0xff]
        %v1414 = vld [vmem:[#allocation13 + $0x70] sm:$0xff]
        %v1415 = vld [vmem:[#allocation13 + $0x78] sm:$0xff]
        %1416 = vmatprep.subr.mxu0 0.0
        %1417 = vmatpush1.msra.mxu0 %v1415
        %1418 = vmatprep.subr.mxu0 0.0
        %1419 = vmatpush1.msra.mxu0 %v1414
        %1420 = vmatprep.subr.mxu0 0.0
        %1421 = vmatpush1.msra.mxu0 %v1413
        %1422 = vmatprep.subr.mxu0 0.0
        %1423 = vmatpush1.msra.mxu0 %v1412
        %1424 = vmatprep.subr.mxu0 0.0
        %1425 = vmatpush1.msra.mxu0 %v1411
        %1426 = vmatprep.subr.mxu0 0.0
        %1427 = vmatpush1.msra.mxu0 %v1410
        %1428 = vmatprep.subr.mxu0 0.0
        %1429 = vmatpush1.msra.mxu0 %v1409
        %1430 = vmatprep.subr.mxu0 0.0
        %1431 = vmatpush1.msra.mxu0 %v1408
        %1432 = vmatprep.subr.mxu0 0.0
        %1433 = vmatpush1.msra.mxu0 %v1407
        %1434 = vmatprep.subr.mxu0 0.0
        %1435 = vmatpush1.msra.mxu0 %v1406
        %1436 = vmatprep.subr.mxu0 0.0
        %1437 = vmatpush1.msra.mxu0 %v1405
        %1438 = vmatprep.subr.mxu0 0.0
        %1439 = vmatpush1.msra.mxu0 %v1404
        %1440 = vmatprep.subr.mxu0 0.0
        %1441 = vmatpush1.msra.mxu0 %v1403
        %1442 = vmatprep.subr.mxu0 0.0
        %1443 = vmatpush1.msra.mxu0 %v1402
        %1444 = vmatprep.subr.mxu0 0.0
        %1445 = vmatpush1.msra.mxu0 %v1401
        %1446 = vmatprep.subr.mxu0 0.0
        %1447 = vmatpush1.msra.mxu0 %v1400
        %1448 = vmatprep.subr.mxu0 0.0
        %1449 = vmatpush2.msra.mxu0 0.0
        %1450 = vmatprep.subr.mxu0 0.0
        %1451 = vmatpush2.msra.mxu0 0.0
        %1452 = vmatprep.subr.mxu0 0.0
        %1453 = vmatpush2.msra.mxu0 0.0
        %1454 = vmatprep.subr.mxu0 0.0
        %1455 = vmatpush2.msra.mxu0 0.0
        %1456 = vmatprep.subr.mxu0 0.0
        %1457 = vmatpush2.msra.mxu0 0.0
        %1458 = vmatprep.subr.mxu0 0.0
        %1459 = vmatpush2.msra.mxu0 0.0
        %1460 = vmatprep.subr.mxu0 0.0
        %1461 = vmatpush2.msra.mxu0 0.0
        %1462 = vmatprep.subr.mxu0 0.0
        %1463 = vmatpush2.msra.mxu0 0.0
        %1464 = vmatprep.subr.mxu0 0.0
        %1465 = vmatpush2.msra.mxu0 0.0
        %1466 = vmatprep.subr.mxu0 0.0
        %1467 = vmatpush2.msra.mxu0 0.0
        %1468 = vmatprep.subr.mxu0 0.0
        %1469 = vmatpush2.msra.mxu0 0.0
        %1470 = vmatprep.subr.mxu0 0.0
        %1471 = vmatpush2.msra.mxu0 0.0
        %1472 = vmatprep.subr.mxu0 0.0
        %1473 = vmatpush2.msra.mxu0 0.0
        %1474 = vmatprep.subr.mxu0 0.0
        %1475 = vmatpush2.msra.mxu0 0.0
        %1476 = vmatprep.subr.mxu0 0.0
        %1477 = vmatpush2.msra.mxu0 0.0
        %1478 = vmatprep.subr.mxu0 0.0
        %1479 = vmatpush2.msra.mxu0 0.0
        %1480 = vmatprep.mubr.f32.mxu0 0.0
        %1481 = vmatmul.mubr.f32.gmra.mxu0 %v1398
        %v1482 = vpop.f32.mrf.mxu0
        %v1483 = vadd.f32 1e-05, %v1482
        %v1484 = vpop.f32.mrf.mxu0
        %1485 = vmatprep.mubr.f32.mxu0 0.0
        %1486 = vmatmul.mubr.f32.gmra.mxu0 %v1399
        %v1487 = vpop.f32.mrf.mxu0
        %v1488 = vadd.f32 1e-05, %v1487
        %v1489 = vpop.f32.mrf.mxu0
        %1490 = vdwg.mxu0
        %v1491 = vrsqrt.pop %v1483
        %v1492 = vrsqrt.pop %v1488
        %v1493 = vmul.f32 %v1390, %v1491
        %v1494 = vmul.f32 %v1395, %v1492
        %v1495 = vld [vmem:[#allocation14] sm:$0x1]
        %v1497 = vlaneseq
        %v1498 = vshrl.u32 %v1497, 7
        %v1499 = vsub.s32 0, %v1498
        %v1500 = vrot.slane %v1495, %v1499
        %v1502 = vmul.f32 %v1493, %v1500
        %v1503 = vmul.f32 %v1494, %v1500
        %v1504 = vld [vmem:[#allocation16] sm:$0x1]
        %v1506 = vlaneseq
        %v1507 = vshrl.u32 %v1506, 7
        %v1508 = vsub.s32 0, %v1507
        %v1509 = vrot.slane %v1504, %v1508
        %v1511 = vadd.f32 %v1502, %v1509
        %v1512 = vadd.f32 %v1503, %v1509
        %v1513 = vmul.f32 %v1511, %v870
        %v1514 = vmul.f32 %v1512, %v871
        %v1515 = vld [vmem:[%s13] sm:$0xff]
        %v1516 = vld [vmem:[%s13 + $0x8] sm:$0xff]
        %v1517 = vld [vmem:[%s13 + $0x10] sm:$0xff]
        %v1518 = vld [vmem:[%s13 + $0x18] sm:$0xff]
        %v1519 = vld [vmem:[%s13 + $0x20] sm:$0xff]
        %v1520 = vld [vmem:[%s13 + $0x28] sm:$0xff]
        %v1521 = vld [vmem:[%s13 + $0x30] sm:$0xff]
        %v1522 = vld [vmem:[%s13 + $0x38] sm:$0xff]
        %v1523 = vld [vmem:[%s13 + $0x40] sm:$0xff]
        %v1524 = vld [vmem:[%s13 + $0x48] sm:$0xff]
        %v1525 = vld [vmem:[%s13 + $0x50] sm:$0xff]
        %v1526 = vld [vmem:[%s13 + $0x58] sm:$0xff]
        %v1527 = vld [vmem:[%s13 + $0x60] sm:$0xff]
        %v1528 = vld [vmem:[%s13 + $0x68] sm:$0xff]
        %v1529 = vld [vmem:[%s13 + $0x70] sm:$0xff]
        %v1530 = vld [vmem:[%s13 + $0x78] sm:$0xff]
        %v1531 = vld [vmem:[%s13 + $0x80] sm:$0xff]
        %v1532 = vld [vmem:[%s13 + $0x88] sm:$0xff]
        %v1533 = vld [vmem:[%s13 + $0x90] sm:$0xff]
        %v1534 = vld [vmem:[%s13 + $0x98] sm:$0xff]
        %v1535 = vld [vmem:[%s13 + $0xa0] sm:$0xff]
        %v1536 = vld [vmem:[%s13 + $0xa8] sm:$0xff]
        %v1537 = vld [vmem:[%s13 + $0xb0] sm:$0xff]
        %v1538 = vld [vmem:[%s13 + $0xb8] sm:$0xff]
        %v1539 = vld [vmem:[%s13 + $0xc0] sm:$0xff]
        %v1540 = vld [vmem:[%s13 + $0xc8] sm:$0xff]
        %v1541 = vld [vmem:[%s13 + $0xd0] sm:$0xff]
        %v1542 = vld [vmem:[%s13 + $0xd8] sm:$0xff]
        %v1543 = vld [vmem:[%s13 + $0xe0] sm:$0xff]
        %v1544 = vld [vmem:[%s13 + $0xe8] sm:$0xff]
        %v1545 = vld [vmem:[%s13 + $0xf0] sm:$0xff]
        %v1546 = vld [vmem:[%s13 + $0xf8] sm:$0xff]
        %v1547 = vld [vmem:[%s13 + $0x100] sm:$0xff]
        %v1548 = vld [vmem:[%s13 + $0x108] sm:$0xff]
        %v1549 = vld [vmem:[%s13 + $0x110] sm:$0xff]
        %v1550 = vld [vmem:[%s13 + $0x118] sm:$0xff]
        %v1551 = vld [vmem:[%s13 + $0x120] sm:$0xff]
        %v1552 = vld [vmem:[%s13 + $0x128] sm:$0xff]
        %v1553 = vld [vmem:[%s13 + $0x130] sm:$0xff]
        %v1554 = vld [vmem:[%s13 + $0x138] sm:$0xff]
        %v1555 = vld [vmem:[%s13 + $0x140] sm:$0xff]
        %v1556 = vld [vmem:[%s13 + $0x148] sm:$0xff]
        %v1557 = vld [vmem:[%s13 + $0x150] sm:$0xff]
        %v1558 = vld [vmem:[%s13 + $0x158] sm:$0xff]
        %v1559 = vld [vmem:[%s13 + $0x160] sm:$0xff]
        %v1560 = vld [vmem:[%s13 + $0x168] sm:$0xff]
        %v1561 = vld [vmem:[%s13 + $0x170] sm:$0xff]
        %v1562 = vld [vmem:[%s13 + $0x178] sm:$0xff]
        %v1563 = vld [vmem:[%s13 + $0x180] sm:$0xff]
        %v1564 = vld [vmem:[%s13 + $0x188] sm:$0xff]
        %v1565 = vld [vmem:[%s13 + $0x190] sm:$0xff]
        %v1566 = vld [vmem:[%s13 + $0x198] sm:$0xff]
        %v1567 = vld [vmem:[%s13 + $0x1a0] sm:$0xff]
        %v1568 = vld [vmem:[%s13 + $0x1a8] sm:$0xff]
        %v1569 = vld [vmem:[%s13 + $0x1b0] sm:$0xff]
        %v1570 = vld [vmem:[%s13 + $0x1b8] sm:$0xff]
        %v1571 = vld [vmem:[%s13 + $0x1c0] sm:$0xff]
        %v1572 = vld [vmem:[%s13 + $0x1c8] sm:$0xff]
        %v1573 = vld [vmem:[%s13 + $0x1d0] sm:$0xff]
        %v1574 = vld [vmem:[%s13 + $0x1d8] sm:$0xff]
        %v1575 = vld [vmem:[%s13 + $0x1e0] sm:$0xff]
        %v1576 = vld [vmem:[%s13 + $0x1e8] sm:$0xff]
        %v1577 = vld [vmem:[%s13 + $0x1f0] sm:$0xff]
        %v1578 = vld [vmem:[%s13 + $0x1f8] sm:$0xff]
        %v1579 = vld [vmem:[%s13 + $0x200] sm:$0xff]
        %v1580 = vld [vmem:[%s13 + $0x208] sm:$0xff]
        %v1581 = vld [vmem:[%s13 + $0x210] sm:$0xff]
        %v1582 = vld [vmem:[%s13 + $0x218] sm:$0xff]
        %v1583 = vld [vmem:[%s13 + $0x220] sm:$0xff]
        %v1584 = vld [vmem:[%s13 + $0x228] sm:$0xff]
        %v1585 = vld [vmem:[%s13 + $0x230] sm:$0xff]
        %v1586 = vld [vmem:[%s13 + $0x238] sm:$0xff]
        %v1587 = vld [vmem:[%s13 + $0x240] sm:$0xff]
        %v1588 = vld [vmem:[%s13 + $0x248] sm:$0xff]
        %v1589 = vld [vmem:[%s13 + $0x250] sm:$0xff]
        %v1590 = vld [vmem:[%s13 + $0x258] sm:$0xff]
        %v1591 = vld [vmem:[%s13 + $0x260] sm:$0xff]
        %v1592 = vld [vmem:[%s13 + $0x268] sm:$0xff]
        %v1593 = vld [vmem:[%s13 + $0x270] sm:$0xff]
        %v1594 = vld [vmem:[%s13 + $0x278] sm:$0xff]
        %v1595 = vld [vmem:[%s13 + $0x280] sm:$0xff]
        %v1596 = vld [vmem:[%s13 + $0x288] sm:$0xff]
        %v1597 = vld [vmem:[%s13 + $0x290] sm:$0xff]
        %v1598 = vld [vmem:[%s13 + $0x298] sm:$0xff]
        %v1599 = vld [vmem:[%s13 + $0x2a0] sm:$0xff]
        %v1600 = vld [vmem:[%s13 + $0x2a8] sm:$0xff]
        %v1601 = vld [vmem:[%s13 + $0x2b0] sm:$0xff]
        %v1602 = vld [vmem:[%s13 + $0x2b8] sm:$0xff]
        %v1603 = vld [vmem:[%s13 + $0x2c0] sm:$0xff]
        %v1604 = vld [vmem:[%s13 + $0x2c8] sm:$0xff]
        %v1605 = vld [vmem:[%s13 + $0x2d0] sm:$0xff]
        %v1606 = vld [vmem:[%s13 + $0x2d8] sm:$0xff]
        %v1607 = vld [vmem:[%s13 + $0x2e0] sm:$0xff]
        %v1608 = vld [vmem:[%s13 + $0x2e8] sm:$0xff]
        %v1609 = vld [vmem:[%s13 + $0x2f0] sm:$0xff]
        %v1610 = vld [vmem:[%s13 + $0x2f8] sm:$0xff]
        %v1611 = vld [vmem:[%s13 + $0x300] sm:$0xff]
        %v1612 = vld [vmem:[%s13 + $0x308] sm:$0xff]
        %v1613 = vld [vmem:[%s13 + $0x310] sm:$0xff]
        %v1614 = vld [vmem:[%s13 + $0x318] sm:$0xff]
        %v1615 = vld [vmem:[%s13 + $0x320] sm:$0xff]
        %v1616 = vld [vmem:[%s13 + $0x328] sm:$0xff]
        %v1617 = vld [vmem:[%s13 + $0x330] sm:$0xff]
        %v1618 = vld [vmem:[%s13 + $0x338] sm:$0xff]
        %v1619 = vld [vmem:[%s13 + $0x340] sm:$0xff]
        %v1620 = vld [vmem:[%s13 + $0x348] sm:$0xff]
        %v1621 = vld [vmem:[%s13 + $0x350] sm:$0xff]
        %v1622 = vld [vmem:[%s13 + $0x358] sm:$0xff]
        %v1623 = vld [vmem:[%s13 + $0x360] sm:$0xff]
        %v1624 = vld [vmem:[%s13 + $0x368] sm:$0xff]
        %v1625 = vld [vmem:[%s13 + $0x370] sm:$0xff]
        %v1626 = vld [vmem:[%s13 + $0x378] sm:$0xff]
        %v1627 = vld [vmem:[%s13 + $0x380] sm:$0xff]
        %v1628 = vld [vmem:[%s13 + $0x388] sm:$0xff]
        %v1629 = vld [vmem:[%s13 + $0x390] sm:$0xff]
        %v1630 = vld [vmem:[%s13 + $0x398] sm:$0xff]
        %v1631 = vld [vmem:[%s13 + $0x3a0] sm:$0xff]
        %v1632 = vld [vmem:[%s13 + $0x3a8] sm:$0xff]
        %v1633 = vld [vmem:[%s13 + $0x3b0] sm:$0xff]
        %v1634 = vld [vmem:[%s13 + $0x3b8] sm:$0xff]
        %v1635 = vld [vmem:[%s13 + $0x3c0] sm:$0xff]
        %v1636 = vld [vmem:[%s13 + $0x3c8] sm:$0xff]
        %v1637 = vld [vmem:[%s13 + $0x3d0] sm:$0xff]
        %v1638 = vld [vmem:[%s13 + $0x3d8] sm:$0xff]
        %v1639 = vld [vmem:[%s13 + $0x3e0] sm:$0xff]
        %v1640 = vld [vmem:[%s13 + $0x3e8] sm:$0xff]
        %v1641 = vld [vmem:[%s13 + $0x3f0] sm:$0xff]
        %v1642 = vld [vmem:[%s13 + $0x3f8] sm:$0xff]
        %1643 = vmatprep.subr.mxu0 %v1636
        %1644 = vmatpush1.msra.mxu0 %v1635
        %1645 = vmatprep.subr.mxu0 %v1628
        %1646 = vmatpush1.msra.mxu0 %v1627
        %1647 = vmatprep.subr.mxu0 %v1620
        %1648 = vmatpush1.msra.mxu0 %v1619
        %1649 = vmatprep.subr.mxu0 %v1612
        %1650 = vmatpush1.msra.mxu0 %v1611
        %1651 = vmatprep.subr.mxu0 %v1604
        %1652 = vmatpush1.msra.mxu0 %v1603
        %1653 = vmatprep.subr.mxu0 %v1596
        %1654 = vmatpush1.msra.mxu0 %v1595
        %1655 = vmatprep.subr.mxu0 %v1588
        %1656 = vmatpush1.msra.mxu0 %v1587
        %1657 = vmatprep.subr.mxu0 %v1580
        %1658 = vmatpush1.msra.mxu0 %v1579
        %1659 = vmatprep.subr.mxu0 %v1572
        %1660 = vmatpush1.msra.mxu0 %v1571
        %1661 = vmatprep.subr.mxu0 %v1564
        %1662 = vmatpush1.msra.mxu0 %v1563
        %1663 = vmatprep.subr.mxu0 %v1556
        %1664 = vmatpush1.msra.mxu0 %v1555
        %1665 = vmatprep.subr.mxu0 %v1548
        %1666 = vmatpush1.msra.mxu0 %v1547
        %1667 = vmatprep.subr.mxu0 %v1540
        %1668 = vmatpush1.msra.mxu0 %v1539
        %1669 = vmatprep.subr.mxu0 %v1532
        %1670 = vmatpush1.msra.mxu0 %v1531
        %1671 = vmatprep.subr.mxu0 %v1524
        %1672 = vmatpush1.msra.mxu0 %v1523
        %1673 = vmatprep.subr.mxu0 %v1516
        %1674 = vmatpush1.msra.mxu0 %v1515
        %1675 = vmatprep.subr.mxu0 0.0
        %1676 = vmatpush2.msra.mxu0 0.0
        %1677 = vmatprep.subr.mxu0 0.0
        %1678 = vmatpush2.msra.mxu0 0.0
        %1679 = vmatprep.subr.mxu0 0.0
        %1680 = vmatpush2.msra.mxu0 0.0
        %1681 = vmatprep.subr.mxu0 0.0
        %1682 = vmatpush2.msra.mxu0 0.0
        %1683 = vmatprep.subr.mxu0 0.0
        %1684 = vmatpush2.msra.mxu0 0.0
        %1685 = vmatprep.subr.mxu0 0.0
        %1686 = vmatpush2.msra.mxu0 0.0
        %1687 = vmatprep.subr.mxu0 0.0
        %1688 = vmatpush2.msra.mxu0 0.0
        %1689 = vmatprep.subr.mxu0 0.0
        %1690 = vmatpush2.msra.mxu0 0.0
        %1691 = vmatprep.subr.mxu0 0.0
        %1692 = vmatpush2.msra.mxu0 0.0
        %1693 = vmatprep.subr.mxu0 0.0
        %1694 = vmatpush2.msra.mxu0 0.0
        %1695 = vmatprep.subr.mxu0 0.0
        %1696 = vmatpush2.msra.mxu0 0.0
        %1697 = vmatprep.subr.mxu0 0.0
        %1698 = vmatpush2.msra.mxu0 0.0
        %1699 = vmatprep.subr.mxu0 0.0
        %1700 = vmatpush2.msra.mxu0 0.0
        %1701 = vmatprep.subr.mxu0 0.0
        %1702 = vmatpush2.msra.mxu0 0.0
        %1703 = vmatprep.subr.mxu0 0.0
        %1704 = vmatpush2.msra.mxu0 0.0
        %1705 = vmatprep.subr.mxu0 0.0
        %1706 = vmatpush2.msra.mxu0 0.0
        %1707 = vmatprep.mubr.f32.mxu0 0.0
        %1708 = vmatmul.mubr.f32.gmra.mxu0 %v1511
        %v1709 = vpop.f32.mrf.mxu0
        %v1710 = vadd.f32 0.0, %v1709
        %v1711 = vpop.f32.mrf.mxu0
        %v1712 = vadd.f32 0.0, %v1711
        %1713 = vmatprep.mubr.f32.mxu0 0.0
        %1714 = vmatmul.mubr.f32.gmra.mxu0 %v1512
        %v1715 = vpop.f32.mrf.mxu0
        %v1716 = vadd.f32 0.0, %v1715
        %v1717 = vpop.f32.mrf.mxu0
        %v1718 = vadd.f32 0.0, %v1717
        %1719 = vdwg.mxu0
        %1720 = vmatprep.subr.mxu0 %v1638
        %1721 = vmatpush1.msra.mxu0 %v1637
        %1722 = vmatprep.subr.mxu0 %v1630
        %1723 = vmatpush1.msra.mxu0 %v1629
        %1724 = vmatprep.subr.mxu0 %v1622
        %1725 = vmatpush1.msra.mxu0 %v1621
        %1726 = vmatprep.subr.mxu0 %v1614
        %1727 = vmatpush1.msra.mxu0 %v1613
        %1728 = vmatprep.subr.mxu0 %v1606
        %1729 = vmatpush1.msra.mxu0 %v1605
        %1730 = vmatprep.subr.mxu0 %v1598
        %1731 = vmatpush1.msra.mxu0 %v1597
        %1732 = vmatprep.subr.mxu0 %v1590
        %1733 = vmatpush1.msra.mxu0 %v1589
        %1734 = vmatprep.subr.mxu0 %v1582
        %1735 = vmatpush1.msra.mxu0 %v1581
        %1736 = vmatprep.subr.mxu0 %v1574
        %1737 = vmatpush1.msra.mxu0 %v1573
        %1738 = vmatprep.subr.mxu0 %v1566
        %1739 = vmatpush1.msra.mxu0 %v1565
        %1740 = vmatprep.subr.mxu0 %v1558
        %1741 = vmatpush1.msra.mxu0 %v1557
        %1742 = vmatprep.subr.mxu0 %v1550
        %1743 = vmatpush1.msra.mxu0 %v1549
        %1744 = vmatprep.subr.mxu0 %v1542
        %1745 = vmatpush1.msra.mxu0 %v1541
        %1746 = vmatprep.subr.mxu0 %v1534
        %1747 = vmatpush1.msra.mxu0 %v1533
        %1748 = vmatprep.subr.mxu0 %v1526
        %1749 = vmatpush1.msra.mxu0 %v1525
        %1750 = vmatprep.subr.mxu0 %v1518
        %1751 = vmatpush1.msra.mxu0 %v1517
        %1752 = vmatprep.subr.mxu0 0.0
        %1753 = vmatpush2.msra.mxu0 0.0
        %1754 = vmatprep.subr.mxu0 0.0
        %1755 = vmatpush2.msra.mxu0 0.0
        %1756 = vmatprep.subr.mxu0 0.0
        %1757 = vmatpush2.msra.mxu0 0.0
        %1758 = vmatprep.subr.mxu0 0.0
        %1759 = vmatpush2.msra.mxu0 0.0
        %1760 = vmatprep.subr.mxu0 0.0
        %1761 = vmatpush2.msra.mxu0 0.0
        %1762 = vmatprep.subr.mxu0 0.0
        %1763 = vmatpush2.msra.mxu0 0.0
        %1764 = vmatprep.subr.mxu0 0.0
        %1765 = vmatpush2.msra.mxu0 0.0
        %1766 = vmatprep.subr.mxu0 0.0
        %1767 = vmatpush2.msra.mxu0 0.0
        %1768 = vmatprep.subr.mxu0 0.0
        %1769 = vmatpush2.msra.mxu0 0.0
        %1770 = vmatprep.subr.mxu0 0.0
        %1771 = vmatpush2.msra.mxu0 0.0
        %1772 = vmatprep.subr.mxu0 0.0
        %1773 = vmatpush2.msra.mxu0 0.0
        %1774 = vmatprep.subr.mxu0 0.0
        %1775 = vmatpush2.msra.mxu0 0.0
        %1776 = vmatprep.subr.mxu0 0.0
        %1777 = vmatpush2.msra.mxu0 0.0
        %1778 = vmatprep.subr.mxu0 0.0
        %1779 = vmatpush2.msra.mxu0 0.0
        %1780 = vmatprep.subr.mxu0 0.0
        %1781 = vmatpush2.msra.mxu0 0.0
        %1782 = vmatprep.subr.mxu0 0.0
        %1783 = vmatpush2.msra.mxu0 0.0
        %1784 = vmatprep.mubr.f32.mxu0 0.0
        %1785 = vmatmul.mubr.f32.gmra.mxu0 %v1511
        %v1786 = vpop.f32.mrf.mxu0
        %v1787 = vadd.f32 0.0, %v1786
        %v1788 = vpop.f32.mrf.mxu0
        %v1789 = vadd.f32 0.0, %v1788
        %1790 = vmatprep.mubr.f32.mxu0 0.0
        %1791 = vmatmul.mubr.f32.gmra.mxu0 %v1512
        %v1792 = vpop.f32.mrf.mxu0
        %v1793 = vadd.f32 0.0, %v1792
        %v1794 = vpop.f32.mrf.mxu0
        %v1795 = vadd.f32 0.0, %v1794
        %1796 = vdwg.mxu0
        %1797 = vmatprep.subr.mxu0 %v1640
        %1798 = vmatpush1.msra.mxu0 %v1639
        %1799 = vmatprep.subr.mxu0 %v1632
        %1800 = vmatpush1.msra.mxu0 %v1631
        %1801 = vmatprep.subr.mxu0 %v1624
        %1802 = vmatpush1.msra.mxu0 %v1623
        %1803 = vmatprep.subr.mxu0 %v1616
        %1804 = vmatpush1.msra.mxu0 %v1615
        %1805 = vmatprep.subr.mxu0 %v1608
        %1806 = vmatpush1.msra.mxu0 %v1607
        %1807 = vmatprep.subr.mxu0 %v1600
        %1808 = vmatpush1.msra.mxu0 %v1599
        %1809 = vmatprep.subr.mxu0 %v1592
        %1810 = vmatpush1.msra.mxu0 %v1591
        %1811 = vmatprep.subr.mxu0 %v1584
        %1812 = vmatpush1.msra.mxu0 %v1583
        %1813 = vmatprep.subr.mxu0 %v1576
        %1814 = vmatpush1.msra.mxu0 %v1575
        %1815 = vmatprep.subr.mxu0 %v1568
        %1816 = vmatpush1.msra.mxu0 %v1567
        %1817 = vmatprep.subr.mxu0 %v1560
        %1818 = vmatpush1.msra.mxu0 %v1559
        %1819 = vmatprep.subr.mxu0 %v1552
        %1820 = vmatpush1.msra.mxu0 %v1551
        %1821 = vmatprep.subr.mxu0 %v1544
        %1822 = vmatpush1.msra.mxu0 %v1543
        %1823 = vmatprep.subr.mxu0 %v1536
        %1824 = vmatpush1.msra.mxu0 %v1535
        %1825 = vmatprep.subr.mxu0 %v1528
        %1826 = vmatpush1.msra.mxu0 %v1527
        %1827 = vmatprep.subr.mxu0 %v1520
        %1828 = vmatpush1.msra.mxu0 %v1519
        %1829 = vmatprep.subr.mxu0 0.0
        %1830 = vmatpush2.msra.mxu0 0.0
        %1831 = vmatprep.subr.mxu0 0.0
        %1832 = vmatpush2.msra.mxu0 0.0
        %1833 = vmatprep.subr.mxu0 0.0
        %1834 = vmatpush2.msra.mxu0 0.0
        %1835 = vmatprep.subr.mxu0 0.0
        %1836 = vmatpush2.msra.mxu0 0.0
        %1837 = vmatprep.subr.mxu0 0.0
        %1838 = vmatpush2.msra.mxu0 0.0
        %1839 = vmatprep.subr.mxu0 0.0
        %1840 = vmatpush2.msra.mxu0 0.0
        %1841 = vmatprep.subr.mxu0 0.0
        %1842 = vmatpush2.msra.mxu0 0.0
        %1843 = vmatprep.subr.mxu0 0.0
        %1844 = vmatpush2.msra.mxu0 0.0
        %1845 = vmatprep.subr.mxu0 0.0
        %1846 = vmatpush2.msra.mxu0 0.0
        %1847 = vmatprep.subr.mxu0 0.0
        %1848 = vmatpush2.msra.mxu0 0.0
        %1849 = vmatprep.subr.mxu0 0.0
        %1850 = vmatpush2.msra.mxu0 0.0
        %1851 = vmatprep.subr.mxu0 0.0
        %1852 = vmatpush2.msra.mxu0 0.0
        %1853 = vmatprep.subr.mxu0 0.0
        %1854 = vmatpush2.msra.mxu0 0.0
        %1855 = vmatprep.subr.mxu0 0.0
        %1856 = vmatpush2.msra.mxu0 0.0
        %1857 = vmatprep.subr.mxu0 0.0
        %1858 = vmatpush2.msra.mxu0 0.0
        %1859 = vmatprep.subr.mxu0 0.0
        %1860 = vmatpush2.msra.mxu0 0.0
        %1861 = vmatprep.mubr.f32.mxu0 0.0
        %1862 = vmatmul.mubr.f32.gmra.mxu0 %v1511
        %v1863 = vpop.f32.mrf.mxu0
        %v1864 = vadd.f32 0.0, %v1863
        %v1865 = vpop.f32.mrf.mxu0
        %v1866 = vadd.f32 0.0, %v1865
        %1867 = vmatprep.mubr.f32.mxu0 0.0
        %1868 = vmatmul.mubr.f32.gmra.mxu0 %v1512
        %v1869 = vpop.f32.mrf.mxu0
        %v1870 = vadd.f32 0.0, %v1869
        %v1871 = vpop.f32.mrf.mxu0
        %v1872 = vadd.f32 0.0, %v1871
        %1873 = vdwg.mxu0
        %1874 = vmatprep.subr.mxu0 %v1642
        %1875 = vmatpush1.msra.mxu0 %v1641
        %1876 = vmatprep.subr.mxu0 %v1634
        %1877 = vmatpush1.msra.mxu0 %v1633
        %1878 = vmatprep.subr.mxu0 %v1626
        %1879 = vmatpush1.msra.mxu0 %v1625
        %1880 = vmatprep.subr.mxu0 %v1618
        %1881 = vmatpush1.msra.mxu0 %v1617
        %1882 = vmatprep.subr.mxu0 %v1610
        %1883 = vmatpush1.msra.mxu0 %v1609
        %1884 = vmatprep.subr.mxu0 %v1602
        %1885 = vmatpush1.msra.mxu0 %v1601
        %1886 = vmatprep.subr.mxu0 %v1594
        %1887 = vmatpush1.msra.mxu0 %v1593
        %1888 = vmatprep.subr.mxu0 %v1586
        %1889 = vmatpush1.msra.mxu0 %v1585
        %1890 = vmatprep.subr.mxu0 %v1578
        %1891 = vmatpush1.msra.mxu0 %v1577
        %1892 = vmatprep.subr.mxu0 %v1570
        %1893 = vmatpush1.msra.mxu0 %v1569
        %1894 = vmatprep.subr.mxu0 %v1562
        %1895 = vmatpush1.msra.mxu0 %v1561
        %1896 = vmatprep.subr.mxu0 %v1554
        %1897 = vmatpush1.msra.mxu0 %v1553
        %1898 = vmatprep.subr.mxu0 %v1546
        %1899 = vmatpush1.msra.mxu0 %v1545
        %1900 = vmatprep.subr.mxu0 %v1538
        %1901 = vmatpush1.msra.mxu0 %v1537
        %1902 = vmatprep.subr.mxu0 %v1530
        %1903 = vmatpush1.msra.mxu0 %v1529
        %1904 = vmatprep.subr.mxu0 %v1522
        %1905 = vmatpush1.msra.mxu0 %v1521
        %1906 = vmatprep.subr.mxu0 0.0
        %1907 = vmatpush2.msra.mxu0 0.0
        %1908 = vmatprep.subr.mxu0 0.0
        %1909 = vmatpush2.msra.mxu0 0.0
        %1910 = vmatprep.subr.mxu0 0.0
        %1911 = vmatpush2.msra.mxu0 0.0
        %1912 = vmatprep.subr.mxu0 0.0
        %1913 = vmatpush2.msra.mxu0 0.0
        %1914 = vmatprep.subr.mxu0 0.0
        %1915 = vmatpush2.msra.mxu0 0.0
        %1916 = vmatprep.subr.mxu0 0.0
        %1917 = vmatpush2.msra.mxu0 0.0
        %1918 = vmatprep.subr.mxu0 0.0
        %1919 = vmatpush2.msra.mxu0 0.0
        %1920 = vmatprep.subr.mxu0 0.0
        %1921 = vmatpush2.msra.mxu0 0.0
        %1922 = vmatprep.subr.mxu0 0.0
        %1923 = vmatpush2.msra.mxu0 0.0
        %1924 = vmatprep.subr.mxu0 0.0
        %1925 = vmatpush2.msra.mxu0 0.0
        %1926 = vmatprep.subr.mxu0 0.0
        %1927 = vmatpush2.msra.mxu0 0.0
        %1928 = vmatprep.subr.mxu0 0.0
        %1929 = vmatpush2.msra.mxu0 0.0
        %1930 = vmatprep.subr.mxu0 0.0
        %1931 = vmatpush2.msra.mxu0 0.0
        %1932 = vmatprep.subr.mxu0 0.0
        %1933 = vmatpush2.msra.mxu0 0.0
        %1934 = vmatprep.subr.mxu0 0.0
        %1935 = vmatpush2.msra.mxu0 0.0
        %1936 = vmatprep.subr.mxu0 0.0
        %1937 = vmatpush2.msra.mxu0 0.0
        %1938 = vmatprep.mubr.f32.mxu0 0.0
        %1939 = vmatmul.mubr.f32.gmra.mxu0 %v1511
        %v1940 = vpop.f32.mrf.mxu0
        %v1941 = vadd.f32 0.0, %v1940
        %v1942 = vpop.f32.mrf.mxu0
        %v1943 = vadd.f32 0.0, %v1942
        %1944 = vmatprep.mubr.f32.mxu0 0.0
        %1945 = vmatmul.mubr.f32.gmra.mxu0 %v1512
        %v1946 = vpop.f32.mrf.mxu0
        %v1947 = vadd.f32 0.0, %v1946
        %v1948 = vpop.f32.mrf.mxu0
        %v1949 = vadd.f32 0.0, %v1948
        %1950 = vdwg.mxu0
        %v1951 = vld [vmem:[%s14] sm:$0xff]
        %v1952 = vld [vmem:[%s14 + $0x8] sm:$0xff]
        %v1953 = vld [vmem:[%s14 + $0x10] sm:$0xff]
        %v1954 = vld [vmem:[%s14 + $0x18] sm:$0xff]
        %v1955 = vld [vmem:[%s14 + $0x20] sm:$0xff]
        %v1956 = vld [vmem:[%s14 + $0x28] sm:$0xff]
        %v1957 = vld [vmem:[%s14 + $0x30] sm:$0xff]
        %v1958 = vld [vmem:[%s14 + $0x38] sm:$0xff]
        %v1959 = vld [vmem:[%s14 + $0x40] sm:$0xff]
        %v1960 = vld [vmem:[%s14 + $0x48] sm:$0xff]
        %v1961 = vld [vmem:[%s14 + $0x50] sm:$0xff]
        %v1962 = vld [vmem:[%s14 + $0x58] sm:$0xff]
        %v1963 = vld [vmem:[%s14 + $0x60] sm:$0xff]
        %v1964 = vld [vmem:[%s14 + $0x68] sm:$0xff]
        %v1965 = vld [vmem:[%s14 + $0x70] sm:$0xff]
        %v1966 = vld [vmem:[%s14 + $0x78] sm:$0xff]
        %v1967 = vmul.f32 %v1511, %v1710
        %v1968 = vmul.f32 %v1511, %v1712
        %v1969 = vmul.f32 %v1511, %v1787
        %v1970 = vmul.f32 %v1511, %v1789
        %v1971 = vmul.f32 %v1511, %v1864
        %v1972 = vmul.f32 %v1511, %v1866
        %v1973 = vmul.f32 %v1511, %v1941
        %v1974 = vmul.f32 %v1511, %v1943
        %v1975 = vmul.f32 %v1512, %v1716
        %v1976 = vmul.f32 %v1512, %v1718
        %v1977 = vmul.f32 %v1512, %v1793
        %v1978 = vmul.f32 %v1512, %v1795
        %v1979 = vmul.f32 %v1512, %v1870
        %v1980 = vmul.f32 %v1512, %v1872
        %v1981 = vmul.f32 %v1512, %v1947
        %v1982 = vmul.f32 %v1512, %v1949
        %v1983 = vld [vmem:[%s15] sm:$0xff]
        %v1984 = vld [vmem:[%s15 + $0x8] sm:$0xff]
        %v1985 = vld [vmem:[%s15 + $0x10] sm:$0xff]
        %v1986 = vld [vmem:[%s15 + $0x18] sm:$0xff]
        %v1987 = vld [vmem:[%s15 + $0x20] sm:$0xff]
        %v1988 = vld [vmem:[%s15 + $0x28] sm:$0xff]
        %v1989 = vld [vmem:[%s15 + $0x30] sm:$0xff]
        %v1990 = vld [vmem:[%s15 + $0x38] sm:$0xff]
        %v1991 = vld [vmem:[%s15 + $0x40] sm:$0xff]
        %v1992 = vld [vmem:[%s15 + $0x48] sm:$0xff]
        %v1993 = vld [vmem:[%s15 + $0x50] sm:$0xff]
        %v1994 = vld [vmem:[%s15 + $0x58] sm:$0xff]
        %v1995 = vld [vmem:[%s15 + $0x60] sm:$0xff]
        %v1996 = vld [vmem:[%s15 + $0x68] sm:$0xff]
        %v1997 = vld [vmem:[%s15 + $0x70] sm:$0xff]
        %v1998 = vld [vmem:[%s15 + $0x78] sm:$0xff]
        %v1999 = vld [vmem:[%s15 + $0x80] sm:$0xff]
        %v2000 = vld [vmem:[%s15 + $0x88] sm:$0xff]
        %v2001 = vld [vmem:[%s15 + $0x90] sm:$0xff]
        %v2002 = vld [vmem:[%s15 + $0x98] sm:$0xff]
        %v2003 = vld [vmem:[%s15 + $0xa0] sm:$0xff]
        %v2004 = vld [vmem:[%s15 + $0xa8] sm:$0xff]
        %v2005 = vld [vmem:[%s15 + $0xb0] sm:$0xff]
        %v2006 = vld [vmem:[%s15 + $0xb8] sm:$0xff]
        %v2007 = vld [vmem:[%s15 + $0xc0] sm:$0xff]
        %v2008 = vld [vmem:[%s15 + $0xc8] sm:$0xff]
        %v2009 = vld [vmem:[%s15 + $0xd0] sm:$0xff]
        %v2010 = vld [vmem:[%s15 + $0xd8] sm:$0xff]
        %v2011 = vld [vmem:[%s15 + $0xe0] sm:$0xff]
        %v2012 = vld [vmem:[%s15 + $0xe8] sm:$0xff]
        %v2013 = vld [vmem:[%s15 + $0xf0] sm:$0xff]
        %v2014 = vld [vmem:[%s15 + $0xf8] sm:$0xff]
        %v2015 = vld [vmem:[%s15 + $0x100] sm:$0xff]
        %v2016 = vld [vmem:[%s15 + $0x108] sm:$0xff]
        %v2017 = vld [vmem:[%s15 + $0x110] sm:$0xff]
        %v2018 = vld [vmem:[%s15 + $0x118] sm:$0xff]
        %v2019 = vld [vmem:[%s15 + $0x120] sm:$0xff]
        %v2020 = vld [vmem:[%s15 + $0x128] sm:$0xff]
        %v2021 = vld [vmem:[%s15 + $0x130] sm:$0xff]
        %v2022 = vld [vmem:[%s15 + $0x138] sm:$0xff]
        %v2023 = vld [vmem:[%s15 + $0x140] sm:$0xff]
        %v2024 = vld [vmem:[%s15 + $0x148] sm:$0xff]
        %v2025 = vld [vmem:[%s15 + $0x150] sm:$0xff]
        %v2026 = vld [vmem:[%s15 + $0x158] sm:$0xff]
        %v2027 = vld [vmem:[%s15 + $0x160] sm:$0xff]
        %v2028 = vld [vmem:[%s15 + $0x168] sm:$0xff]
        %v2029 = vld [vmem:[%s15 + $0x170] sm:$0xff]
        %v2030 = vld [vmem:[%s15 + $0x178] sm:$0xff]
        %v2031 = vld [vmem:[%s15 + $0x180] sm:$0xff]
        %v2032 = vld [vmem:[%s15 + $0x188] sm:$0xff]
        %v2033 = vld [vmem:[%s15 + $0x190] sm:$0xff]
        %v2034 = vld [vmem:[%s15 + $0x198] sm:$0xff]
        %v2035 = vld [vmem:[%s15 + $0x1a0] sm:$0xff]
        %v2036 = vld [vmem:[%s15 + $0x1a8] sm:$0xff]
        %v2037 = vld [vmem:[%s15 + $0x1b0] sm:$0xff]
        %v2038 = vld [vmem:[%s15 + $0x1b8] sm:$0xff]
        %v2039 = vld [vmem:[%s15 + $0x1c0] sm:$0xff]
        %v2040 = vld [vmem:[%s15 + $0x1c8] sm:$0xff]
        %v2041 = vld [vmem:[%s15 + $0x1d0] sm:$0xff]
        %v2042 = vld [vmem:[%s15 + $0x1d8] sm:$0xff]
        %v2043 = vld [vmem:[%s15 + $0x1e0] sm:$0xff]
        %v2044 = vld [vmem:[%s15 + $0x1e8] sm:$0xff]
        %v2045 = vld [vmem:[%s15 + $0x1f0] sm:$0xff]
        %v2046 = vld [vmem:[%s15 + $0x1f8] sm:$0xff]
        %v2047 = vld [vmem:[%s15 + $0x200] sm:$0xff]
        %v2048 = vld [vmem:[%s15 + $0x208] sm:$0xff]
        %v2049 = vld [vmem:[%s15 + $0x210] sm:$0xff]
        %v2050 = vld [vmem:[%s15 + $0x218] sm:$0xff]
        %v2051 = vld [vmem:[%s15 + $0x220] sm:$0xff]
        %v2052 = vld [vmem:[%s15 + $0x228] sm:$0xff]
        %v2053 = vld [vmem:[%s15 + $0x230] sm:$0xff]
        %v2054 = vld [vmem:[%s15 + $0x238] sm:$0xff]
        %v2055 = vld [vmem:[%s15 + $0x240] sm:$0xff]
        %v2056 = vld [vmem:[%s15 + $0x248] sm:$0xff]
        %v2057 = vld [vmem:[%s15 + $0x250] sm:$0xff]
        %v2058 = vld [vmem:[%s15 + $0x258] sm:$0xff]
        %v2059 = vld [vmem:[%s15 + $0x260] sm:$0xff]
        %v2060 = vld [vmem:[%s15 + $0x268] sm:$0xff]
        %v2061 = vld [vmem:[%s15 + $0x270] sm:$0xff]
        %v2062 = vld [vmem:[%s15 + $0x278] sm:$0xff]
        %v2063 = vld [vmem:[%s15 + $0x280] sm:$0xff]
        %v2064 = vld [vmem:[%s15 + $0x288] sm:$0xff]
        %v2065 = vld [vmem:[%s15 + $0x290] sm:$0xff]
        %v2066 = vld [vmem:[%s15 + $0x298] sm:$0xff]
        %v2067 = vld [vmem:[%s15 + $0x2a0] sm:$0xff]
        %v2068 = vld [vmem:[%s15 + $0x2a8] sm:$0xff]
        %v2069 = vld [vmem:[%s15 + $0x2b0] sm:$0xff]
        %v2070 = vld [vmem:[%s15 + $0x2b8] sm:$0xff]
        %v2071 = vld [vmem:[%s15 + $0x2c0] sm:$0xff]
        %v2072 = vld [vmem:[%s15 + $0x2c8] sm:$0xff]
        %v2073 = vld [vmem:[%s15 + $0x2d0] sm:$0xff]
        %v2074 = vld [vmem:[%s15 + $0x2d8] sm:$0xff]
        %v2075 = vld [vmem:[%s15 + $0x2e0] sm:$0xff]
        %v2076 = vld [vmem:[%s15 + $0x2e8] sm:$0xff]
        %v2077 = vld [vmem:[%s15 + $0x2f0] sm:$0xff]
        %v2078 = vld [vmem:[%s15 + $0x2f8] sm:$0xff]
        %v2079 = vld [vmem:[%s15 + $0x300] sm:$0xff]
        %v2080 = vld [vmem:[%s15 + $0x308] sm:$0xff]
        %v2081 = vld [vmem:[%s15 + $0x310] sm:$0xff]
        %v2082 = vld [vmem:[%s15 + $0x318] sm:$0xff]
        %v2083 = vld [vmem:[%s15 + $0x320] sm:$0xff]
        %v2084 = vld [vmem:[%s15 + $0x328] sm:$0xff]
        %v2085 = vld [vmem:[%s15 + $0x330] sm:$0xff]
        %v2086 = vld [vmem:[%s15 + $0x338] sm:$0xff]
        %v2087 = vld [vmem:[%s15 + $0x340] sm:$0xff]
        %v2088 = vld [vmem:[%s15 + $0x348] sm:$0xff]
        %v2089 = vld [vmem:[%s15 + $0x350] sm:$0xff]
        %v2090 = vld [vmem:[%s15 + $0x358] sm:$0xff]
        %v2091 = vld [vmem:[%s15 + $0x360] sm:$0xff]
        %v2092 = vld [vmem:[%s15 + $0x368] sm:$0xff]
        %v2093 = vld [vmem:[%s15 + $0x370] sm:$0xff]
        %v2094 = vld [vmem:[%s15 + $0x378] sm:$0xff]
        %v2095 = vld [vmem:[%s15 + $0x380] sm:$0xff]
        %v2096 = vld [vmem:[%s15 + $0x388] sm:$0xff]
        %v2097 = vld [vmem:[%s15 + $0x390] sm:$0xff]
        %v2098 = vld [vmem:[%s15 + $0x398] sm:$0xff]
        %v2099 = vld [vmem:[%s15 + $0x3a0] sm:$0xff]
        %v2100 = vld [vmem:[%s15 + $0x3a8] sm:$0xff]
        %v2101 = vld [vmem:[%s15 + $0x3b0] sm:$0xff]
        %v2102 = vld [vmem:[%s15 + $0x3b8] sm:$0xff]
        %v2103 = vld [vmem:[%s15 + $0x3c0] sm:$0xff]
        %v2104 = vld [vmem:[%s15 + $0x3c8] sm:$0xff]
        %v2105 = vld [vmem:[%s15 + $0x3d0] sm:$0xff]
        %v2106 = vld [vmem:[%s15 + $0x3d8] sm:$0xff]
        %v2107 = vld [vmem:[%s15 + $0x3e0] sm:$0xff]
        %v2108 = vld [vmem:[%s15 + $0x3e8] sm:$0xff]
        %v2109 = vld [vmem:[%s15 + $0x3f0] sm:$0xff]
        %v2110 = vld [vmem:[%s15 + $0x3f8] sm:$0xff]
        %2111 = vmatprep.subr.mxu0 0.0
        %2112 = vmatpush1.msra.mxu0 %v1998
        %2113 = vmatprep.subr.mxu0 0.0
        %2114 = vmatpush1.msra.mxu0 %v1997
        %2115 = vmatprep.subr.mxu0 0.0
        %2116 = vmatpush1.msra.mxu0 %v1996
        %2117 = vmatprep.subr.mxu0 0.0
        %2118 = vmatpush1.msra.mxu0 %v1995
        %2119 = vmatprep.subr.mxu0 0.0
        %2120 = vmatpush1.msra.mxu0 %v1994
        %2121 = vmatprep.subr.mxu0 0.0
        %2122 = vmatpush1.msra.mxu0 %v1993
        %2123 = vmatprep.subr.mxu0 0.0
        %2124 = vmatpush1.msra.mxu0 %v1992
        %2125 = vmatprep.subr.mxu0 0.0
        %2126 = vmatpush1.msra.mxu0 %v1991
        %2127 = vmatprep.subr.mxu0 0.0
        %2128 = vmatpush1.msra.mxu0 %v1990
        %2129 = vmatprep.subr.mxu0 0.0
        %2130 = vmatpush1.msra.mxu0 %v1989
        %2131 = vmatprep.subr.mxu0 0.0
        %2132 = vmatpush1.msra.mxu0 %v1988
        %2133 = vmatprep.subr.mxu0 0.0
        %2134 = vmatpush1.msra.mxu0 %v1987
        %2135 = vmatprep.subr.mxu0 0.0
        %2136 = vmatpush1.msra.mxu0 %v1986
        %2137 = vmatprep.subr.mxu0 0.0
        %2138 = vmatpush1.msra.mxu0 %v1985
        %2139 = vmatprep.subr.mxu0 0.0
        %2140 = vmatpush1.msra.mxu0 %v1984
        %2141 = vmatprep.subr.mxu0 0.0
        %2142 = vmatpush1.msra.mxu0 %v1983
        %2143 = vmatprep.subr.mxu0 0.0
        %2144 = vmatpush2.msra.mxu0 %v2014
        %2145 = vmatprep.subr.mxu0 0.0
        %2146 = vmatpush2.msra.mxu0 %v2013
        %2147 = vmatprep.subr.mxu0 0.0
        %2148 = vmatpush2.msra.mxu0 %v2012
        %2149 = vmatprep.subr.mxu0 0.0
        %2150 = vmatpush2.msra.mxu0 %v2011
        %2151 = vmatprep.subr.mxu0 0.0
        %2152 = vmatpush2.msra.mxu0 %v2010
        %2153 = vmatprep.subr.mxu0 0.0
        %2154 = vmatpush2.msra.mxu0 %v2009
        %2155 = vmatprep.subr.mxu0 0.0
        %2156 = vmatpush2.msra.mxu0 %v2008
        %2157 = vmatprep.subr.mxu0 0.0
        %2158 = vmatpush2.msra.mxu0 %v2007
        %2159 = vmatprep.subr.mxu0 0.0
        %2160 = vmatpush2.msra.mxu0 %v2006
        %2161 = vmatprep.subr.mxu0 0.0
        %2162 = vmatpush2.msra.mxu0 %v2005
        %2163 = vmatprep.subr.mxu0 0.0
        %2164 = vmatpush2.msra.mxu0 %v2004
        %2165 = vmatprep.subr.mxu0 0.0
        %2166 = vmatpush2.msra.mxu0 %v2003
        %2167 = vmatprep.subr.mxu0 0.0
        %2168 = vmatpush2.msra.mxu0 %v2002
        %2169 = vmatprep.subr.mxu0 0.0
        %2170 = vmatpush2.msra.mxu0 %v2001
        %2171 = vmatprep.subr.mxu0 0.0
        %2172 = vmatpush2.msra.mxu0 %v2000
        %2173 = vmatprep.subr.mxu0 0.0
        %2174 = vmatpush2.msra.mxu0 %v1999
        %2175 = vmatprep.mubr.f32.mxu0 %v1968
        %2176 = vmatmul.mubr.f32.gmra.mxu0 %v1967
        %v2177 = vpop.f32.mrf.mxu0
        %v2178 = vadd.f32 0.0, %v2177
        %v2179 = vpop.f32.mrf.mxu0
        %2180 = vmatprep.mubr.f32.mxu0 %v1976
        %2181 = vmatmul.mubr.f32.gmra.mxu0 %v1975
        %v2182 = vpop.f32.mrf.mxu0
        %v2183 = vadd.f32 0.0, %v2182
        %v2184 = vpop.f32.mrf.mxu0
        %2185 = vdwg.mxu0
        %2186 = vmatprep.subr.mxu0 0.0
        %2187 = vmatpush1.msra.mxu0 %v2030
        %2188 = vmatprep.subr.mxu0 0.0
        %2189 = vmatpush1.msra.mxu0 %v2029
        %2190 = vmatprep.subr.mxu0 0.0
        %2191 = vmatpush1.msra.mxu0 %v2028
        %2192 = vmatprep.subr.mxu0 0.0
        %2193 = vmatpush1.msra.mxu0 %v2027
        %2194 = vmatprep.subr.mxu0 0.0
        %2195 = vmatpush1.msra.mxu0 %v2026
        %2196 = vmatprep.subr.mxu0 0.0
        %2197 = vmatpush1.msra.mxu0 %v2025
        %2198 = vmatprep.subr.mxu0 0.0
        %2199 = vmatpush1.msra.mxu0 %v2024
        %2200 = vmatprep.subr.mxu0 0.0
        %2201 = vmatpush1.msra.mxu0 %v2023
        %2202 = vmatprep.subr.mxu0 0.0
        %2203 = vmatpush1.msra.mxu0 %v2022
        %2204 = vmatprep.subr.mxu0 0.0
        %2205 = vmatpush1.msra.mxu0 %v2021
        %2206 = vmatprep.subr.mxu0 0.0
        %2207 = vmatpush1.msra.mxu0 %v2020
        %2208 = vmatprep.subr.mxu0 0.0
        %2209 = vmatpush1.msra.mxu0 %v2019
        %2210 = vmatprep.subr.mxu0 0.0
        %2211 = vmatpush1.msra.mxu0 %v2018
        %2212 = vmatprep.subr.mxu0 0.0
        %2213 = vmatpush1.msra.mxu0 %v2017
        %2214 = vmatprep.subr.mxu0 0.0
        %2215 = vmatpush1.msra.mxu0 %v2016
        %2216 = vmatprep.subr.mxu0 0.0
        %2217 = vmatpush1.msra.mxu0 %v2015
        %2218 = vmatprep.subr.mxu0 0.0
        %2219 = vmatpush2.msra.mxu0 %v2046
        %2220 = vmatprep.subr.mxu0 0.0
        %2221 = vmatpush2.msra.mxu0 %v2045
        %2222 = vmatprep.subr.mxu0 0.0
        %2223 = vmatpush2.msra.mxu0 %v2044
        %2224 = vmatprep.subr.mxu0 0.0
        %2225 = vmatpush2.msra.mxu0 %v2043
        %2226 = vmatprep.subr.mxu0 0.0
        %2227 = vmatpush2.msra.mxu0 %v2042
        %2228 = vmatprep.subr.mxu0 0.0
        %2229 = vmatpush2.msra.mxu0 %v2041
        %2230 = vmatprep.subr.mxu0 0.0
        %2231 = vmatpush2.msra.mxu0 %v2040
        %2232 = vmatprep.subr.mxu0 0.0
        %2233 = vmatpush2.msra.mxu0 %v2039
        %2234 = vmatprep.subr.mxu0 0.0
        %2235 = vmatpush2.msra.mxu0 %v2038
        %2236 = vmatprep.subr.mxu0 0.0
        %2237 = vmatpush2.msra.mxu0 %v2037
        %2238 = vmatprep.subr.mxu0 0.0
        %2239 = vmatpush2.msra.mxu0 %v2036
        %2240 = vmatprep.subr.mxu0 0.0
        %2241 = vmatpush2.msra.mxu0 %v2035
        %2242 = vmatprep.subr.mxu0 0.0
        %2243 = vmatpush2.msra.mxu0 %v2034
        %2244 = vmatprep.subr.mxu0 0.0
        %2245 = vmatpush2.msra.mxu0 %v2033
        %2246 = vmatprep.subr.mxu0 0.0
        %2247 = vmatpush2.msra.mxu0 %v2032
        %2248 = vmatprep.subr.mxu0 0.0
        %2249 = vmatpush2.msra.mxu0 %v2031
        %2250 = vmatprep.mubr.f32.mxu0 %v1970
        %2251 = vmatmul.mubr.f32.gmra.mxu0 %v1969
        %v2252 = vpop.f32.mrf.mxu0
        %v2253 = vadd.f32 %v2178, %v2252
        %v2254 = vpop.f32.mrf.mxu0
        %2255 = vmatprep.mubr.f32.mxu0 %v1978
        %2256 = vmatmul.mubr.f32.gmra.mxu0 %v1977
        %v2257 = vpop.f32.mrf.mxu0
        %v2258 = vadd.f32 %v2183, %v2257
        %v2259 = vpop.f32.mrf.mxu0
        %2260 = vdwg.mxu0
        %2261 = vmatprep.subr.mxu0 0.0
        %2262 = vmatpush1.msra.mxu0 %v2062
        %2263 = vmatprep.subr.mxu0 0.0
        %2264 = vmatpush1.msra.mxu0 %v2061
        %2265 = vmatprep.subr.mxu0 0.0
        %2266 = vmatpush1.msra.mxu0 %v2060
        %2267 = vmatprep.subr.mxu0 0.0
        %2268 = vmatpush1.msra.mxu0 %v2059
        %2269 = vmatprep.subr.mxu0 0.0
        %2270 = vmatpush1.msra.mxu0 %v2058
        %2271 = vmatprep.subr.mxu0 0.0
        %2272 = vmatpush1.msra.mxu0 %v2057
        %2273 = vmatprep.subr.mxu0 0.0
        %2274 = vmatpush1.msra.mxu0 %v2056
        %2275 = vmatprep.subr.mxu0 0.0
        %2276 = vmatpush1.msra.mxu0 %v2055
        %2277 = vmatprep.subr.mxu0 0.0
        %2278 = vmatpush1.msra.mxu0 %v2054
        %2279 = vmatprep.subr.mxu0 0.0
        %2280 = vmatpush1.msra.mxu0 %v2053
        %2281 = vmatprep.subr.mxu0 0.0
        %2282 = vmatpush1.msra.mxu0 %v2052
        %2283 = vmatprep.subr.mxu0 0.0
        %2284 = vmatpush1.msra.mxu0 %v2051
        %2285 = vmatprep.subr.mxu0 0.0
        %2286 = vmatpush1.msra.mxu0 %v2050
        %2287 = vmatprep.subr.mxu0 0.0
        %2288 = vmatpush1.msra.mxu0 %v2049
        %2289 = vmatprep.subr.mxu0 0.0
        %2290 = vmatpush1.msra.mxu0 %v2048
        %2291 = vmatprep.subr.mxu0 0.0
        %2292 = vmatpush1.msra.mxu0 %v2047
        %2293 = vmatprep.subr.mxu0 0.0
        %2294 = vmatpush2.msra.mxu0 %v2078
        %2295 = vmatprep.subr.mxu0 0.0
        %2296 = vmatpush2.msra.mxu0 %v2077
        %2297 = vmatprep.subr.mxu0 0.0
        %2298 = vmatpush2.msra.mxu0 %v2076
        %2299 = vmatprep.subr.mxu0 0.0
        %2300 = vmatpush2.msra.mxu0 %v2075
        %2301 = vmatprep.subr.mxu0 0.0
        %2302 = vmatpush2.msra.mxu0 %v2074
        %2303 = vmatprep.subr.mxu0 0.0
        %2304 = vmatpush2.msra.mxu0 %v2073
        %2305 = vmatprep.subr.mxu0 0.0
        %2306 = vmatpush2.msra.mxu0 %v2072
        %2307 = vmatprep.subr.mxu0 0.0
        %2308 = vmatpush2.msra.mxu0 %v2071
        %2309 = vmatprep.subr.mxu0 0.0
        %2310 = vmatpush2.msra.mxu0 %v2070
        %2311 = vmatprep.subr.mxu0 0.0
        %2312 = vmatpush2.msra.mxu0 %v2069
        %2313 = vmatprep.subr.mxu0 0.0
        %2314 = vmatpush2.msra.mxu0 %v2068
        %2315 = vmatprep.subr.mxu0 0.0
        %2316 = vmatpush2.msra.mxu0 %v2067
        %2317 = vmatprep.subr.mxu0 0.0
        %2318 = vmatpush2.msra.mxu0 %v2066
        %2319 = vmatprep.subr.mxu0 0.0
        %2320 = vmatpush2.msra.mxu0 %v2065
        %2321 = vmatprep.subr.mxu0 0.0
        %2322 = vmatpush2.msra.mxu0 %v2064
        %2323 = vmatprep.subr.mxu0 0.0
        %2324 = vmatpush2.msra.mxu0 %v2063
        %2325 = vmatprep.mubr.f32.mxu0 %v1972
        %2326 = vmatmul.mubr.f32.gmra.mxu0 %v1971
        %v2327 = vpop.f32.mrf.mxu0
        %v2328 = vadd.f32 %v2253, %v2327
        %v2329 = vpop.f32.mrf.mxu0
        %2330 = vmatprep.mubr.f32.mxu0 %v1980
        %2331 = vmatmul.mubr.f32.gmra.mxu0 %v1979
        %v2332 = vpop.f32.mrf.mxu0
        %v2333 = vadd.f32 %v2258, %v2332
        %v2334 = vpop.f32.mrf.mxu0
        %2335 = vdwg.mxu0
        %2336 = vmatprep.subr.mxu0 0.0
        %2337 = vmatpush1.msra.mxu0 %v2094
        %2338 = vmatprep.subr.mxu0 0.0
        %2339 = vmatpush1.msra.mxu0 %v2093
        %2340 = vmatprep.subr.mxu0 0.0
        %2341 = vmatpush1.msra.mxu0 %v2092
        %2342 = vmatprep.subr.mxu0 0.0
        %2343 = vmatpush1.msra.mxu0 %v2091
        %2344 = vmatprep.subr.mxu0 0.0
        %2345 = vmatpush1.msra.mxu0 %v2090
        %2346 = vmatprep.subr.mxu0 0.0
        %2347 = vmatpush1.msra.mxu0 %v2089
        %2348 = vmatprep.subr.mxu0 0.0
        %2349 = vmatpush1.msra.mxu0 %v2088
        %2350 = vmatprep.subr.mxu0 0.0
        %2351 = vmatpush1.msra.mxu0 %v2087
        %2352 = vmatprep.subr.mxu0 0.0
        %2353 = vmatpush1.msra.mxu0 %v2086
        %2354 = vmatprep.subr.mxu0 0.0
        %2355 = vmatpush1.msra.mxu0 %v2085
        %2356 = vmatprep.subr.mxu0 0.0
        %2357 = vmatpush1.msra.mxu0 %v2084
        %2358 = vmatprep.subr.mxu0 0.0
        %2359 = vmatpush1.msra.mxu0 %v2083
        %2360 = vmatprep.subr.mxu0 0.0
        %2361 = vmatpush1.msra.mxu0 %v2082
        %2362 = vmatprep.subr.mxu0 0.0
        %2363 = vmatpush1.msra.mxu0 %v2081
        %2364 = vmatprep.subr.mxu0 0.0
        %2365 = vmatpush1.msra.mxu0 %v2080
        %2366 = vmatprep.subr.mxu0 0.0
        %2367 = vmatpush1.msra.mxu0 %v2079
        %2368 = vmatprep.subr.mxu0 0.0
        %2369 = vmatpush2.msra.mxu0 %v2110
        %2370 = vmatprep.subr.mxu0 0.0
        %2371 = vmatpush2.msra.mxu0 %v2109
        %2372 = vmatprep.subr.mxu0 0.0
        %2373 = vmatpush2.msra.mxu0 %v2108
        %2374 = vmatprep.subr.mxu0 0.0
        %2375 = vmatpush2.msra.mxu0 %v2107
        %2376 = vmatprep.subr.mxu0 0.0
        %2377 = vmatpush2.msra.mxu0 %v2106
        %2378 = vmatprep.subr.mxu0 0.0
        %2379 = vmatpush2.msra.mxu0 %v2105
        %2380 = vmatprep.subr.mxu0 0.0
        %2381 = vmatpush2.msra.mxu0 %v2104
        %2382 = vmatprep.subr.mxu0 0.0
        %2383 = vmatpush2.msra.mxu0 %v2103
        %2384 = vmatprep.subr.mxu0 0.0
        %2385 = vmatpush2.msra.mxu0 %v2102
        %2386 = vmatprep.subr.mxu0 0.0
        %2387 = vmatpush2.msra.mxu0 %v2101
        %2388 = vmatprep.subr.mxu0 0.0
        %2389 = vmatpush2.msra.mxu0 %v2100
        %2390 = vmatprep.subr.mxu0 0.0
        %2391 = vmatpush2.msra.mxu0 %v2099
        %2392 = vmatprep.subr.mxu0 0.0
        %2393 = vmatpush2.msra.mxu0 %v2098
        %2394 = vmatprep.subr.mxu0 0.0
        %2395 = vmatpush2.msra.mxu0 %v2097
        %2396 = vmatprep.subr.mxu0 0.0
        %2397 = vmatpush2.msra.mxu0 %v2096
        %2398 = vmatprep.subr.mxu0 0.0
        %2399 = vmatpush2.msra.mxu0 %v2095
        %2400 = vmatprep.mubr.f32.mxu0 %v1974
        %2401 = vmatmul.mubr.f32.gmra.mxu0 %v1973
        %v2402 = vpop.f32.mrf.mxu0
        %v2403 = vadd.f32 %v2328, %v2402
        %v2404 = vpop.f32.mrf.mxu0
        %2405 = vmatprep.mubr.f32.mxu0 %v1982
        %2406 = vmatmul.mubr.f32.gmra.mxu0 %v1981
        %v2407 = vpop.f32.mrf.mxu0
        %v2408 = vadd.f32 %v2333, %v2407
        %v2409 = vpop.f32.mrf.mxu0
        %2410 = vdwg.mxu0
        %2411 = vmatprep.subr.mxu0 0.0
        %2412 = vmatpush1.msra.mxu0 %v1966
        %2413 = vmatprep.subr.mxu0 0.0
        %2414 = vmatpush1.msra.mxu0 %v1965
        %2415 = vmatprep.subr.mxu0 0.0
        %2416 = vmatpush1.msra.mxu0 %v1964
        %2417 = vmatprep.subr.mxu0 0.0
        %2418 = vmatpush1.msra.mxu0 %v1963
        %2419 = vmatprep.subr.mxu0 0.0
        %2420 = vmatpush1.msra.mxu0 %v1962
        %2421 = vmatprep.subr.mxu0 0.0
        %2422 = vmatpush1.msra.mxu0 %v1961
        %2423 = vmatprep.subr.mxu0 0.0
        %2424 = vmatpush1.msra.mxu0 %v1960
        %2425 = vmatprep.subr.mxu0 0.0
        %2426 = vmatpush1.msra.mxu0 %v1959
        %2427 = vmatprep.subr.mxu0 0.0
        %2428 = vmatpush1.msra.mxu0 %v1958
        %2429 = vmatprep.subr.mxu0 0.0
        %2430 = vmatpush1.msra.mxu0 %v1957
        %2431 = vmatprep.subr.mxu0 0.0
        %2432 = vmatpush1.msra.mxu0 %v1956
        %2433 = vmatprep.subr.mxu0 0.0
        %2434 = vmatpush1.msra.mxu0 %v1955
        %2435 = vmatprep.subr.mxu0 0.0
        %2436 = vmatpush1.msra.mxu0 %v1954
        %2437 = vmatprep.subr.mxu0 0.0
        %2438 = vmatpush1.msra.mxu0 %v1953
        %2439 = vmatprep.subr.mxu0 0.0
        %2440 = vmatpush1.msra.mxu0 %v1952
        %2441 = vmatprep.subr.mxu0 0.0
        %2442 = vmatpush1.msra.mxu0 %v1951
        %2443 = vmatprep.subr.mxu0 0.0
        %2444 = vmatpush2.msra.mxu0 0.0
        %2445 = vmatprep.subr.mxu0 0.0
        %2446 = vmatpush2.msra.mxu0 0.0
        %2447 = vmatprep.subr.mxu0 0.0
        %2448 = vmatpush2.msra.mxu0 0.0
        %2449 = vmatprep.subr.mxu0 0.0
        %2450 = vmatpush2.msra.mxu0 0.0
        %2451 = vmatprep.subr.mxu0 0.0
        %2452 = vmatpush2.msra.mxu0 0.0
        %2453 = vmatprep.subr.mxu0 0.0
        %2454 = vmatpush2.msra.mxu0 0.0
        %2455 = vmatprep.subr.mxu0 0.0
        %2456 = vmatpush2.msra.mxu0 0.0
        %2457 = vmatprep.subr.mxu0 0.0
        %2458 = vmatpush2.msra.mxu0 0.0
        %2459 = vmatprep.subr.mxu0 0.0
        %2460 = vmatpush2.msra.mxu0 0.0
        %2461 = vmatprep.subr.mxu0 0.0
        %2462 = vmatpush2.msra.mxu0 0.0
        %2463 = vmatprep.subr.mxu0 0.0
        %2464 = vmatpush2.msra.mxu0 0.0
        %2465 = vmatprep.subr.mxu0 0.0
        %2466 = vmatpush2.msra.mxu0 0.0
        %2467 = vmatprep.subr.mxu0 0.0
        %2468 = vmatpush2.msra.mxu0 0.0
        %2469 = vmatprep.subr.mxu0 0.0
        %2470 = vmatpush2.msra.mxu0 0.0
        %2471 = vmatprep.subr.mxu0 0.0
        %2472 = vmatpush2.msra.mxu0 0.0
        %2473 = vmatprep.subr.mxu0 0.0
        %2474 = vmatpush2.msra.mxu0 0.0
        %2475 = vmatprep.mubr.f32.mxu0 0.0
        %2476 = vmatmul.mubr.f32.gmra.mxu0 %v1513
        %v2477 = vpop.f32.mrf.mxu0
        %v2478 = vadd.f32 %v2403, %v2477
        %v2479 = vpop.f32.mrf.mxu0
        %2480 = vmatprep.mubr.f32.mxu0 0.0
        %2481 = vmatmul.mubr.f32.gmra.mxu0 %v1514
        %v2482 = vpop.f32.mrf.mxu0
        %v2483 = vadd.f32 %v2408, %v2482
        %v2484 = vpop.f32.mrf.mxu0
        %2485 = vdwg.mxu0
        %v2486 = vsel %vm963, %v2478, 0.0
        %2487 = vadd.xlane.f32.xlu0 %v2486
        %v2488 = vpop.xlane.xlu0 %2487
        %v2489 = vsel %vm963, %v2483, 0.0
        %2490 = vadd.xlane.f32.xlu0 %v2489
        %v2491 = vpop.xlane.xlu0 %2490
        %v2492 = vrcp.pop 32.0
        %v2493 = vmul.f32 %v2488, %v2492
        %v2494 = vmul.f32 %v2491, %v2492
        %v2495 = vsub.f32 %v2478, %v2493
        %v2496 = vsub.f32 %v2483, %v2494
        %v2497 = vmul.f32 %v2495, %v2495
        %v2498 = vmul.f32 %v2496, %v2496
        %v2499 = vsel %vm963, %v2497, 0.0
        %2500 = vadd.xlane.f32.xlu0 %v2499
        %v2501 = vpop.xlane.xlu0 %2500
        %v2502 = vsel %vm963, %v2498, 0.0
        %2503 = vadd.xlane.f32.xlu0 %v2502
        %v2504 = vpop.xlane.xlu0 %2503
        %v2505 = vmul.f32 %v2501, %v2492
        %v2506 = vmul.f32 %v2504, %v2492
        %v2507 = vadd.f32 %v2505, 1e-05
        %v2508 = vadd.f32 %v2506, 1e-05
        %v2509 = vrsqrt.pop %v2507
        %v2510 = vrsqrt.pop %v2508
        %v2511 = vmul.f32 %v2495, %v2509
        %v2512 = vmul.f32 %v2496, %v2510
        %v2513 = vld [vmem:[#allocation17] sm:$0x1]
        %v2515 = vlaneseq
        %v2516 = vshrl.u32 %v2515, 7
        %v2517 = vsub.s32 0, %v2516
        %v2518 = vrot.slane %v2513, %v2517
        %v2520 = vmul.f32 %v2511, %v2518
        %v2521 = vmul.f32 %v2512, %v2518
        %v2522 = vld [vmem:[#allocation19] sm:$0x1]
        %v2524 = vlaneseq
        %v2525 = vshrl.u32 %v2524, 7
        %v2526 = vsub.s32 0, %v2525
        %v2527 = vrot.slane %v2522, %v2526
        %v2529 = vadd.f32 %v2520, %v2527
        %v2530 = vadd.f32 %v2521, %v2527
        %2531 = vst.msk [vmem:[%s733] sm:$0xff] %vm963, %v2529
        %2532 = vst.msk [vmem:[%s733 + $0x8] sm:$0xff] %vm963, %v2530
        %s2533 = sand.u32 %s434, 1
        %s2534 = scalar_lea.sflag [#allocation4], %s2533
        %s2535 = sand.u32 %s434, 1
        %s2536 = smul.addr %s2535, 16
        %s2537 = scalar_lea.vmem [#allocation20], %s2536
        // Predicated region
        $region137: #{tpu_custom_call.1} parent=91 // pred_check
          %p2538 = pneg %p444
        $region138: #{tpu_custom_call.1} parent=91 // pred_check_branch
          %2540 = sbr.rel (%p2538) target = $region140
        $region139: #{tpu_custom_call.1} parent=91 // pred_region
          %s2541 = smul.u32 2, %s38
          %s2543 = ssub.s32 256, 256
          %2544 = vsyncadd %s2534, %s2543
          %s2545 = smul.addr %s2541, 128
          %s2546 = scalar_lea.hbm %s18, %s2545
          %s2547 = sshll.u32 %s2537, 4
          %s2548 = int_to_ptr.vmem [resolvable:$true] %s2547
          %2553 = dma.vmem_to_hbm [thread:$0]  %s2548, 256, %s2546, %s2534, 128, 128, 8
        $region140: #{tpu_custom_call.1} parent=91 // pred_fallthru
          _
      $region92: #{tpu_custom_call.1} parent=5 // pred_fallthru
        _
      %p2554 = scmp.le.s32.totalorder 2, %s33
      // Predicated region
      $region141: #{tpu_custom_call.1} parent=5 // pred_check
        %p2555 = pneg %p2554
      $region142: #{tpu_custom_call.1} parent=5 // pred_check_branch
        %2557 = sbr.rel (%p2555) target = $region144
      $region143: #{tpu_custom_call.1} parent=5 // pred_region
        %s2558 = ssub.s32 %s33, 2
        // Predicated region
        $region145: #{tpu_custom_call.1} parent=143 // pred_check
          %p2559 = pneg %p450
        $region146: #{tpu_custom_call.1} parent=143 // pred_check_branch
          %2561 = sbr.rel (%p2559) target = $region148
        $region147: #{tpu_custom_call.1} parent=143 // pred_region
          %s2562 = sand.u32 %s435, 1
          %s2563 = scalar_lea.sflag [#allocation4], %s2562
          %s2564 = sand.u32 %s435, 1
          %s2565 = smul.addr %s2564, 16
          %s2566 = scalar_lea.vmem [#allocation20], %s2565
          %2567 = dma.done %s2563, 256
        $region148: #{tpu_custom_call.1} parent=143 // pred_fallthru
          _
      $region144: #{tpu_custom_call.1} parent=5 // pred_fallthru
        _
    $region6: #{tpu_custom_call.1} parent=1 // loop_footer
      %s37 = sadd.s32 1, %s33
    $region7: #{tpu_custom_call.1} parent=1 // loop_footer_branch
      %32 = sbr.rel target = $region3
    $region8: #{tpu_custom_call.1} parent=1 // loop_exit
      _
    %2568 = vsyncpa [#allocation3], 1
    %s2569 = scalar_lea.sflag [#allocation3], 1
    %2570 = vsyncpa %s2569, 1
    %2571 = vsyncpa [#allocation6], 1
    %2572 = vsyncpa [#allocation9], 1
    %2573 = vsyncpa [#allocation12], 1
    %2574 = vsyncpa [#allocation15], 1
    %2575 = vsyncpa [#allocation18], 1
    %2576 = vsyncpa [#allocation4], 1
    %s2577 = scalar_lea.sflag [#allocation4], 1
    %2578 = vsyncpa %s2577, 1

</llo_original>
